<compile_context>
chip_gen: v6e
topology: v6e:2x2x1
jax: 0.10.0
libtpu: 0.0.40
codegen_flags: <defaults>
</compile_context>

<pallas_src>
import jax
import jax.numpy as jnp
from jax.experimental import pallas as pl
from jax.experimental.pallas import tpu as pltpu

B = 2
H = W = 28
HW = H * W                  # 784
HW_PAD = 896                # 7 * 128  (lane-aligned K for fc1)
KH = KW = 3
NTAPS = KH * KW             # 9
C_OUT = 5
FC1_IN = C_OUT * HW         # 3920
FC1_OUT = 100
FC2_OUT = 10
FC_PAD = 128                # lane-padded FC width


def fused_cnn_kernel(taps_ref, wc_ref, bc_ref, w1_hbm, b1_ref, w2_ref, b2_ref,
                     out_ref, w1_buf, dma_sems):
    # taps_ref: (9, B, 896)     f32  VMEM  shifted input windows, lane-dense
    # wc_ref  : (5, 9)          f32  SMEM  conv weights (scalar reads)
    # bc_ref  : (5,)            f32  SMEM  conv bias    (scalar reads)
    # w1_hbm  : (5, 896, 128)   bf16 HBM   fc1 weights, channel-major, K/N padded
    # b1_ref  : (1, 128)        f32  VMEM
    # w2_ref  : (128, 128)      f32  VMEM  fc2 weights, K/N zero-padded
    # b2_ref  : (1, 128)        f32  VMEM
    # out_ref : (B, 128)        f32  VMEM
    # w1_buf  : (5, 896, 128)   bf16 VMEM scratch (manual per-channel DMA dst)
    # dma_sems: (5,)            DMA semaphores

    # Kick off all per-channel fc1-weight DMAs immediately: they overlap the
    # conv + sigmoid compute below (and each other in the DMA queue).
    w1_copies = [
        pltpu.make_async_copy(w1_hbm.at[c], w1_buf.at[c], dma_sems.at[c])
        for c in range(C_OUT)
    ]
    for cp in w1_copies:
        cp.start()

    # 3x3 conv, 1 input channel: 9 scalar*vector multiply-adds per output
    # channel on the VPU over lane-dense (B, 896) tap views.  Taps-outer /
    # channel-inner keeps at most one tap (7 vregs) + 5 accumulators live.
    accs = [jnp.zeros((B, HW_PAD), jnp.float32) for _ in range(C_OUT)]
    for t in range(NTAPS):
        tap = taps_ref[t]                                   # (B, 896)
        for c in range(C_OUT):
            accs[c] = accs[c] + wc_ref[c, t] * tap

    # fc1: PyTorch's channel-major flatten folded into 5 per-channel
    # (B,896)@(896,128) MXU matmuls (f32 accumulation).  Wait for each
    # channel's weights only right before its matmul.
    h = jnp.zeros((B, FC_PAD), jnp.float32)
    for c in range(C_OUT):
        act = jax.nn.sigmoid(accs[c] + bc_ref[c]).astype(jnp.bfloat16)
        w1_copies[c].wait()
        h = h + jnp.dot(act, w1_buf[c], preferred_element_type=jnp.float32)

    h = jax.nn.sigmoid(h + b1_ref[...])                     # fc1 + sigmoid
    o = jnp.dot(h, w2_ref[...],
                preferred_element_type=jnp.float32) + b2_ref[...]
    out_ref[...] = jax.nn.sigmoid(o)                        # fc2 + sigmoid


def prepare_params(conv_w, conv_b, fc1_w, fc1_b, fc2_w, fc2_b):
    """One-time weight repacking (NOT in the per-call path)."""
    wc = conv_w.reshape(C_OUT, NTAPS).astype(jnp.float32)                # (5, 9)
    bc = conv_b.astype(jnp.float32)                                      # (5,)
    # fc1 weights, channel-major (matches PyTorch NCHW flatten), zero-padded
    # on K (784->896) and N (100->128), bf16 for the MXU / half the DMA bytes.
    w1 = fc1_w.reshape(C_OUT, HW, FC1_OUT).astype(jnp.bfloat16)
    w1 = jnp.pad(w1, ((0, 0), (0, HW_PAD - HW), (0, FC_PAD - FC1_OUT)))  # (5,896,128)
    b1 = jnp.pad(fc1_b, (0, FC_PAD - FC1_OUT)).reshape(1, FC_PAD).astype(jnp.float32)
    # fc2 kept f32 (tiny); K rows zero-padded so the sigmoid(0)=0.5 padded fc1
    # columns contribute nothing (exact), N padded to 128.
    w2 = jnp.pad(fc2_w, ((0, FC_PAD - FC1_OUT),
                         (0, FC_PAD - FC2_OUT))).astype(jnp.float32)     # (128,128)
    b2 = jnp.pad(fc2_b, (0, FC_PAD - FC2_OUT)).reshape(1, FC_PAD).astype(jnp.float32)
    return wc, bc, w1, b1, w2, b2


@jax.jit
def simple_cnn_forward(x, wc, bc, w1, b1, w2, b2):
    # Shifted windows of the zero-padded input, lane-dense last dim:
    # taps[t=ky*3+kx, b, y*28+x] == x_pad[b, y+ky, x+kx]
    xp = jnp.pad(x[:, 0], ((0, 0), (1, 1), (1, 1)))                      # (B, 30, 30)
    taps = jnp.stack(
        [xp[:, ky:ky + H, kx:kx + W].reshape(B, HW)
         for ky in range(KH) for kx in range(KW)], axis=0)               # (9, B, 784)
    taps = jnp.pad(taps, ((0, 0), (0, 0), (0, HW_PAD - HW)))             # (9, B, 896)

    vmem = pl.BlockSpec(memory_space=pltpu.MemorySpace.VMEM)
    smem = pl.BlockSpec(memory_space=pltpu.MemorySpace.SMEM)
    hbm = pl.BlockSpec(memory_space=pl.ANY)   # w1 stays in HBM; kernel DMAs it

    flops = (2 * NTAPS * B * C_OUT * HW_PAD          # conv (VPU)
             + 2 * B * C_OUT * HW_PAD * FC_PAD       # fc1 (MXU)
             + 2 * B * FC_PAD * FC_PAD)              # fc2 (MXU)
    transcendentals = B * (C_OUT * HW_PAD + 2 * FC_PAD)
    bytes_accessed = (taps.size * 4 + wc.size * 4 + bc.size * 4
                      + w1.size * 2 + b1.size * 4 + w2.size * 4 + b2.size * 4
                      + B * FC_PAD * 4)

    out_pad = pl.pallas_call(
        fused_cnn_kernel,
        out_shape=jax.ShapeDtypeStruct((B, FC_PAD), jnp.float32),
        in_specs=[vmem, smem, smem, hbm, vmem, vmem, vmem],
        out_specs=vmem,
        scratch_shapes=[
            pltpu.VMEM((C_OUT, HW_PAD, FC_PAD), jnp.bfloat16),   # w1 DMA landing
            pltpu.SemaphoreType.DMA((C_OUT,)),
        ],
        cost_estimate=pl.CostEstimate(flops=flops,
                                      transcendentals=transcendentals,
                                      bytes_accessed=bytes_accessed),
    )(taps, wc, bc, w1, b1, w2, b2)

    return out_pad[:, :FC2_OUT]                                          # (B, 10)


def reference_forward(x, conv_w, conv_b, fc1_w, fc1_b, fc2_w, fc2_b):
    # Pure-JAX f32 reference mirroring the PyTorch forward.
    y = jax.lax.conv_general_dilated(
        x, conv_w, window_strides=(1, 1), padding=((1, 1), (1, 1)),
        dimension_numbers=('NCHW', 'OIHW', 'NCHW'))
    y = jax.nn.sigmoid(y + conv_b.reshape(1, C_OUT, 1, 1))
    y = y.reshape(B, FC1_IN)
    y = jax.nn.sigmoid(y @ fc1_w + fc1_b)
    y = jax.nn.sigmoid(y @ fc2_w + fc2_b)
    return y


if __name__ == "__main__":
    key = jax.random.PRNGKey(0)
    ks = jax.random.split(key, 7)
    # Deterministic synthetic parameters (shapes from SimpleCNN.__init__).
    x      = jax.random.normal(ks[0], (B, 1, H, W), jnp.float32)
    conv_w = jax.random.normal(ks[1], (C_OUT, 1, KH, KW), jnp.float32) * 0.2
    conv_b = jax.random.normal(ks[2], (C_OUT,), jnp.float32) * 0.1
    fc1_w  = jax.random.normal(ks[3], (FC1_IN, FC1_OUT), jnp.float32) * 0.02
    fc1_b  = jax.random.normal(ks[4], (FC1_OUT,), jnp.float32) * 0.1
    fc2_w  = jax.random.normal(ks[5], (FC1_OUT, FC2_OUT), jnp.float32) * 0.1
    fc2_b  = jax.random.normal(ks[6], (FC2_OUT,), jnp.float32) * 0.1

    # One-time weight repacking (kept out of the per-call forward path).
    packed = prepare_params(conv_w, conv_b, fc1_w, fc1_b, fc2_w, fc2_b)
    packed = jax.tree_util.tree_map(jax.block_until_ready, packed)

    out = simple_cnn_forward(x, *packed)
    jax.block_until_ready(out)

    ref = reference_forward(x, conv_w, conv_b, fc1_w, fc1_b, fc2_w, fc2_b)
    assert out.shape == (B, FC2_OUT), out.shape
    max_err = float(jnp.max(jnp.abs(out - ref)))
    assert jnp.allclose(out, ref, atol=1e-2, rtol=1e-2), f"max err {max_err}"
    print("KERNEL_OK")
</pallas_src>

<mosaic_0001>
module attributes {stable_mosaic.version = 11 : i64} {
  func.func @fused_cnn_kernel(%arg0: memref<9x2x896xf32, #tpu.memory_space<vmem>>, %arg1: memref<5x9xf32, #tpu.memory_space<smem>>, %arg2: memref<5xf32, #tpu.memory_space<smem>>, %arg3: memref<5x896x128xbf16, #tpu.memory_space<any>>, %arg4: memref<1x128xf32, #tpu.memory_space<vmem>>, %arg5: memref<128x128xf32, #tpu.memory_space<vmem>>, %arg6: memref<1x128xf32, #tpu.memory_space<vmem>>, %arg7: memref<2x128xf32, #tpu.memory_space<vmem>>, %arg8: memref<5x896x128xbf16, #tpu.memory_space<vmem>>, %arg9: memref<5x!tpu.dma_semaphore, #tpu.memory_space<semaphore_mem>>) attributes {dimension_semantics = [], scalar_prefetch = 0 : i64, scratch_operands = 2 : i64, tpu.core_type = #tpu.core_type<tc>} {
    %c0_i32 = arith.constant 0 : i32
    %c0_i32_0 = arith.constant 0 : i32
    %c0_i32_1 = arith.constant 0 : i32
    %c0_i32_2 = arith.constant 0 : i32
    %c0_i32_3 = arith.constant 0 : i32
    %0 = tpu.memref_slice %arg3[%c0_i32, %c0_i32_2, %c0_i32_3] : memref<5x896x128xbf16, #tpu.memory_space<any>> -> memref<1x896x128xbf16, #tpu.memory_space<any>>
    %1 = tpu.memref_squeeze %0 : memref<1x896x128xbf16, #tpu.memory_space<any>> -> memref<896x128xbf16, #tpu.memory_space<any>>
    %c0_i32_4 = arith.constant 0 : i32
    %c0_i32_5 = arith.constant 0 : i32
    %2 = tpu.memref_slice %arg8[%c0_i32_0, %c0_i32_4, %c0_i32_5] : memref<5x896x128xbf16, #tpu.memory_space<vmem>> -> memref<1x896x128xbf16, #tpu.memory_space<vmem>>
    %3 = tpu.memref_squeeze %2 : memref<1x896x128xbf16, #tpu.memory_space<vmem>> -> memref<896x128xbf16, #tpu.memory_space<vmem>>
    %4 = tpu.memref_slice %arg9[%c0_i32_1] : memref<5x!tpu.dma_semaphore, #tpu.memory_space<semaphore_mem>> -> memref<1x!tpu.dma_semaphore, #tpu.memory_space<semaphore_mem>>
    %5 = tpu.memref_squeeze %4 : memref<1x!tpu.dma_semaphore, #tpu.memory_space<semaphore_mem>> -> memref<!tpu.dma_semaphore, #tpu.memory_space<semaphore_mem>>
    tpu.enqueue_dma source(%1 : memref<896x128xbf16, #tpu.memory_space<any>>) target(%3 : memref<896x128xbf16, #tpu.memory_space<vmem>>) target_semaphore(%5 : memref<!tpu.dma_semaphore, #tpu.memory_space<semaphore_mem>>)
    %c1_i32 = arith.constant 1 : i32
    %c1_i32_6 = arith.constant 1 : i32
    %c1_i32_7 = arith.constant 1 : i32
    %c0_i32_8 = arith.constant 0 : i32
    %c0_i32_9 = arith.constant 0 : i32
    %6 = tpu.memref_slice %arg3[%c1_i32, %c0_i32_8, %c0_i32_9] : memref<5x896x128xbf16, #tpu.memory_space<any>> -> memref<1x896x128xbf16, #tpu.memory_space<any>>
    %7 = tpu.memref_squeeze %6 : memref<1x896x128xbf16, #tpu.memory_space<any>> -> memref<896x128xbf16, #tpu.memory_space<any>>
    %c0_i32_10 = arith.constant 0 : i32
    %c0_i32_11 = arith.constant 0 : i32
    %8 = tpu.memref_slice %arg8[%c1_i32_6, %c0_i32_10, %c0_i32_11] : memref<5x896x128xbf16, #tpu.memory_space<vmem>> -> memref<1x896x128xbf16, #tpu.memory_space<vmem>>
    %9 = tpu.memref_squeeze %8 : memref<1x896x128xbf16, #tpu.memory_space<vmem>> -> memref<896x128xbf16, #tpu.memory_space<vmem>>
    %10 = tpu.memref_slice %arg9[%c1_i32_7] : memref<5x!tpu.dma_semaphore, #tpu.memory_space<semaphore_mem>> -> memref<1x!tpu.dma_semaphore, #tpu.memory_space<semaphore_mem>>
    %11 = tpu.memref_squeeze %10 : memref<1x!tpu.dma_semaphore, #tpu.memory_space<semaphore_mem>> -> memref<!tpu.dma_semaphore, #tpu.memory_space<semaphore_mem>>
    tpu.enqueue_dma source(%7 : memref<896x128xbf16, #tpu.memory_space<any>>) target(%9 : memref<896x128xbf16, #tpu.memory_space<vmem>>) target_semaphore(%11 : memref<!tpu.dma_semaphore, #tpu.memory_space<semaphore_mem>>)
    %c2_i32 = arith.constant 2 : i32
    %c2_i32_12 = arith.constant 2 : i32
    %c2_i32_13 = arith.constant 2 : i32
    %c0_i32_14 = arith.constant 0 : i32
    %c0_i32_15 = arith.constant 0 : i32
    %12 = tpu.memref_slice %arg3[%c2_i32, %c0_i32_14, %c0_i32_15] : memref<5x896x128xbf16, #tpu.memory_space<any>> -> memref<1x896x128xbf16, #tpu.memory_space<any>>
    %13 = tpu.memref_squeeze %12 : memref<1x896x128xbf16, #tpu.memory_space<any>> -> memref<896x128xbf16, #tpu.memory_space<any>>
    %c0_i32_16 = arith.constant 0 : i32
    %c0_i32_17 = arith.constant 0 : i32
    %14 = tpu.memref_slice %arg8[%c2_i32_12, %c0_i32_16, %c0_i32_17] : memref<5x896x128xbf16, #tpu.memory_space<vmem>> -> memref<1x896x128xbf16, #tpu.memory_space<vmem>>
    %15 = tpu.memref_squeeze %14 : memref<1x896x128xbf16, #tpu.memory_space<vmem>> -> memref<896x128xbf16, #tpu.memory_space<vmem>>
    %16 = tpu.memref_slice %arg9[%c2_i32_13] : memref<5x!tpu.dma_semaphore, #tpu.memory_space<semaphore_mem>> -> memref<1x!tpu.dma_semaphore, #tpu.memory_space<semaphore_mem>>
    %17 = tpu.memref_squeeze %16 : memref<1x!tpu.dma_semaphore, #tpu.memory_space<semaphore_mem>> -> memref<!tpu.dma_semaphore, #tpu.memory_space<semaphore_mem>>
    tpu.enqueue_dma source(%13 : memref<896x128xbf16, #tpu.memory_space<any>>) target(%15 : memref<896x128xbf16, #tpu.memory_space<vmem>>) target_semaphore(%17 : memref<!tpu.dma_semaphore, #tpu.memory_space<semaphore_mem>>)
    %c3_i32 = arith.constant 3 : i32
    %c3_i32_18 = arith.constant 3 : i32
    %c3_i32_19 = arith.constant 3 : i32
    %c0_i32_20 = arith.constant 0 : i32
    %c0_i32_21 = arith.constant 0 : i32
    %18 = tpu.memref_slice %arg3[%c3_i32, %c0_i32_20, %c0_i32_21] : memref<5x896x128xbf16, #tpu.memory_space<any>> -> memref<1x896x128xbf16, #tpu.memory_space<any>>
    %19 = tpu.memref_squeeze %18 : memref<1x896x128xbf16, #tpu.memory_space<any>> -> memref<896x128xbf16, #tpu.memory_space<any>>
    %c0_i32_22 = arith.constant 0 : i32
    %c0_i32_23 = arith.constant 0 : i32
    %20 = tpu.memref_slice %arg8[%c3_i32_18, %c0_i32_22, %c0_i32_23] : memref<5x896x128xbf16, #tpu.memory_space<vmem>> -> memref<1x896x128xbf16, #tpu.memory_space<vmem>>
    %21 = tpu.memref_squeeze %20 : memref<1x896x128xbf16, #tpu.memory_space<vmem>> -> memref<896x128xbf16, #tpu.memory_space<vmem>>
    %22 = tpu.memref_slice %arg9[%c3_i32_19] : memref<5x!tpu.dma_semaphore, #tpu.memory_space<semaphore_mem>> -> memref<1x!tpu.dma_semaphore, #tpu.memory_space<semaphore_mem>>
    %23 = tpu.memref_squeeze %22 : memref<1x!tpu.dma_semaphore, #tpu.memory_space<semaphore_mem>> -> memref<!tpu.dma_semaphore, #tpu.memory_space<semaphore_mem>>
    tpu.enqueue_dma source(%19 : memref<896x128xbf16, #tpu.memory_space<any>>) target(%21 : memref<896x128xbf16, #tpu.memory_space<vmem>>) target_semaphore(%23 : memref<!tpu.dma_semaphore, #tpu.memory_space<semaphore_mem>>)
    %c4_i32 = arith.constant 4 : i32
    %c4_i32_24 = arith.constant 4 : i32
    %c4_i32_25 = arith.constant 4 : i32
    %c0_i32_26 = arith.constant 0 : i32
    %c0_i32_27 = arith.constant 0 : i32
    %24 = tpu.memref_slice %arg3[%c4_i32, %c0_i32_26, %c0_i32_27] : memref<5x896x128xbf16, #tpu.memory_space<any>> -> memref<1x896x128xbf16, #tpu.memory_space<any>>
    %25 = tpu.memref_squeeze %24 : memref<1x896x128xbf16, #tpu.memory_space<any>> -> memref<896x128xbf16, #tpu.memory_space<any>>
    %c0_i32_28 = arith.constant 0 : i32
    %c0_i32_29 = arith.constant 0 : i32
    %26 = tpu.memref_slice %arg8[%c4_i32_24, %c0_i32_28, %c0_i32_29] : memref<5x896x128xbf16, #tpu.memory_space<vmem>> -> memref<1x896x128xbf16, #tpu.memory_space<vmem>>
    %27 = tpu.memref_squeeze %26 : memref<1x896x128xbf16, #tpu.memory_space<vmem>> -> memref<896x128xbf16, #tpu.memory_space<vmem>>
    %28 = tpu.memref_slice %arg9[%c4_i32_25] : memref<5x!tpu.dma_semaphore, #tpu.memory_space<semaphore_mem>> -> memref<1x!tpu.dma_semaphore, #tpu.memory_space<semaphore_mem>>
    %29 = tpu.memref_squeeze %28 : memref<1x!tpu.dma_semaphore, #tpu.memory_space<semaphore_mem>> -> memref<!tpu.dma_semaphore, #tpu.memory_space<semaphore_mem>>
    tpu.enqueue_dma source(%25 : memref<896x128xbf16, #tpu.memory_space<any>>) target(%27 : memref<896x128xbf16, #tpu.memory_space<vmem>>) target_semaphore(%29 : memref<!tpu.dma_semaphore, #tpu.memory_space<semaphore_mem>>)
    %cst = arith.constant 0.000000e+00 : f32
    %30 = vector.broadcast %cst : f32 to vector<2x896xf32>
    %cst_30 = arith.constant 0.000000e+00 : f32
    %31 = vector.broadcast %cst_30 : f32 to vector<2x896xf32>
    %cst_31 = arith.constant 0.000000e+00 : f32
    %32 = vector.broadcast %cst_31 : f32 to vector<2x896xf32>
    %cst_32 = arith.constant 0.000000e+00 : f32
    %33 = vector.broadcast %cst_32 : f32 to vector<2x896xf32>
    %cst_33 = arith.constant 0.000000e+00 : f32
    %34 = vector.broadcast %cst_33 : f32 to vector<2x896xf32>
    %c0 = arith.constant 0 : index
    %c0_34 = arith.constant 0 : index
    %c0_35 = arith.constant 0 : index
    %35 = vector.load %arg0[%c0, %c0_34, %c0_35] : memref<9x2x896xf32, #tpu.memory_space<vmem>>, vector<1x2x896xf32>
    %36 = vector.shape_cast %35 : vector<1x2x896xf32> to vector<2x896xf32>
    %c0_36 = arith.constant 0 : index
    %c0_37 = arith.constant 0 : index
    %37 = memref.load %arg1[%c0_36, %c0_37] : memref<5x9xf32, #tpu.memory_space<smem>>
    %38 = vector.broadcast %37 : f32 to vector<2x896xf32>
    %39 = arith.mulf %38, %36 : vector<2x896xf32>
    %40 = arith.addf %30, %39 : vector<2x896xf32>
    %c1 = arith.constant 1 : index
    %c0_38 = arith.constant 0 : index
    %41 = memref.load %arg1[%c1, %c0_38] : memref<5x9xf32, #tpu.memory_space<smem>>
    %42 = vector.broadcast %41 : f32 to vector<2x896xf32>
    %43 = arith.mulf %42, %36 : vector<2x896xf32>
    %44 = arith.addf %31, %43 : vector<2x896xf32>
    %c2 = arith.constant 2 : index
    %c0_39 = arith.constant 0 : index
    %45 = memref.load %arg1[%c2, %c0_39] : memref<5x9xf32, #tpu.memory_space<smem>>
    %46 = vector.broadcast %45 : f32 to vector<2x896xf32>
    %47 = arith.mulf %46, %36 : vector<2x896xf32>
    %48 = arith.addf %32, %47 : vector<2x896xf32>
    %c3 = arith.constant 3 : index
    %c0_40 = arith.constant 0 : index
    %49 = memref.load %arg1[%c3, %c0_40] : memref<5x9xf32, #tpu.memory_space<smem>>
    %50 = vector.broadcast %49 : f32 to vector<2x896xf32>
    %51 = arith.mulf %50, %36 : vector<2x896xf32>
    %52 = arith.addf %33, %51 : vector<2x896xf32>
    %c4 = arith.constant 4 : index
    %c0_41 = arith.constant 0 : index
    %53 = memref.load %arg1[%c4, %c0_41] : memref<5x9xf32, #tpu.memory_space<smem>>
    %54 = vector.broadcast %53 : f32 to vector<2x896xf32>
    %55 = arith.mulf %54, %36 : vector<2x896xf32>
    %56 = arith.addf %34, %55 : vector<2x896xf32>
    %c1_42 = arith.constant 1 : index
    %c0_43 = arith.constant 0 : index
    %c0_44 = arith.constant 0 : index
    %57 = vector.load %arg0[%c1_42, %c0_43, %c0_44] : memref<9x2x896xf32, #tpu.memory_space<vmem>>, vector<1x2x896xf32>
    %58 = vector.shape_cast %57 : vector<1x2x896xf32> to vector<2x896xf32>
    %c0_45 = arith.constant 0 : index
    %c1_46 = arith.constant 1 : index
    %59 = memref.load %arg1[%c0_45, %c1_46] : memref<5x9xf32, #tpu.memory_space<smem>>
    %60 = vector.broadcast %59 : f32 to vector<2x896xf32>
    %61 = arith.mulf %60, %58 : vector<2x896xf32>
    %62 = arith.addf %40, %61 : vector<2x896xf32>
    %c1_47 = arith.constant 1 : index
    %c1_48 = arith.constant 1 : index
    %63 = memref.load %arg1[%c1_47, %c1_48] : memref<5x9xf32, #tpu.memory_space<smem>>
    %64 = vector.broadcast %63 : f32 to vector<2x896xf32>
    %65 = arith.mulf %64, %58 : vector<2x896xf32>
    %66 = arith.addf %44, %65 : vector<2x896xf32>
    %c2_49 = arith.constant 2 : index
    %c1_50 = arith.constant 1 : index
    %67 = memref.load %arg1[%c2_49, %c1_50] : memref<5x9xf32, #tpu.memory_space<smem>>
    %68 = vector.broadcast %67 : f32 to vector<2x896xf32>
    %69 = arith.mulf %68, %58 : vector<2x896xf32>
    %70 = arith.addf %48, %69 : vector<2x896xf32>
    %c3_51 = arith.constant 3 : index
    %c1_52 = arith.constant 1 : index
    %71 = memref.load %arg1[%c3_51, %c1_52] : memref<5x9xf32, #tpu.memory_space<smem>>
    %72 = vector.broadcast %71 : f32 to vector<2x896xf32>
    %73 = arith.mulf %72, %58 : vector<2x896xf32>
    %74 = arith.addf %52, %73 : vector<2x896xf32>
    %c4_53 = arith.constant 4 : index
    %c1_54 = arith.constant 1 : index
    %75 = memref.load %arg1[%c4_53, %c1_54] : memref<5x9xf32, #tpu.memory_space<smem>>
    %76 = vector.broadcast %75 : f32 to vector<2x896xf32>
    %77 = arith.mulf %76, %58 : vector<2x896xf32>
    %78 = arith.addf %56, %77 : vector<2x896xf32>
    %c2_55 = arith.constant 2 : index
    %c0_56 = arith.constant 0 : index
    %c0_57 = arith.constant 0 : index
    %79 = vector.load %arg0[%c2_55, %c0_56, %c0_57] : memref<9x2x896xf32, #tpu.memory_space<vmem>>, vector<1x2x896xf32>
    %80 = vector.shape_cast %79 : vector<1x2x896xf32> to vector<2x896xf32>
    %c0_58 = arith.constant 0 : index
    %c2_59 = arith.constant 2 : index
    %81 = memref.load %arg1[%c0_58, %c2_59] : memref<5x9xf32, #tpu.memory_space<smem>>
    %82 = vector.broadcast %81 : f32 to vector<2x896xf32>
    %83 = arith.mulf %82, %80 : vector<2x896xf32>
    %84 = arith.addf %62, %83 : vector<2x896xf32>
    %c1_60 = arith.constant 1 : index
    %c2_61 = arith.constant 2 : index
    %85 = memref.load %arg1[%c1_60, %c2_61] : memref<5x9xf32, #tpu.memory_space<smem>>
    %86 = vector.broadcast %85 : f32 to vector<2x896xf32>
    %87 = arith.mulf %86, %80 : vector<2x896xf32>
    %88 = arith.addf %66, %87 : vector<2x896xf32>
    %c2_62 = arith.constant 2 : index
    %c2_63 = arith.constant 2 : index
    %89 = memref.load %arg1[%c2_62, %c2_63] : memref<5x9xf32, #tpu.memory_space<smem>>
    %90 = vector.broadcast %89 : f32 to vector<2x896xf32>
    %91 = arith.mulf %90, %80 : vector<2x896xf32>
    %92 = arith.addf %70, %91 : vector<2x896xf32>
    %c3_64 = arith.constant 3 : index
    %c2_65 = arith.constant 2 : index
    %93 = memref.load %arg1[%c3_64, %c2_65] : memref<5x9xf32, #tpu.memory_space<smem>>
    %94 = vector.broadcast %93 : f32 to vector<2x896xf32>
    %95 = arith.mulf %94, %80 : vector<2x896xf32>
    %96 = arith.addf %74, %95 : vector<2x896xf32>
    %c4_66 = arith.constant 4 : index
    %c2_67 = arith.constant 2 : index
    %97 = memref.load %arg1[%c4_66, %c2_67] : memref<5x9xf32, #tpu.memory_space<smem>>
    %98 = vector.broadcast %97 : f32 to vector<2x896xf32>
    %99 = arith.mulf %98, %80 : vector<2x896xf32>
    %100 = arith.addf %78, %99 : vector<2x896xf32>
    %c3_68 = arith.constant 3 : index
    %c0_69 = arith.constant 0 : index
    %c0_70 = arith.constant 0 : index
    %101 = vector.load %arg0[%c3_68, %c0_69, %c0_70] : memref<9x2x896xf32, #tpu.memory_space<vmem>>, vector<1x2x896xf32>
    %102 = vector.shape_cast %101 : vector<1x2x896xf32> to vector<2x896xf32>
    %c0_71 = arith.constant 0 : index
    %c3_72 = arith.constant 3 : index
    %103 = memref.load %arg1[%c0_71, %c3_72] : memref<5x9xf32, #tpu.memory_space<smem>>
    %104 = vector.broadcast %103 : f32 to vector<2x896xf32>
    %105 = arith.mulf %104, %102 : vector<2x896xf32>
    %106 = arith.addf %84, %105 : vector<2x896xf32>
    %c1_73 = arith.constant 1 : index
    %c3_74 = arith.constant 3 : index
    %107 = memref.load %arg1[%c1_73, %c3_74] : memref<5x9xf32, #tpu.memory_space<smem>>
    %108 = vector.broadcast %107 : f32 to vector<2x896xf32>
    %109 = arith.mulf %108, %102 : vector<2x896xf32>
    %110 = arith.addf %88, %109 : vector<2x896xf32>
    %c2_75 = arith.constant 2 : index
    %c3_76 = arith.constant 3 : index
    %111 = memref.load %arg1[%c2_75, %c3_76] : memref<5x9xf32, #tpu.memory_space<smem>>
    %112 = vector.broadcast %111 : f32 to vector<2x896xf32>
    %113 = arith.mulf %112, %102 : vector<2x896xf32>
    %114 = arith.addf %92, %113 : vector<2x896xf32>
    %c3_77 = arith.constant 3 : index
    %c3_78 = arith.constant 3 : index
    %115 = memref.load %arg1[%c3_77, %c3_78] : memref<5x9xf32, #tpu.memory_space<smem>>
    %116 = vector.broadcast %115 : f32 to vector<2x896xf32>
    %117 = arith.mulf %116, %102 : vector<2x896xf32>
    %118 = arith.addf %96, %117 : vector<2x896xf32>
    %c4_79 = arith.constant 4 : index
    %c3_80 = arith.constant 3 : index
    %119 = memref.load %arg1[%c4_79, %c3_80] : memref<5x9xf32, #tpu.memory_space<smem>>
    %120 = vector.broadcast %119 : f32 to vector<2x896xf32>
    %121 = arith.mulf %120, %102 : vector<2x896xf32>
    %122 = arith.addf %100, %121 : vector<2x896xf32>
    %c4_81 = arith.constant 4 : index
    %c0_82 = arith.constant 0 : index
    %c0_83 = arith.constant 0 : index
    %123 = vector.load %arg0[%c4_81, %c0_82, %c0_83] : memref<9x2x896xf32, #tpu.memory_space<vmem>>, vector<1x2x896xf32>
    %124 = vector.shape_cast %123 : vector<1x2x896xf32> to vector<2x896xf32>
    %c0_84 = arith.constant 0 : index
    %c4_85 = arith.constant 4 : index
    %125 = memref.load %arg1[%c0_84, %c4_85] : memref<5x9xf32, #tpu.memory_space<smem>>
    %126 = vector.broadcast %125 : f32 to vector<2x896xf32>
    %127 = arith.mulf %126, %124 : vector<2x896xf32>
    %128 = arith.addf %106, %127 : vector<2x896xf32>
    %c1_86 = arith.constant 1 : index
    %c4_87 = arith.constant 4 : index
    %129 = memref.load %arg1[%c1_86, %c4_87] : memref<5x9xf32, #tpu.memory_space<smem>>
    %130 = vector.broadcast %129 : f32 to vector<2x896xf32>
    %131 = arith.mulf %130, %124 : vector<2x896xf32>
    %132 = arith.addf %110, %131 : vector<2x896xf32>
    %c2_88 = arith.constant 2 : index
    %c4_89 = arith.constant 4 : index
    %133 = memref.load %arg1[%c2_88, %c4_89] : memref<5x9xf32, #tpu.memory_space<smem>>
    %134 = vector.broadcast %133 : f32 to vector<2x896xf32>
    %135 = arith.mulf %134, %124 : vector<2x896xf32>
    %136 = arith.addf %114, %135 : vector<2x896xf32>
    %c3_90 = arith.constant 3 : index
    %c4_91 = arith.constant 4 : index
    %137 = memref.load %arg1[%c3_90, %c4_91] : memref<5x9xf32, #tpu.memory_space<smem>>
    %138 = vector.broadcast %137 : f32 to vector<2x896xf32>
    %139 = arith.mulf %138, %124 : vector<2x896xf32>
    %140 = arith.addf %118, %139 : vector<2x896xf32>
    %c4_92 = arith.constant 4 : index
    %c4_93 = arith.constant 4 : index
    %141 = memref.load %arg1[%c4_92, %c4_93] : memref<5x9xf32, #tpu.memory_space<smem>>
    %142 = vector.broadcast %141 : f32 to vector<2x896xf32>
    %143 = arith.mulf %142, %124 : vector<2x896xf32>
    %144 = arith.addf %122, %143 : vector<2x896xf32>
    %c5 = arith.constant 5 : index
    %c0_94 = arith.constant 0 : index
    %c0_95 = arith.constant 0 : index
    %145 = vector.load %arg0[%c5, %c0_94, %c0_95] : memref<9x2x896xf32, #tpu.memory_space<vmem>>, vector<1x2x896xf32>
    %146 = vector.shape_cast %145 : vector<1x2x896xf32> to vector<2x896xf32>
    %c0_96 = arith.constant 0 : index
    %c5_97 = arith.constant 5 : index
    %147 = memref.load %arg1[%c0_96, %c5_97] : memref<5x9xf32, #tpu.memory_space<smem>>
    %148 = vector.broadcast %147 : f32 to vector<2x896xf32>
    %149 = arith.mulf %148, %146 : vector<2x896xf32>
    %150 = arith.addf %128, %149 : vector<2x896xf32>
    %c1_98 = arith.constant 1 : index
    %c5_99 = arith.constant 5 : index
    %151 = memref.load %arg1[%c1_98, %c5_99] : memref<5x9xf32, #tpu.memory_space<smem>>
    %152 = vector.broadcast %151 : f32 to vector<2x896xf32>
    %153 = arith.mulf %152, %146 : vector<2x896xf32>
    %154 = arith.addf %132, %153 : vector<2x896xf32>
    %c2_100 = arith.constant 2 : index
    %c5_101 = arith.constant 5 : index
    %155 = memref.load %arg1[%c2_100, %c5_101] : memref<5x9xf32, #tpu.memory_space<smem>>
    %156 = vector.broadcast %155 : f32 to vector<2x896xf32>
    %157 = arith.mulf %156, %146 : vector<2x896xf32>
    %158 = arith.addf %136, %157 : vector<2x896xf32>
    %c3_102 = arith.constant 3 : index
    %c5_103 = arith.constant 5 : index
    %159 = memref.load %arg1[%c3_102, %c5_103] : memref<5x9xf32, #tpu.memory_space<smem>>
    %160 = vector.broadcast %159 : f32 to vector<2x896xf32>
    %161 = arith.mulf %160, %146 : vector<2x896xf32>
    %162 = arith.addf %140, %161 : vector<2x896xf32>
    %c4_104 = arith.constant 4 : index
    %c5_105 = arith.constant 5 : index
    %163 = memref.load %arg1[%c4_104, %c5_105] : memref<5x9xf32, #tpu.memory_space<smem>>
    %164 = vector.broadcast %163 : f32 to vector<2x896xf32>
    %165 = arith.mulf %164, %146 : vector<2x896xf32>
    %166 = arith.addf %144, %165 : vector<2x896xf32>
    %c6 = arith.constant 6 : index
    %c0_106 = arith.constant 0 : index
    %c0_107 = arith.constant 0 : index
    %167 = vector.load %arg0[%c6, %c0_106, %c0_107] : memref<9x2x896xf32, #tpu.memory_space<vmem>>, vector<1x2x896xf32>
    %168 = vector.shape_cast %167 : vector<1x2x896xf32> to vector<2x896xf32>
    %c0_108 = arith.constant 0 : index
    %c6_109 = arith.constant 6 : index
    %169 = memref.load %arg1[%c0_108, %c6_109] : memref<5x9xf32, #tpu.memory_space<smem>>
    %170 = vector.broadcast %169 : f32 to vector<2x896xf32>
    %171 = arith.mulf %170, %168 : vector<2x896xf32>
    %172 = arith.addf %150, %171 : vector<2x896xf32>
    %c1_110 = arith.constant 1 : index
    %c6_111 = arith.constant 6 : index
    %173 = memref.load %arg1[%c1_110, %c6_111] : memref<5x9xf32, #tpu.memory_space<smem>>
    %174 = vector.broadcast %173 : f32 to vector<2x896xf32>
    %175 = arith.mulf %174, %168 : vector<2x896xf32>
    %176 = arith.addf %154, %175 : vector<2x896xf32>
    %c2_112 = arith.constant 2 : index
    %c6_113 = arith.constant 6 : index
    %177 = memref.load %arg1[%c2_112, %c6_113] : memref<5x9xf32, #tpu.memory_space<smem>>
    %178 = vector.broadcast %177 : f32 to vector<2x896xf32>
    %179 = arith.mulf %178, %168 : vector<2x896xf32>
    %180 = arith.addf %158, %179 : vector<2x896xf32>
    %c3_114 = arith.constant 3 : index
    %c6_115 = arith.constant 6 : index
    %181 = memref.load %arg1[%c3_114, %c6_115] : memref<5x9xf32, #tpu.memory_space<smem>>
    %182 = vector.broadcast %181 : f32 to vector<2x896xf32>
    %183 = arith.mulf %182, %168 : vector<2x896xf32>
    %184 = arith.addf %162, %183 : vector<2x896xf32>
    %c4_116 = arith.constant 4 : index
    %c6_117 = arith.constant 6 : index
    %185 = memref.load %arg1[%c4_116, %c6_117] : memref<5x9xf32, #tpu.memory_space<smem>>
    %186 = vector.broadcast %185 : f32 to vector<2x896xf32>
    %187 = arith.mulf %186, %168 : vector<2x896xf32>
    %188 = arith.addf %166, %187 : vector<2x896xf32>
    %c7 = arith.constant 7 : index
    %c0_118 = arith.constant 0 : index
    %c0_119 = arith.constant 0 : index
    %189 = vector.load %arg0[%c7, %c0_118, %c0_119] : memref<9x2x896xf32, #tpu.memory_space<vmem>>, vector<1x2x896xf32>
    %190 = vector.shape_cast %189 : vector<1x2x896xf32> to vector<2x896xf32>
    %c0_120 = arith.constant 0 : index
    %c7_121 = arith.constant 7 : index
    %191 = memref.load %arg1[%c0_120, %c7_121] : memref<5x9xf32, #tpu.memory_space<smem>>
    %192 = vector.broadcast %191 : f32 to vector<2x896xf32>
    %193 = arith.mulf %192, %190 : vector<2x896xf32>
    %194 = arith.addf %172, %193 : vector<2x896xf32>
    %c1_122 = arith.constant 1 : index
    %c7_123 = arith.constant 7 : index
    %195 = memref.load %arg1[%c1_122, %c7_123] : memref<5x9xf32, #tpu.memory_space<smem>>
    %196 = vector.broadcast %195 : f32 to vector<2x896xf32>
    %197 = arith.mulf %196, %190 : vector<2x896xf32>
    %198 = arith.addf %176, %197 : vector<2x896xf32>
    %c2_124 = arith.constant 2 : index
    %c7_125 = arith.constant 7 : index
    %199 = memref.load %arg1[%c2_124, %c7_125] : memref<5x9xf32, #tpu.memory_space<smem>>
    %200 = vector.broadcast %199 : f32 to vector<2x896xf32>
    %201 = arith.mulf %200, %190 : vector<2x896xf32>
    %202 = arith.addf %180, %201 : vector<2x896xf32>
    %c3_126 = arith.constant 3 : index
    %c7_127 = arith.constant 7 : index
    %203 = memref.load %arg1[%c3_126, %c7_127] : memref<5x9xf32, #tpu.memory_space<smem>>
    %204 = vector.broadcast %203 : f32 to vector<2x896xf32>
    %205 = arith.mulf %204, %190 : vector<2x896xf32>
    %206 = arith.addf %184, %205 : vector<2x896xf32>
    %c4_128 = arith.constant 4 : index
    %c7_129 = arith.constant 7 : index
    %207 = memref.load %arg1[%c4_128, %c7_129] : memref<5x9xf32, #tpu.memory_space<smem>>
    %208 = vector.broadcast %207 : f32 to vector<2x896xf32>
    %209 = arith.mulf %208, %190 : vector<2x896xf32>
    %210 = arith.addf %188, %209 : vector<2x896xf32>
    %c8 = arith.constant 8 : index
    %c0_130 = arith.constant 0 : index
    %c0_131 = arith.constant 0 : index
    %211 = vector.load %arg0[%c8, %c0_130, %c0_131] : memref<9x2x896xf32, #tpu.memory_space<vmem>>, vector<1x2x896xf32>
    %212 = vector.shape_cast %211 : vector<1x2x896xf32> to vector<2x896xf32>
    %c0_132 = arith.constant 0 : index
    %c8_133 = arith.constant 8 : index
    %213 = memref.load %arg1[%c0_132, %c8_133] : memref<5x9xf32, #tpu.memory_space<smem>>
    %214 = vector.broadcast %213 : f32 to vector<2x896xf32>
    %215 = arith.mulf %214, %212 : vector<2x896xf32>
    %216 = arith.addf %194, %215 : vector<2x896xf32>
    %c1_134 = arith.constant 1 : index
    %c8_135 = arith.constant 8 : index
    %217 = memref.load %arg1[%c1_134, %c8_135] : memref<5x9xf32, #tpu.memory_space<smem>>
    %218 = vector.broadcast %217 : f32 to vector<2x896xf32>
    %219 = arith.mulf %218, %212 : vector<2x896xf32>
    %220 = arith.addf %198, %219 : vector<2x896xf32>
    %c2_136 = arith.constant 2 : index
    %c8_137 = arith.constant 8 : index
    %221 = memref.load %arg1[%c2_136, %c8_137] : memref<5x9xf32, #tpu.memory_space<smem>>
    %222 = vector.broadcast %221 : f32 to vector<2x896xf32>
    %223 = arith.mulf %222, %212 : vector<2x896xf32>
    %224 = arith.addf %202, %223 : vector<2x896xf32>
    %c3_138 = arith.constant 3 : index
    %c8_139 = arith.constant 8 : index
    %225 = memref.load %arg1[%c3_138, %c8_139] : memref<5x9xf32, #tpu.memory_space<smem>>
    %226 = vector.broadcast %225 : f32 to vector<2x896xf32>
    %227 = arith.mulf %226, %212 : vector<2x896xf32>
    %228 = arith.addf %206, %227 : vector<2x896xf32>
    %c4_140 = arith.constant 4 : index
    %c8_141 = arith.constant 8 : index
    %229 = memref.load %arg1[%c4_140, %c8_141] : memref<5x9xf32, #tpu.memory_space<smem>>
    %230 = vector.broadcast %229 : f32 to vector<2x896xf32>
    %231 = arith.mulf %230, %212 : vector<2x896xf32>
    %232 = arith.addf %210, %231 : vector<2x896xf32>
    %cst_142 = arith.constant 0.000000e+00 : f32
    %233 = vector.broadcast %cst_142 : f32 to vector<2x128xf32>
    %c0_143 = arith.constant 0 : index
    %234 = memref.load %arg2[%c0_143] : memref<5xf32, #tpu.memory_space<smem>>
    %235 = vector.broadcast %234 : f32 to vector<2x896xf32>
    %236 = arith.addf %216, %235 : vector<2x896xf32>
    %237 = arith.negf %236 : vector<2x896xf32>
    %238 = math.exp %237 : vector<2x896xf32>
    %cst_144 = arith.constant 1.000000e+00 : f32
    %239 = vector.broadcast %cst_144 : f32 to vector<2x896xf32>
    %240 = arith.addf %239, %238 : vector<2x896xf32>
    %241 = arith.divf %239, %240 : vector<2x896xf32>
    %242 = arith.truncf %241 : vector<2x896xf32> to vector<2x896xbf16>
    %c0_i32_145 = arith.constant 0 : i32
    %c0_i32_146 = arith.constant 0 : i32
    %c0_i32_147 = arith.constant 0 : i32
    %c0_i32_148 = arith.constant 0 : i32
    %c0_i32_149 = arith.constant 0 : i32
    %243 = tpu.memref_slice %arg3[%c0_i32_145, %c0_i32_148, %c0_i32_149] : memref<5x896x128xbf16, #tpu.memory_space<any>> -> memref<1x896x128xbf16, #tpu.memory_space<any>>
    %244 = tpu.memref_squeeze %243 : memref<1x896x128xbf16, #tpu.memory_space<any>> -> memref<896x128xbf16, #tpu.memory_space<any>>
    %c0_i32_150 = arith.constant 0 : i32
    %c0_i32_151 = arith.constant 0 : i32
    %245 = tpu.memref_slice %arg8[%c0_i32_146, %c0_i32_150, %c0_i32_151] : memref<5x896x128xbf16, #tpu.memory_space<vmem>> -> memref<1x896x128xbf16, #tpu.memory_space<vmem>>
    %246 = tpu.memref_squeeze %245 : memref<1x896x128xbf16, #tpu.memory_space<vmem>> -> memref<896x128xbf16, #tpu.memory_space<vmem>>
    %247 = tpu.memref_slice %arg9[%c0_i32_147] : memref<5x!tpu.dma_semaphore, #tpu.memory_space<semaphore_mem>> -> memref<1x!tpu.dma_semaphore, #tpu.memory_space<semaphore_mem>>
    %248 = tpu.memref_squeeze %247 : memref<1x!tpu.dma_semaphore, #tpu.memory_space<semaphore_mem>> -> memref<!tpu.dma_semaphore, #tpu.memory_space<semaphore_mem>>
    tpu.wait_dma2 semaphore(%248 : memref<!tpu.dma_semaphore, #tpu.memory_space<semaphore_mem>>) src(%244 : memref<896x128xbf16, #tpu.memory_space<any>>) dst(%246 : memref<896x128xbf16, #tpu.memory_space<vmem>>)
    %c0_152 = arith.constant 0 : index
    %c0_153 = arith.constant 0 : index
    %c0_154 = arith.constant 0 : index
    %249 = vector.load %arg8[%c0_152, %c0_153, %c0_154] : memref<5x896x128xbf16, #tpu.memory_space<vmem>>, vector<1x896x128xbf16>
    %250 = vector.shape_cast %249 : vector<1x896x128xbf16> to vector<896x128xbf16>
    %cst_155 = arith.constant dense<0.000000e+00> : vector<2x128xf32>
    %251 = tpu.matmul %242, %250, %cst_155 {dimension_numbers = #tpu.dot_dimension_numbers<[1], [0], [0], [1], [0, 0, 1, 1], [], []>} : vector<2x896xbf16>, vector<896x128xbf16>, vector<2x128xf32> -> vector<2x128xf32>
    %252 = arith.addf %233, %251 : vector<2x128xf32>
    %c1_156 = arith.constant 1 : index
    %253 = memref.load %arg2[%c1_156] : memref<5xf32, #tpu.memory_space<smem>>
    %254 = vector.broadcast %253 : f32 to vector<2x896xf32>
    %255 = arith.addf %220, %254 : vector<2x896xf32>
    %256 = arith.negf %255 : vector<2x896xf32>
    %257 = math.exp %256 : vector<2x896xf32>
    %cst_157 = arith.constant 1.000000e+00 : f32
    %258 = vector.broadcast %cst_157 : f32 to vector<2x896xf32>
    %259 = arith.addf %258, %257 : vector<2x896xf32>
    %260 = arith.divf %258, %259 : vector<2x896xf32>
    %261 = arith.truncf %260 : vector<2x896xf32> to vector<2x896xbf16>
    %c1_i32_158 = arith.constant 1 : i32
    %c1_i32_159 = arith.constant 1 : i32
    %c1_i32_160 = arith.constant 1 : i32
    %c0_i32_161 = arith.constant 0 : i32
    %c0_i32_162 = arith.constant 0 : i32
    %262 = tpu.memref_slice %arg3[%c1_i32_158, %c0_i32_161, %c0_i32_162] : memref<5x896x128xbf16, #tpu.memory_space<any>> -> memref<1x896x128xbf16, #tpu.memory_space<any>>
    %263 = tpu.memref_squeeze %262 : memref<1x896x128xbf16, #tpu.memory_space<any>> -> memref<896x128xbf16, #tpu.memory_space<any>>
    %c0_i32_163 = arith.constant 0 : i32
    %c0_i32_164 = arith.constant 0 : i32
    %264 = tpu.memref_slice %arg8[%c1_i32_159, %c0_i32_163, %c0_i32_164] : memref<5x896x128xbf16, #tpu.memory_space<vmem>> -> memref<1x896x128xbf16, #tpu.memory_space<vmem>>
    %265 = tpu.memref_squeeze %264 : memref<1x896x128xbf16, #tpu.memory_space<vmem>> -> memref<896x128xbf16, #tpu.memory_space<vmem>>
    %266 = tpu.memref_slice %arg9[%c1_i32_160] : memref<5x!tpu.dma_semaphore, #tpu.memory_space<semaphore_mem>> -> memref<1x!tpu.dma_semaphore, #tpu.memory_space<semaphore_mem>>
    %267 = tpu.memref_squeeze %266 : memref<1x!tpu.dma_semaphore, #tpu.memory_space<semaphore_mem>> -> memref<!tpu.dma_semaphore, #tpu.memory_space<semaphore_mem>>
    tpu.wait_dma2 semaphore(%267 : memref<!tpu.dma_semaphore, #tpu.memory_space<semaphore_mem>>) src(%263 : memref<896x128xbf16, #tpu.memory_space<any>>) dst(%265 : memref<896x128xbf16, #tpu.memory_space<vmem>>)
    %c1_165 = arith.constant 1 : index
    %c0_166 = arith.constant 0 : index
    %c0_167 = arith.constant 0 : index
    %268 = vector.load %arg8[%c1_165, %c0_166, %c0_167] : memref<5x896x128xbf16, #tpu.memory_space<vmem>>, vector<1x896x128xbf16>
    %269 = vector.shape_cast %268 : vector<1x896x128xbf16> to vector<896x128xbf16>
    %cst_168 = arith.constant dense<0.000000e+00> : vector<2x128xf32>
    %270 = tpu.matmul %261, %269, %cst_168 {dimension_numbers = #tpu.dot_dimension_numbers<[1], [0], [0], [1], [0, 0, 1, 1], [], []>} : vector<2x896xbf16>, vector<896x128xbf16>, vector<2x128xf32> -> vector<2x128xf32>
    %271 = arith.addf %252, %270 : vector<2x128xf32>
    %c2_169 = arith.constant 2 : index
    %272 = memref.load %arg2[%c2_169] : memref<5xf32, #tpu.memory_space<smem>>
    %273 = vector.broadcast %272 : f32 to vector<2x896xf32>
    %274 = arith.addf %224, %273 : vector<2x896xf32>
    %275 = arith.negf %274 : vector<2x896xf32>
    %276 = math.exp %275 : vector<2x896xf32>
    %cst_170 = arith.constant 1.000000e+00 : f32
    %277 = vector.broadcast %cst_170 : f32 to vector<2x896xf32>
    %278 = arith.addf %277, %276 : vector<2x896xf32>
    %279 = arith.divf %277, %278 : vector<2x896xf32>
    %280 = arith.truncf %279 : vector<2x896xf32> to vector<2x896xbf16>
    %c2_i32_171 = arith.constant 2 : i32
    %c2_i32_172 = arith.constant 2 : i32
    %c2_i32_173 = arith.constant 2 : i32
    %c0_i32_174 = arith.constant 0 : i32
    %c0_i32_175 = arith.constant 0 : i32
    %281 = tpu.memref_slice %arg3[%c2_i32_171, %c0_i32_174, %c0_i32_175] : memref<5x896x128xbf16, #tpu.memory_space<any>> -> memref<1x896x128xbf16, #tpu.memory_space<any>>
    %282 = tpu.memref_squeeze %281 : memref<1x896x128xbf16, #tpu.memory_space<any>> -> memref<896x128xbf16, #tpu.memory_space<any>>
    %c0_i32_176 = arith.constant 0 : i32
    %c0_i32_177 = arith.constant 0 : i32
    %283 = tpu.memref_slice %arg8[%c2_i32_172, %c0_i32_176, %c0_i32_177] : memref<5x896x128xbf16, #tpu.memory_space<vmem>> -> memref<1x896x128xbf16, #tpu.memory_space<vmem>>
    %284 = tpu.memref_squeeze %283 : memref<1x896x128xbf16, #tpu.memory_space<vmem>> -> memref<896x128xbf16, #tpu.memory_space<vmem>>
    %285 = tpu.memref_slice %arg9[%c2_i32_173] : memref<5x!tpu.dma_semaphore, #tpu.memory_space<semaphore_mem>> -> memref<1x!tpu.dma_semaphore, #tpu.memory_space<semaphore_mem>>
    %286 = tpu.memref_squeeze %285 : memref<1x!tpu.dma_semaphore, #tpu.memory_space<semaphore_mem>> -> memref<!tpu.dma_semaphore, #tpu.memory_space<semaphore_mem>>
    tpu.wait_dma2 semaphore(%286 : memref<!tpu.dma_semaphore, #tpu.memory_space<semaphore_mem>>) src(%282 : memref<896x128xbf16, #tpu.memory_space<any>>) dst(%284 : memref<896x128xbf16, #tpu.memory_space<vmem>>)
    %c2_178 = arith.constant 2 : index
    %c0_179 = arith.constant 0 : index
    %c0_180 = arith.constant 0 : index
    %287 = vector.load %arg8[%c2_178, %c0_179, %c0_180] : memref<5x896x128xbf16, #tpu.memory_space<vmem>>, vector<1x896x128xbf16>
    %288 = vector.shape_cast %287 : vector<1x896x128xbf16> to vector<896x128xbf16>
    %cst_181 = arith.constant dense<0.000000e+00> : vector<2x128xf32>
    %289 = tpu.matmul %280, %288, %cst_181 {dimension_numbers = #tpu.dot_dimension_numbers<[1], [0], [0], [1], [0, 0, 1, 1], [], []>} : vector<2x896xbf16>, vector<896x128xbf16>, vector<2x128xf32> -> vector<2x128xf32>
    %290 = arith.addf %271, %289 : vector<2x128xf32>
    %c3_182 = arith.constant 3 : index
    %291 = memref.load %arg2[%c3_182] : memref<5xf32, #tpu.memory_space<smem>>
    %292 = vector.broadcast %291 : f32 to vector<2x896xf32>
    %293 = arith.addf %228, %292 : vector<2x896xf32>
    %294 = arith.negf %293 : vector<2x896xf32>
    %295 = math.exp %294 : vector<2x896xf32>
    %cst_183 = arith.constant 1.000000e+00 : f32
    %296 = vector.broadcast %cst_183 : f32 to vector<2x896xf32>
    %297 = arith.addf %296, %295 : vector<2x896xf32>
    %298 = arith.divf %296, %297 : vector<2x896xf32>
    %299 = arith.truncf %298 : vector<2x896xf32> to vector<2x896xbf16>
    %c3_i32_184 = arith.constant 3 : i32
    %c3_i32_185 = arith.constant 3 : i32
    %c3_i32_186 = arith.constant 3 : i32
    %c0_i32_187 = arith.constant 0 : i32
    %c0_i32_188 = arith.constant 0 : i32
    %300 = tpu.memref_slice %arg3[%c3_i32_184, %c0_i32_187, %c0_i32_188] : memref<5x896x128xbf16, #tpu.memory_space<any>> -> memref<1x896x128xbf16, #tpu.memory_space<any>>
    %301 = tpu.memref_squeeze %300 : memref<1x896x128xbf16, #tpu.memory_space<any>> -> memref<896x128xbf16, #tpu.memory_space<any>>
    %c0_i32_189 = arith.constant 0 : i32
    %c0_i32_190 = arith.constant 0 : i32
    %302 = tpu.memref_slice %arg8[%c3_i32_185, %c0_i32_189, %c0_i32_190] : memref<5x896x128xbf16, #tpu.memory_space<vmem>> -> memref<1x896x128xbf16, #tpu.memory_space<vmem>>
    %303 = tpu.memref_squeeze %302 : memref<1x896x128xbf16, #tpu.memory_space<vmem>> -> memref<896x128xbf16, #tpu.memory_space<vmem>>
    %304 = tpu.memref_slice %arg9[%c3_i32_186] : memref<5x!tpu.dma_semaphore, #tpu.memory_space<semaphore_mem>> -> memref<1x!tpu.dma_semaphore, #tpu.memory_space<semaphore_mem>>
    %305 = tpu.memref_squeeze %304 : memref<1x!tpu.dma_semaphore, #tpu.memory_space<semaphore_mem>> -> memref<!tpu.dma_semaphore, #tpu.memory_space<semaphore_mem>>
    tpu.wait_dma2 semaphore(%305 : memref<!tpu.dma_semaphore, #tpu.memory_space<semaphore_mem>>) src(%301 : memref<896x128xbf16, #tpu.memory_space<any>>) dst(%303 : memref<896x128xbf16, #tpu.memory_space<vmem>>)
    %c3_191 = arith.constant 3 : index
    %c0_192 = arith.constant 0 : index
    %c0_193 = arith.constant 0 : index
    %306 = vector.load %arg8[%c3_191, %c0_192, %c0_193] : memref<5x896x128xbf16, #tpu.memory_space<vmem>>, vector<1x896x128xbf16>
    %307 = vector.shape_cast %306 : vector<1x896x128xbf16> to vector<896x128xbf16>
    %cst_194 = arith.constant dense<0.000000e+00> : vector<2x128xf32>
    %308 = tpu.matmul %299, %307, %cst_194 {dimension_numbers = #tpu.dot_dimension_numbers<[1], [0], [0], [1], [0, 0, 1, 1], [], []>} : vector<2x896xbf16>, vector<896x128xbf16>, vector<2x128xf32> -> vector<2x128xf32>
    %309 = arith.addf %290, %308 : vector<2x128xf32>
    %c4_195 = arith.constant 4 : index
    %310 = memref.load %arg2[%c4_195] : memref<5xf32, #tpu.memory_space<smem>>
    %311 = vector.broadcast %310 : f32 to vector<2x896xf32>
    %312 = arith.addf %232, %311 : vector<2x896xf32>
    %313 = arith.negf %312 : vector<2x896xf32>
    %314 = math.exp %313 : vector<2x896xf32>
    %cst_196 = arith.constant 1.000000e+00 : f32
    %315 = vector.broadcast %cst_196 : f32 to vector<2x896xf32>
    %316 = arith.addf %315, %314 : vector<2x896xf32>
    %317 = arith.divf %315, %316 : vector<2x896xf32>
    %318 = arith.truncf %317 : vector<2x896xf32> to vector<2x896xbf16>
    %c4_i32_197 = arith.constant 4 : i32
    %c4_i32_198 = arith.constant 4 : i32
    %c4_i32_199 = arith.constant 4 : i32
    %c0_i32_200 = arith.constant 0 : i32
    %c0_i32_201 = arith.constant 0 : i32
    %319 = tpu.memref_slice %arg3[%c4_i32_197, %c0_i32_200, %c0_i32_201] : memref<5x896x128xbf16, #tpu.memory_space<any>> -> memref<1x896x128xbf16, #tpu.memory_space<any>>
    %320 = tpu.memref_squeeze %319 : memref<1x896x128xbf16, #tpu.memory_space<any>> -> memref<896x128xbf16, #tpu.memory_space<any>>
    %c0_i32_202 = arith.constant 0 : i32
    %c0_i32_203 = arith.constant 0 : i32
    %321 = tpu.memref_slice %arg8[%c4_i32_198, %c0_i32_202, %c0_i32_203] : memref<5x896x128xbf16, #tpu.memory_space<vmem>> -> memref<1x896x128xbf16, #tpu.memory_space<vmem>>
    %322 = tpu.memref_squeeze %321 : memref<1x896x128xbf16, #tpu.memory_space<vmem>> -> memref<896x128xbf16, #tpu.memory_space<vmem>>
    %323 = tpu.memref_slice %arg9[%c4_i32_199] : memref<5x!tpu.dma_semaphore, #tpu.memory_space<semaphore_mem>> -> memref<1x!tpu.dma_semaphore, #tpu.memory_space<semaphore_mem>>
    %324 = tpu.memref_squeeze %323 : memref<1x!tpu.dma_semaphore, #tpu.memory_space<semaphore_mem>> -> memref<!tpu.dma_semaphore, #tpu.memory_space<semaphore_mem>>
    tpu.wait_dma2 semaphore(%324 : memref<!tpu.dma_semaphore, #tpu.memory_space<semaphore_mem>>) src(%320 : memref<896x128xbf16, #tpu.memory_space<any>>) dst(%322 : memref<896x128xbf16, #tpu.memory_space<vmem>>)
    %c4_204 = arith.constant 4 : index
    %c0_205 = arith.constant 0 : index
    %c0_206 = arith.constant 0 : index
    %325 = vector.load %arg8[%c4_204, %c0_205, %c0_206] : memref<5x896x128xbf16, #tpu.memory_space<vmem>>, vector<1x896x128xbf16>
    %326 = vector.shape_cast %325 : vector<1x896x128xbf16> to vector<896x128xbf16>
    %cst_207 = arith.constant dense<0.000000e+00> : vector<2x128xf32>
    %327 = tpu.matmul %318, %326, %cst_207 {dimension_numbers = #tpu.dot_dimension_numbers<[1], [0], [0], [1], [0, 0, 1, 1], [], []>} : vector<2x896xbf16>, vector<896x128xbf16>, vector<2x128xf32> -> vector<2x128xf32>
    %328 = arith.addf %309, %327 : vector<2x128xf32>
    %c0_208 = arith.constant 0 : index
    %c0_209 = arith.constant 0 : index
    %329 = vector.load %arg4[%c0_208, %c0_209] : memref<1x128xf32, #tpu.memory_space<vmem>>, vector<1x128xf32>
    %330 = vector.broadcast %329 : vector<1x128xf32> to vector<2x128xf32>
    %331 = arith.addf %328, %330 : vector<2x128xf32>
    %332 = arith.negf %331 : vector<2x128xf32>
    %333 = math.exp %332 : vector<2x128xf32>
    %cst_210 = arith.constant 1.000000e+00 : f32
    %334 = vector.broadcast %cst_210 : f32 to vector<2x128xf32>
    %335 = arith.addf %334, %333 : vector<2x128xf32>
    %336 = arith.divf %334, %335 : vector<2x128xf32>
    %c0_211 = arith.constant 0 : index
    %c0_212 = arith.constant 0 : index
    %337 = vector.load %arg5[%c0_211, %c0_212] : memref<128x128xf32, #tpu.memory_space<vmem>>, vector<128x128xf32>
    %cst_213 = arith.constant dense<0.000000e+00> : vector<2x128xf32>
    %338 = tpu.matmul %336, %337, %cst_213 {dimension_numbers = #tpu.dot_dimension_numbers<[1], [0], [0], [1], [0, 0, 1, 1], [], []>} : vector<2x128xf32>, vector<128x128xf32>, vector<2x128xf32> -> vector<2x128xf32>
    %c0_214 = arith.constant 0 : index
    %c0_215 = arith.constant 0 : index
    %339 = vector.load %arg6[%c0_214, %c0_215] : memref<1x128xf32, #tpu.memory_space<vmem>>, vector<1x128xf32>
    %340 = vector.broadcast %339 : vector<1x128xf32> to vector<2x128xf32>
    %341 = arith.addf %338, %340 : vector<2x128xf32>
    %342 = arith.negf %341 : vector<2x128xf32>
    %343 = math.exp %342 : vector<2x128xf32>
    %cst_216 = arith.constant 1.000000e+00 : f32
    %344 = vector.broadcast %cst_216 : f32 to vector<2x128xf32>
    %345 = arith.addf %344, %343 : vector<2x128xf32>
    %346 = arith.divf %344, %345 : vector<2x128xf32>
    %c0_217 = arith.constant 0 : index
    %c0_218 = arith.constant 0 : index
    %347 = vector.load %arg7[%c0_217, %c0_218] : memref<2x128xf32, #tpu.memory_space<vmem>>, vector<2x128xf32>
    tpu.vector_store %arg7[%c0_217, %c0_218], %346 {strides = array<i32>} : memref<2x128xf32, #tpu.memory_space<vmem>>, vector<2x128xf32>,
    return
  }
}

</mosaic_0001>

<llo_original>
// kernel: simple_cnn_forward.1
$region0: #{simple_cnn_forward.1}
  #allocation0 [shape = 'u32[]', space=smem, size = 0x4, offset = 0x4, fixed_abs, tag = 'smem constant byte address 0x4 - core index']
  #allocation1 [shape = 'u32[144,128]{1,0:T(1,128)}', space=vmem, size = 0x12000, scoped, tag = 'internal scratch']
  #allocation2 [shape = 'bf16[5,896,128]{2,1,0:T(8,128)(2,1)}', space=vmem, size = 0x118000, scoped, tag = 'scratch operand']
  #allocation3 [shape = 's32[5]{0}', space=sflag, size = 0x14, scoped, tag = 'scratch operand']
  #allocation10 [shape = 's32[]', space=sflag, size = 0x4, offset = 0, fixed_abs, tag = 'sflag constant byte address 0x0 - dummy sync flag']
  #allocation11 [shape = 's32[]', space=sflag, size = 0x4, offset = 0, fixed_abs, tag = 'sflag constant byte address 0x0 - dummy sync flag']
  #allocation12 [shape = 's32[]', space=sflag, size = 0x4, offset = 0, fixed_abs, tag = 'sflag constant byte address 0x0 - dummy sync flag']
  #allocation13 [shape = 's32[]', space=sflag, size = 0x4, offset = 0, fixed_abs, tag = 'sflag constant byte address 0x0 - dummy sync flag']
  #allocation14 [shape = 's32[]', space=sflag, size = 0x4, offset = 0, fixed_abs, tag = 'sflag constant byte address 0x0 - dummy sync flag']
  %s0 = inlined_call_operand.vmem [shape: f32[9,2,896], index: 0, kind: input, shape index: {}]
  %s1 = inlined_call_operand.vmem [shape: f32[5,9], index: 1, kind: input, shape index: {}]
  %s2 = inlined_call_operand.vmem [shape: f32[5], index: 2, kind: input, shape index: {}]
  %s3 = inlined_call_operand.vmem [shape: bf16[5,896,128], index: 3, kind: input, shape index: {}]
  %s4 = inlined_call_operand.vmem [shape: f32[1,128], index: 4, kind: input, shape index: {}]
  %s5 = inlined_call_operand.vmem [shape: f32[128,128], index: 5, kind: input, shape index: {}]
  %s6 = inlined_call_operand.vmem [shape: f32[1,128], index: 6, kind: input, shape index: {}]
  %s7 = inlined_call_operand.hbm [shape: f32[2,128], index: 7, kind: output, shape index: {}]
  %s8 = sld [smem:[#allocation0]]
  $region212: #{simple_cnn_forward.1} parent=0
    _
  %s10 = ssub.s32 1, %s8
  %s11 = scalar_select 0, %s10, %s8
  $region1: #{simple_cnn_forward.1} parent=0
    #allocation4 [shape = 'u8[4096]{0}', space=smem, size = 0x1000, scoped, tag = 'input window, operand 1, single buffered']
    #allocation5 [shape = 's32[1]{0}', space=sflag, size = 0x4, scoped, tag = 'scoped memory for simple_cnn_forward.1']
    #allocation6 [shape = 's32[1]{0}', space=sflag, size = 0x4, scoped, tag = 'scoped memory for simple_cnn_forward.1']
    #allocation7 [shape = 'u8[512]{0}', space=smem, size = 0x200, scoped, tag = 'input window, operand 2, single buffered']
    #allocation8 [shape = 's32[1]{0}', space=sflag, size = 0x4, scoped, tag = 'scoped memory for simple_cnn_forward.1']
    #allocation9 [shape = 'u8[1024]{0}', space=vmem, size = 0x400, scoped, tag = 'output window, operand 0, single buffered']
    %12 = vsyncpa [#allocation6], 0
    %13 = vsyncpa [#allocation8], 0
    %14 = vsyncpa [#allocation5], 0
    // Predicated region
    $region2: #{simple_cnn_forward.1} parent=1 // pred_check
      _
    $region3: #{simple_cnn_forward.1} parent=1 // pred_check_branch
      %16 = sbr.rel (0) target = $region5
    $region4: #{simple_cnn_forward.1} parent=1 // pred_region
      _
    $region5: #{simple_cnn_forward.1} parent=1 // pred_fallthru
      _
    // Predicated region
    $region6: #{simple_cnn_forward.1} parent=1 // pred_check
      _
    $region7: #{simple_cnn_forward.1} parent=1 // pred_check_branch
      %18 = sbr.rel (0) target = $region9
    $region8: #{simple_cnn_forward.1} parent=1 // pred_region
      %s20 = ssub.s32 128, 128
      %21 = vsyncadd [#allocation6], %s20
      %s23 = sshll.u32 %s1, 4
      %s24 = int_to_ptr.vmem [resolvable:$true] %s23
      %26 = dma.vmem_to_smem %s24, 128, [#allocation4], [#allocation6]
    $region9: #{simple_cnn_forward.1} parent=1 // pred_fallthru
      _
    // Predicated region
    $region10: #{simple_cnn_forward.1} parent=1 // pred_check
      _
    $region11: #{simple_cnn_forward.1} parent=1 // pred_check_branch
      %28 = sbr.rel (0) target = $region13
    $region12: #{simple_cnn_forward.1} parent=1 // pred_region
      %s30 = ssub.s32 16, 16
      %31 = vsyncadd [#allocation8], %s30
      %s33 = sshll.u32 %s2, 4
      %s34 = int_to_ptr.vmem [resolvable:$true] %s33
      %36 = dma.vmem_to_smem %s34, 16, [#allocation7], [#allocation8]
    $region13: #{simple_cnn_forward.1} parent=1 // pred_fallthru
      _
    // Predicated region
    $region14: #{simple_cnn_forward.1} parent=1 // pred_check
      _
    $region15: #{simple_cnn_forward.1} parent=1 // pred_check_branch
      %38 = sbr.rel (0) target = $region17
    $region16: #{simple_cnn_forward.1} parent=1 // pred_region
      _
    $region17: #{simple_cnn_forward.1} parent=1 // pred_fallthru
      _
    // Predicated region
    $region18: #{simple_cnn_forward.1} parent=1 // pred_check
      _
    $region19: #{simple_cnn_forward.1} parent=1 // pred_check_branch
      %40 = sbr.rel (0) target = $region21
    $region20: #{simple_cnn_forward.1} parent=1 // pred_region
      _
    $region21: #{simple_cnn_forward.1} parent=1 // pred_fallthru
      _
    // Predicated region
    $region22: #{simple_cnn_forward.1} parent=1 // pred_check
      _
    $region23: #{simple_cnn_forward.1} parent=1 // pred_check_branch
      %42 = sbr.rel (0) target = $region25
    $region24: #{simple_cnn_forward.1} parent=1 // pred_region
      _
    $region25: #{simple_cnn_forward.1} parent=1 // pred_fallthru
      _
    // Predicated region
    $region26: #{simple_cnn_forward.1} parent=1 // pred_check
      _
    $region27: #{simple_cnn_forward.1} parent=1 // pred_check_branch
      %44 = sbr.rel (0) target = $region29
    $region28: #{simple_cnn_forward.1} parent=1 // pred_region
      %45 = dma.done [#allocation6], 128
    $region29: #{simple_cnn_forward.1} parent=1 // pred_fallthru
      _
    // Predicated region
    $region30: #{simple_cnn_forward.1} parent=1 // pred_check
      _
    $region31: #{simple_cnn_forward.1} parent=1 // pred_check_branch
      %47 = sbr.rel (0) target = $region33
    $region32: #{simple_cnn_forward.1} parent=1 // pred_region
      %48 = dma.done [#allocation8], 16
    $region33: #{simple_cnn_forward.1} parent=1 // pred_fallthru
      _
    %49 = sfence
    %p52 = scmp.lt.u32.totalorder 448, 8
    %p53 = pneg %p52
    // Predicated region
    $region34: #{simple_cnn_forward.1} parent=1 // pred_check
      _
    $region35: #{simple_cnn_forward.1} parent=1 // pred_check_branch
      %55 = sbr.rel (%p52) target = $region37
    $region36: #{simple_cnn_forward.1} parent=1 // pred_region
      %s71 = sand.u32 448, 7
      %p72 = scmp.eq.s32.totalorder %s71, 0
      // Predicated region
      $region49: #{simple_cnn_forward.1} parent=36 // pred_check
        %p73 = pneg %p72
      $region50: #{simple_cnn_forward.1} parent=36 // pred_check_branch
        %75 = sbr.rel (%p73) target = $region52
      $region51: #{simple_cnn_forward.1} parent=36 // pred_region
        loop: start=0, step=1, limit=1
        $region53: #{simple_cnn_forward.1} parent=51 // loop_pre_header
          _
        $region54: #{simple_cnn_forward.1} parent=51 // loop_header
          %s77 = sphi 0, %s81
          %p78 = scmp.ge.s32.totalorder %s77, 1
          %s82 = sphi %s3, %s3
          %s83 = sphi [#allocation2], [#allocation2]
        $region55: #{simple_cnn_forward.1} parent=51 // loop_header_branch
          %80 = sbr.rel (%p78) target = $region59
        $region56: #{simple_cnn_forward.1} parent=51 // loop_body
          %v84 = vld [vmem:[%s82] sm:$0xff]
          %85 = vst [vmem:[%s83] sm:$0xff] %v84
          %v86 = vld [vmem:[%s82 + $0x8] sm:$0xff]
          %87 = vst [vmem:[%s83 + $0x8] sm:$0xff] %v86
          %v88 = vld [vmem:[%s82 + $0x10] sm:$0xff]
          %89 = vst [vmem:[%s83 + $0x10] sm:$0xff] %v88
          %v90 = vld [vmem:[%s82 + $0x18] sm:$0xff]
          %91 = vst [vmem:[%s83 + $0x18] sm:$0xff] %v90
          %v92 = vld [vmem:[%s82 + $0x20] sm:$0xff]
          %93 = vst [vmem:[%s83 + $0x20] sm:$0xff] %v92
          %v94 = vld [vmem:[%s82 + $0x28] sm:$0xff]
          %95 = vst [vmem:[%s83 + $0x28] sm:$0xff] %v94
          %v96 = vld [vmem:[%s82 + $0x30] sm:$0xff]
          %97 = vst [vmem:[%s83 + $0x30] sm:$0xff] %v96
          %v98 = vld [vmem:[%s82 + $0x38] sm:$0xff]
          %99 = vst [vmem:[%s83 + $0x38] sm:$0xff] %v98
          %v100 = vld [vmem:[%s82 + $0x40] sm:$0xff]
          %101 = vst [vmem:[%s83 + $0x40] sm:$0xff] %v100
          %v102 = vld [vmem:[%s82 + $0x48] sm:$0xff]
          %103 = vst [vmem:[%s83 + $0x48] sm:$0xff] %v102
          %v104 = vld [vmem:[%s82 + $0x50] sm:$0xff]
          %105 = vst [vmem:[%s83 + $0x50] sm:$0xff] %v104
          %v106 = vld [vmem:[%s82 + $0x58] sm:$0xff]
          %107 = vst [vmem:[%s83 + $0x58] sm:$0xff] %v106
          %v108 = vld [vmem:[%s82 + $0x60] sm:$0xff]
          %109 = vst [vmem:[%s83 + $0x60] sm:$0xff] %v108
          %v110 = vld [vmem:[%s82 + $0x68] sm:$0xff]
          %111 = vst [vmem:[%s83 + $0x68] sm:$0xff] %v110
          %v112 = vld [vmem:[%s82 + $0x70] sm:$0xff]
          %113 = vst [vmem:[%s83 + $0x70] sm:$0xff] %v112
          %v114 = vld [vmem:[%s82 + $0x78] sm:$0xff]
          %115 = vst [vmem:[%s83 + $0x78] sm:$0xff] %v114
          %v116 = vld [vmem:[%s82 + $0x80] sm:$0xff]
          %117 = vst [vmem:[%s83 + $0x80] sm:$0xff] %v116
          %v118 = vld [vmem:[%s82 + $0x88] sm:$0xff]
          %119 = vst [vmem:[%s83 + $0x88] sm:$0xff] %v118
          %v120 = vld [vmem:[%s82 + $0x90] sm:$0xff]
          %121 = vst [vmem:[%s83 + $0x90] sm:$0xff] %v120
          %v122 = vld [vmem:[%s82 + $0x98] sm:$0xff]
          %123 = vst [vmem:[%s83 + $0x98] sm:$0xff] %v122
          %v124 = vld [vmem:[%s82 + $0xa0] sm:$0xff]
          %125 = vst [vmem:[%s83 + $0xa0] sm:$0xff] %v124
          %v126 = vld [vmem:[%s82 + $0xa8] sm:$0xff]
          %127 = vst [vmem:[%s83 + $0xa8] sm:$0xff] %v126
          %v128 = vld [vmem:[%s82 + $0xb0] sm:$0xff]
          %129 = vst [vmem:[%s83 + $0xb0] sm:$0xff] %v128
          %v130 = vld [vmem:[%s82 + $0xb8] sm:$0xff]
          %131 = vst [vmem:[%s83 + $0xb8] sm:$0xff] %v130
          %v132 = vld [vmem:[%s82 + $0xc0] sm:$0xff]
          %133 = vst [vmem:[%s83 + $0xc0] sm:$0xff] %v132
          %v134 = vld [vmem:[%s82 + $0xc8] sm:$0xff]
          %135 = vst [vmem:[%s83 + $0xc8] sm:$0xff] %v134
          %v136 = vld [vmem:[%s82 + $0xd0] sm:$0xff]
          %137 = vst [vmem:[%s83 + $0xd0] sm:$0xff] %v136
          %v138 = vld [vmem:[%s82 + $0xd8] sm:$0xff]
          %139 = vst [vmem:[%s83 + $0xd8] sm:$0xff] %v138
          %v140 = vld [vmem:[%s82 + $0xe0] sm:$0xff]
          %141 = vst [vmem:[%s83 + $0xe0] sm:$0xff] %v140
          %v142 = vld [vmem:[%s82 + $0xe8] sm:$0xff]
          %143 = vst [vmem:[%s83 + $0xe8] sm:$0xff] %v142
          %v144 = vld [vmem:[%s82 + $0xf0] sm:$0xff]
          %145 = vst [vmem:[%s83 + $0xf0] sm:$0xff] %v144
          %v146 = vld [vmem:[%s82 + $0xf8] sm:$0xff]
          %147 = vst [vmem:[%s83 + $0xf8] sm:$0xff] %v146
          %v148 = vld [vmem:[%s82 + $0x100] sm:$0xff]
          %149 = vst [vmem:[%s83 + $0x100] sm:$0xff] %v148
          %v150 = vld [vmem:[%s82 + $0x108] sm:$0xff]
          %151 = vst [vmem:[%s83 + $0x108] sm:$0xff] %v150
          %v152 = vld [vmem:[%s82 + $0x110] sm:$0xff]
          %153 = vst [vmem:[%s83 + $0x110] sm:$0xff] %v152
          %v154 = vld [vmem:[%s82 + $0x118] sm:$0xff]
          %155 = vst [vmem:[%s83 + $0x118] sm:$0xff] %v154
          %v156 = vld [vmem:[%s82 + $0x120] sm:$0xff]
          %157 = vst [vmem:[%s83 + $0x120] sm:$0xff] %v156
          %v158 = vld [vmem:[%s82 + $0x128] sm:$0xff]
          %159 = vst [vmem:[%s83 + $0x128] sm:$0xff] %v158
          %v160 = vld [vmem:[%s82 + $0x130] sm:$0xff]
          %161 = vst [vmem:[%s83 + $0x130] sm:$0xff] %v160
          %v162 = vld [vmem:[%s82 + $0x138] sm:$0xff]
          %163 = vst [vmem:[%s83 + $0x138] sm:$0xff] %v162
          %v164 = vld [vmem:[%s82 + $0x140] sm:$0xff]
          %165 = vst [vmem:[%s83 + $0x140] sm:$0xff] %v164
          %v166 = vld [vmem:[%s82 + $0x148] sm:$0xff]
          %167 = vst [vmem:[%s83 + $0x148] sm:$0xff] %v166
          %v168 = vld [vmem:[%s82 + $0x150] sm:$0xff]
          %169 = vst [vmem:[%s83 + $0x150] sm:$0xff] %v168
          %v170 = vld [vmem:[%s82 + $0x158] sm:$0xff]
          %171 = vst [vmem:[%s83 + $0x158] sm:$0xff] %v170
          %v172 = vld [vmem:[%s82 + $0x160] sm:$0xff]
          %173 = vst [vmem:[%s83 + $0x160] sm:$0xff] %v172
          %v174 = vld [vmem:[%s82 + $0x168] sm:$0xff]
          %175 = vst [vmem:[%s83 + $0x168] sm:$0xff] %v174
          %v176 = vld [vmem:[%s82 + $0x170] sm:$0xff]
          %177 = vst [vmem:[%s83 + $0x170] sm:$0xff] %v176
          %v178 = vld [vmem:[%s82 + $0x178] sm:$0xff]
          %179 = vst [vmem:[%s83 + $0x178] sm:$0xff] %v178
          %v180 = vld [vmem:[%s82 + $0x180] sm:$0xff]
          %181 = vst [vmem:[%s83 + $0x180] sm:$0xff] %v180
          %v182 = vld [vmem:[%s82 + $0x188] sm:$0xff]
          %183 = vst [vmem:[%s83 + $0x188] sm:$0xff] %v182
          %v184 = vld [vmem:[%s82 + $0x190] sm:$0xff]
          %185 = vst [vmem:[%s83 + $0x190] sm:$0xff] %v184
          %v186 = vld [vmem:[%s82 + $0x198] sm:$0xff]
          %187 = vst [vmem:[%s83 + $0x198] sm:$0xff] %v186
          %v188 = vld [vmem:[%s82 + $0x1a0] sm:$0xff]
          %189 = vst [vmem:[%s83 + $0x1a0] sm:$0xff] %v188
          %v190 = vld [vmem:[%s82 + $0x1a8] sm:$0xff]
          %191 = vst [vmem:[%s83 + $0x1a8] sm:$0xff] %v190
          %v192 = vld [vmem:[%s82 + $0x1b0] sm:$0xff]
          %193 = vst [vmem:[%s83 + $0x1b0] sm:$0xff] %v192
          %v194 = vld [vmem:[%s82 + $0x1b8] sm:$0xff]
          %195 = vst [vmem:[%s83 + $0x1b8] sm:$0xff] %v194
        $region57: #{simple_cnn_forward.1} parent=51 // loop_footer
          %s81 = sadd.s32 1, %s77
        $region58: #{simple_cnn_forward.1} parent=51 // loop_footer_branch
          %76 = sbr.rel target = $region54
        $region59: #{simple_cnn_forward.1} parent=51 // loop_exit
          _
      $region52: #{simple_cnn_forward.1} parent=36 // pred_fallthru
        _
      %p196 = pneg %p72
      // Predicated region
      $region60: #{simple_cnn_forward.1} parent=36 // pred_check
        _
      $region61: #{simple_cnn_forward.1} parent=36 // pred_check_branch
        %198 = sbr.rel (%p72) target = $region63
      $region62: #{simple_cnn_forward.1} parent=36 // pred_region
        %s199 = sand.u32 448, 7
      $region63: #{simple_cnn_forward.1} parent=36 // pred_fallthru
        _
    $region37: #{simple_cnn_forward.1} parent=1 // pred_fallthru
      _
    // Predicated region
    $region38: #{simple_cnn_forward.1} parent=1 // pred_check
      %p56 = pneg %p52
    $region39: #{simple_cnn_forward.1} parent=1 // pred_check_branch
      %58 = sbr.rel (%p56) target = $region41
    $region40: #{simple_cnn_forward.1} parent=1 // pred_region
      %s59 = sshll.u32 1, 448
      %s60 = ssub.s32 %s59, 1
      loop: start=0, step=1, limit=1
      $region42: #{simple_cnn_forward.1} parent=40 // loop_pre_header
        _
      $region43: #{simple_cnn_forward.1} parent=40 // loop_header
        %s62 = sphi 0, %s66
        %p63 = scmp.ge.s32.totalorder %s62, 1
        %s67 = sphi %s3, %s3
        %s68 = sphi [#allocation2], [#allocation2]
      $region44: #{simple_cnn_forward.1} parent=40 // loop_header_branch
        %65 = sbr.rel (%p63) target = $region48
      $region45: #{simple_cnn_forward.1} parent=40 // loop_body
        %v69 = vld [vmem:[%s67] sm:%s60]
        %70 = vst [vmem:[%s68] sm:%s60] %v69
      $region46: #{simple_cnn_forward.1} parent=40 // loop_footer
        %s66 = sadd.s32 1, %s62
      $region47: #{simple_cnn_forward.1} parent=40 // loop_footer_branch
        %61 = sbr.rel target = $region43
      $region48: #{simple_cnn_forward.1} parent=40 // loop_exit
        _
    $region41: #{simple_cnn_forward.1} parent=1 // pred_fallthru
      _
    // Predicated region
    $region64: #{simple_cnn_forward.1} parent=1 // pred_check
      _
    $region65: #{simple_cnn_forward.1} parent=1 // pred_check_branch
      %202 = sbr.rel (0) target = $region67
    $region66: #{simple_cnn_forward.1} parent=1 // pred_region
      %203 = vsyncadd [#allocation3], 7168
    $region67: #{simple_cnn_forward.1} parent=1 // pred_fallthru
      _
    %s204 = scalar_lea.vmem %s3, 448
    %s205 = scalar_lea.vmem [#allocation2], 448
    %s206 = scalar_lea.sflag [#allocation3], 1
    %p208 = scmp.lt.u32.totalorder 448, 8
    %p209 = pneg %p208
    // Predicated region
    $region68: #{simple_cnn_forward.1} parent=1 // pred_check
      _
    $region69: #{simple_cnn_forward.1} parent=1 // pred_check_branch
      %211 = sbr.rel (%p208) target = $region71
    $region70: #{simple_cnn_forward.1} parent=1 // pred_region
      %s227 = sand.u32 448, 7
      %p228 = scmp.eq.s32.totalorder %s227, 0
      // Predicated region
      $region83: #{simple_cnn_forward.1} parent=70 // pred_check
        %p229 = pneg %p228
      $region84: #{simple_cnn_forward.1} parent=70 // pred_check_branch
        %231 = sbr.rel (%p229) target = $region86
      $region85: #{simple_cnn_forward.1} parent=70 // pred_region
        loop: start=0, step=1, limit=1
        $region87: #{simple_cnn_forward.1} parent=85 // loop_pre_header
          _
        $region88: #{simple_cnn_forward.1} parent=85 // loop_header
          %s233 = sphi 0, %s237
          %p234 = scmp.ge.s32.totalorder %s233, 1
          %s238 = sphi %s204, %s204
          %s239 = sphi %s205, %s205
        $region89: #{simple_cnn_forward.1} parent=85 // loop_header_branch
          %236 = sbr.rel (%p234) target = $region93
        $region90: #{simple_cnn_forward.1} parent=85 // loop_body
          %v240 = vld [vmem:[%s238] sm:$0xff]
          %241 = vst [vmem:[%s239] sm:$0xff] %v240
          %v242 = vld [vmem:[%s238 + $0x8] sm:$0xff]
          %243 = vst [vmem:[%s239 + $0x8] sm:$0xff] %v242
          %v244 = vld [vmem:[%s238 + $0x10] sm:$0xff]
          %245 = vst [vmem:[%s239 + $0x10] sm:$0xff] %v244
          %v246 = vld [vmem:[%s238 + $0x18] sm:$0xff]
          %247 = vst [vmem:[%s239 + $0x18] sm:$0xff] %v246
          %v248 = vld [vmem:[%s238 + $0x20] sm:$0xff]
          %249 = vst [vmem:[%s239 + $0x20] sm:$0xff] %v248
          %v250 = vld [vmem:[%s238 + $0x28] sm:$0xff]
          %251 = vst [vmem:[%s239 + $0x28] sm:$0xff] %v250
          %v252 = vld [vmem:[%s238 + $0x30] sm:$0xff]
          %253 = vst [vmem:[%s239 + $0x30] sm:$0xff] %v252
          %v254 = vld [vmem:[%s238 + $0x38] sm:$0xff]
          %255 = vst [vmem:[%s239 + $0x38] sm:$0xff] %v254
          %v256 = vld [vmem:[%s238 + $0x40] sm:$0xff]
          %257 = vst [vmem:[%s239 + $0x40] sm:$0xff] %v256
          %v258 = vld [vmem:[%s238 + $0x48] sm:$0xff]
          %259 = vst [vmem:[%s239 + $0x48] sm:$0xff] %v258
          %v260 = vld [vmem:[%s238 + $0x50] sm:$0xff]
          %261 = vst [vmem:[%s239 + $0x50] sm:$0xff] %v260
          %v262 = vld [vmem:[%s238 + $0x58] sm:$0xff]
          %263 = vst [vmem:[%s239 + $0x58] sm:$0xff] %v262
          %v264 = vld [vmem:[%s238 + $0x60] sm:$0xff]
          %265 = vst [vmem:[%s239 + $0x60] sm:$0xff] %v264
          %v266 = vld [vmem:[%s238 + $0x68] sm:$0xff]
          %267 = vst [vmem:[%s239 + $0x68] sm:$0xff] %v266
          %v268 = vld [vmem:[%s238 + $0x70] sm:$0xff]
          %269 = vst [vmem:[%s239 + $0x70] sm:$0xff] %v268
          %v270 = vld [vmem:[%s238 + $0x78] sm:$0xff]
          %271 = vst [vmem:[%s239 + $0x78] sm:$0xff] %v270
          %v272 = vld [vmem:[%s238 + $0x80] sm:$0xff]
          %273 = vst [vmem:[%s239 + $0x80] sm:$0xff] %v272
          %v274 = vld [vmem:[%s238 + $0x88] sm:$0xff]
          %275 = vst [vmem:[%s239 + $0x88] sm:$0xff] %v274
          %v276 = vld [vmem:[%s238 + $0x90] sm:$0xff]
          %277 = vst [vmem:[%s239 + $0x90] sm:$0xff] %v276
          %v278 = vld [vmem:[%s238 + $0x98] sm:$0xff]
          %279 = vst [vmem:[%s239 + $0x98] sm:$0xff] %v278
          %v280 = vld [vmem:[%s238 + $0xa0] sm:$0xff]
          %281 = vst [vmem:[%s239 + $0xa0] sm:$0xff] %v280
          %v282 = vld [vmem:[%s238 + $0xa8] sm:$0xff]
          %283 = vst [vmem:[%s239 + $0xa8] sm:$0xff] %v282
          %v284 = vld [vmem:[%s238 + $0xb0] sm:$0xff]
          %285 = vst [vmem:[%s239 + $0xb0] sm:$0xff] %v284
          %v286 = vld [vmem:[%s238 + $0xb8] sm:$0xff]
          %287 = vst [vmem:[%s239 + $0xb8] sm:$0xff] %v286
          %v288 = vld [vmem:[%s238 + $0xc0] sm:$0xff]
          %289 = vst [vmem:[%s239 + $0xc0] sm:$0xff] %v288
          %v290 = vld [vmem:[%s238 + $0xc8] sm:$0xff]
          %291 = vst [vmem:[%s239 + $0xc8] sm:$0xff] %v290
          %v292 = vld [vmem:[%s238 + $0xd0] sm:$0xff]
          %293 = vst [vmem:[%s239 + $0xd0] sm:$0xff] %v292
          %v294 = vld [vmem:[%s238 + $0xd8] sm:$0xff]
          %295 = vst [vmem:[%s239 + $0xd8] sm:$0xff] %v294
          %v296 = vld [vmem:[%s238 + $0xe0] sm:$0xff]
          %297 = vst [vmem:[%s239 + $0xe0] sm:$0xff] %v296
          %v298 = vld [vmem:[%s238 + $0xe8] sm:$0xff]
          %299 = vst [vmem:[%s239 + $0xe8] sm:$0xff] %v298
          %v300 = vld [vmem:[%s238 + $0xf0] sm:$0xff]
          %301 = vst [vmem:[%s239 + $0xf0] sm:$0xff] %v300
          %v302 = vld [vmem:[%s238 + $0xf8] sm:$0xff]
          %303 = vst [vmem:[%s239 + $0xf8] sm:$0xff] %v302
          %v304 = vld [vmem:[%s238 + $0x100] sm:$0xff]
          %305 = vst [vmem:[%s239 + $0x100] sm:$0xff] %v304
          %v306 = vld [vmem:[%s238 + $0x108] sm:$0xff]
          %307 = vst [vmem:[%s239 + $0x108] sm:$0xff] %v306
          %v308 = vld [vmem:[%s238 + $0x110] sm:$0xff]
          %309 = vst [vmem:[%s239 + $0x110] sm:$0xff] %v308
          %v310 = vld [vmem:[%s238 + $0x118] sm:$0xff]
          %311 = vst [vmem:[%s239 + $0x118] sm:$0xff] %v310
          %v312 = vld [vmem:[%s238 + $0x120] sm:$0xff]
          %313 = vst [vmem:[%s239 + $0x120] sm:$0xff] %v312
          %v314 = vld [vmem:[%s238 + $0x128] sm:$0xff]
          %315 = vst [vmem:[%s239 + $0x128] sm:$0xff] %v314
          %v316 = vld [vmem:[%s238 + $0x130] sm:$0xff]
          %317 = vst [vmem:[%s239 + $0x130] sm:$0xff] %v316
          %v318 = vld [vmem:[%s238 + $0x138] sm:$0xff]
          %319 = vst [vmem:[%s239 + $0x138] sm:$0xff] %v318
          %v320 = vld [vmem:[%s238 + $0x140] sm:$0xff]
          %321 = vst [vmem:[%s239 + $0x140] sm:$0xff] %v320
          %v322 = vld [vmem:[%s238 + $0x148] sm:$0xff]
          %323 = vst [vmem:[%s239 + $0x148] sm:$0xff] %v322
          %v324 = vld [vmem:[%s238 + $0x150] sm:$0xff]
          %325 = vst [vmem:[%s239 + $0x150] sm:$0xff] %v324
          %v326 = vld [vmem:[%s238 + $0x158] sm:$0xff]
          %327 = vst [vmem:[%s239 + $0x158] sm:$0xff] %v326
          %v328 = vld [vmem:[%s238 + $0x160] sm:$0xff]
          %329 = vst [vmem:[%s239 + $0x160] sm:$0xff] %v328
          %v330 = vld [vmem:[%s238 + $0x168] sm:$0xff]
          %331 = vst [vmem:[%s239 + $0x168] sm:$0xff] %v330
          %v332 = vld [vmem:[%s238 + $0x170] sm:$0xff]
          %333 = vst [vmem:[%s239 + $0x170] sm:$0xff] %v332
          %v334 = vld [vmem:[%s238 + $0x178] sm:$0xff]
          %335 = vst [vmem:[%s239 + $0x178] sm:$0xff] %v334
          %v336 = vld [vmem:[%s238 + $0x180] sm:$0xff]
          %337 = vst [vmem:[%s239 + $0x180] sm:$0xff] %v336
          %v338 = vld [vmem:[%s238 + $0x188] sm:$0xff]
          %339 = vst [vmem:[%s239 + $0x188] sm:$0xff] %v338
          %v340 = vld [vmem:[%s238 + $0x190] sm:$0xff]
          %341 = vst [vmem:[%s239 + $0x190] sm:$0xff] %v340
          %v342 = vld [vmem:[%s238 + $0x198] sm:$0xff]
          %343 = vst [vmem:[%s239 + $0x198] sm:$0xff] %v342
          %v344 = vld [vmem:[%s238 + $0x1a0] sm:$0xff]
          %345 = vst [vmem:[%s239 + $0x1a0] sm:$0xff] %v344
          %v346 = vld [vmem:[%s238 + $0x1a8] sm:$0xff]
          %347 = vst [vmem:[%s239 + $0x1a8] sm:$0xff] %v346
          %v348 = vld [vmem:[%s238 + $0x1b0] sm:$0xff]
          %349 = vst [vmem:[%s239 + $0x1b0] sm:$0xff] %v348
          %v350 = vld [vmem:[%s238 + $0x1b8] sm:$0xff]
          %351 = vst [vmem:[%s239 + $0x1b8] sm:$0xff] %v350
        $region91: #{simple_cnn_forward.1} parent=85 // loop_footer
          %s237 = sadd.s32 1, %s233
        $region92: #{simple_cnn_forward.1} parent=85 // loop_footer_branch
          %232 = sbr.rel target = $region88
        $region93: #{simple_cnn_forward.1} parent=85 // loop_exit
          _
      $region86: #{simple_cnn_forward.1} parent=70 // pred_fallthru
        _
      %p352 = pneg %p228
      // Predicated region
      $region94: #{simple_cnn_forward.1} parent=70 // pred_check
        _
      $region95: #{simple_cnn_forward.1} parent=70 // pred_check_branch
        %354 = sbr.rel (%p228) target = $region97
      $region96: #{simple_cnn_forward.1} parent=70 // pred_region
        %s355 = sand.u32 448, 7
      $region97: #{simple_cnn_forward.1} parent=70 // pred_fallthru
        _
    $region71: #{simple_cnn_forward.1} parent=1 // pred_fallthru
      _
    // Predicated region
    $region72: #{simple_cnn_forward.1} parent=1 // pred_check
      %p212 = pneg %p208
    $region73: #{simple_cnn_forward.1} parent=1 // pred_check_branch
      %214 = sbr.rel (%p212) target = $region75
    $region74: #{simple_cnn_forward.1} parent=1 // pred_region
      %s215 = sshll.u32 1, 448
      %s216 = ssub.s32 %s215, 1
      loop: start=0, step=1, limit=1
      $region76: #{simple_cnn_forward.1} parent=74 // loop_pre_header
        _
      $region77: #{simple_cnn_forward.1} parent=74 // loop_header
        %s218 = sphi 0, %s222
        %p219 = scmp.ge.s32.totalorder %s218, 1
        %s223 = sphi %s204, %s204
        %s224 = sphi %s205, %s205
      $region78: #{simple_cnn_forward.1} parent=74 // loop_header_branch
        %221 = sbr.rel (%p219) target = $region82
      $region79: #{simple_cnn_forward.1} parent=74 // loop_body
        %v225 = vld [vmem:[%s223] sm:%s216]
        %226 = vst [vmem:[%s224] sm:%s216] %v225
      $region80: #{simple_cnn_forward.1} parent=74 // loop_footer
        %s222 = sadd.s32 1, %s218
      $region81: #{simple_cnn_forward.1} parent=74 // loop_footer_branch
        %217 = sbr.rel target = $region77
      $region82: #{simple_cnn_forward.1} parent=74 // loop_exit
        _
    $region75: #{simple_cnn_forward.1} parent=1 // pred_fallthru
      _
    // Predicated region
    $region98: #{simple_cnn_forward.1} parent=1 // pred_check
      _
    $region99: #{simple_cnn_forward.1} parent=1 // pred_check_branch
      %358 = sbr.rel (0) target = $region101
    $region100: #{simple_cnn_forward.1} parent=1 // pred_region
      %359 = vsyncadd %s206, 7168
    $region101: #{simple_cnn_forward.1} parent=1 // pred_fallthru
      _
    %s360 = scalar_lea.vmem %s3, 896
    %s361 = scalar_lea.vmem [#allocation2], 896
    %s362 = scalar_lea.sflag [#allocation3], 2
    %p364 = scmp.lt.u32.totalorder 448, 8
    %p365 = pneg %p364
    // Predicated region
    $region102: #{simple_cnn_forward.1} parent=1 // pred_check
      _
    $region103: #{simple_cnn_forward.1} parent=1 // pred_check_branch
      %367 = sbr.rel (%p364) target = $region105
    $region104: #{simple_cnn_forward.1} parent=1 // pred_region
      %s383 = sand.u32 448, 7
      %p384 = scmp.eq.s32.totalorder %s383, 0
      // Predicated region
      $region117: #{simple_cnn_forward.1} parent=104 // pred_check
        %p385 = pneg %p384
      $region118: #{simple_cnn_forward.1} parent=104 // pred_check_branch
        %387 = sbr.rel (%p385) target = $region120
      $region119: #{simple_cnn_forward.1} parent=104 // pred_region
        loop: start=0, step=1, limit=1
        $region121: #{simple_cnn_forward.1} parent=119 // loop_pre_header
          _
        $region122: #{simple_cnn_forward.1} parent=119 // loop_header
          %s389 = sphi 0, %s393
          %p390 = scmp.ge.s32.totalorder %s389, 1
          %s394 = sphi %s360, %s360
          %s395 = sphi %s361, %s361
        $region123: #{simple_cnn_forward.1} parent=119 // loop_header_branch
          %392 = sbr.rel (%p390) target = $region127
        $region124: #{simple_cnn_forward.1} parent=119 // loop_body
          %v396 = vld [vmem:[%s394] sm:$0xff]
          %397 = vst [vmem:[%s395] sm:$0xff] %v396
          %v398 = vld [vmem:[%s394 + $0x8] sm:$0xff]
          %399 = vst [vmem:[%s395 + $0x8] sm:$0xff] %v398
          %v400 = vld [vmem:[%s394 + $0x10] sm:$0xff]
          %401 = vst [vmem:[%s395 + $0x10] sm:$0xff] %v400
          %v402 = vld [vmem:[%s394 + $0x18] sm:$0xff]
          %403 = vst [vmem:[%s395 + $0x18] sm:$0xff] %v402
          %v404 = vld [vmem:[%s394 + $0x20] sm:$0xff]
          %405 = vst [vmem:[%s395 + $0x20] sm:$0xff] %v404
          %v406 = vld [vmem:[%s394 + $0x28] sm:$0xff]
          %407 = vst [vmem:[%s395 + $0x28] sm:$0xff] %v406
          %v408 = vld [vmem:[%s394 + $0x30] sm:$0xff]
          %409 = vst [vmem:[%s395 + $0x30] sm:$0xff] %v408
          %v410 = vld [vmem:[%s394 + $0x38] sm:$0xff]
          %411 = vst [vmem:[%s395 + $0x38] sm:$0xff] %v410
          %v412 = vld [vmem:[%s394 + $0x40] sm:$0xff]
          %413 = vst [vmem:[%s395 + $0x40] sm:$0xff] %v412
          %v414 = vld [vmem:[%s394 + $0x48] sm:$0xff]
          %415 = vst [vmem:[%s395 + $0x48] sm:$0xff] %v414
          %v416 = vld [vmem:[%s394 + $0x50] sm:$0xff]
          %417 = vst [vmem:[%s395 + $0x50] sm:$0xff] %v416
          %v418 = vld [vmem:[%s394 + $0x58] sm:$0xff]
          %419 = vst [vmem:[%s395 + $0x58] sm:$0xff] %v418
          %v420 = vld [vmem:[%s394 + $0x60] sm:$0xff]
          %421 = vst [vmem:[%s395 + $0x60] sm:$0xff] %v420
          %v422 = vld [vmem:[%s394 + $0x68] sm:$0xff]
          %423 = vst [vmem:[%s395 + $0x68] sm:$0xff] %v422
          %v424 = vld [vmem:[%s394 + $0x70] sm:$0xff]
          %425 = vst [vmem:[%s395 + $0x70] sm:$0xff] %v424
          %v426 = vld [vmem:[%s394 + $0x78] sm:$0xff]
          %427 = vst [vmem:[%s395 + $0x78] sm:$0xff] %v426
          %v428 = vld [vmem:[%s394 + $0x80] sm:$0xff]
          %429 = vst [vmem:[%s395 + $0x80] sm:$0xff] %v428
          %v430 = vld [vmem:[%s394 + $0x88] sm:$0xff]
          %431 = vst [vmem:[%s395 + $0x88] sm:$0xff] %v430
          %v432 = vld [vmem:[%s394 + $0x90] sm:$0xff]
          %433 = vst [vmem:[%s395 + $0x90] sm:$0xff] %v432
          %v434 = vld [vmem:[%s394 + $0x98] sm:$0xff]
          %435 = vst [vmem:[%s395 + $0x98] sm:$0xff] %v434
          %v436 = vld [vmem:[%s394 + $0xa0] sm:$0xff]
          %437 = vst [vmem:[%s395 + $0xa0] sm:$0xff] %v436
          %v438 = vld [vmem:[%s394 + $0xa8] sm:$0xff]
          %439 = vst [vmem:[%s395 + $0xa8] sm:$0xff] %v438
          %v440 = vld [vmem:[%s394 + $0xb0] sm:$0xff]
          %441 = vst [vmem:[%s395 + $0xb0] sm:$0xff] %v440
          %v442 = vld [vmem:[%s394 + $0xb8] sm:$0xff]
          %443 = vst [vmem:[%s395 + $0xb8] sm:$0xff] %v442
          %v444 = vld [vmem:[%s394 + $0xc0] sm:$0xff]
          %445 = vst [vmem:[%s395 + $0xc0] sm:$0xff] %v444
          %v446 = vld [vmem:[%s394 + $0xc8] sm:$0xff]
          %447 = vst [vmem:[%s395 + $0xc8] sm:$0xff] %v446
          %v448 = vld [vmem:[%s394 + $0xd0] sm:$0xff]
          %449 = vst [vmem:[%s395 + $0xd0] sm:$0xff] %v448
          %v450 = vld [vmem:[%s394 + $0xd8] sm:$0xff]
          %451 = vst [vmem:[%s395 + $0xd8] sm:$0xff] %v450
          %v452 = vld [vmem:[%s394 + $0xe0] sm:$0xff]
          %453 = vst [vmem:[%s395 + $0xe0] sm:$0xff] %v452
          %v454 = vld [vmem:[%s394 + $0xe8] sm:$0xff]
          %455 = vst [vmem:[%s395 + $0xe8] sm:$0xff] %v454
          %v456 = vld [vmem:[%s394 + $0xf0] sm:$0xff]
          %457 = vst [vmem:[%s395 + $0xf0] sm:$0xff] %v456
          %v458 = vld [vmem:[%s394 + $0xf8] sm:$0xff]
          %459 = vst [vmem:[%s395 + $0xf8] sm:$0xff] %v458
          %v460 = vld [vmem:[%s394 + $0x100] sm:$0xff]
          %461 = vst [vmem:[%s395 + $0x100] sm:$0xff] %v460
          %v462 = vld [vmem:[%s394 + $0x108] sm:$0xff]
          %463 = vst [vmem:[%s395 + $0x108] sm:$0xff] %v462
          %v464 = vld [vmem:[%s394 + $0x110] sm:$0xff]
          %465 = vst [vmem:[%s395 + $0x110] sm:$0xff] %v464
          %v466 = vld [vmem:[%s394 + $0x118] sm:$0xff]
          %467 = vst [vmem:[%s395 + $0x118] sm:$0xff] %v466
          %v468 = vld [vmem:[%s394 + $0x120] sm:$0xff]
          %469 = vst [vmem:[%s395 + $0x120] sm:$0xff] %v468
          %v470 = vld [vmem:[%s394 + $0x128] sm:$0xff]
          %471 = vst [vmem:[%s395 + $0x128] sm:$0xff] %v470
          %v472 = vld [vmem:[%s394 + $0x130] sm:$0xff]
          %473 = vst [vmem:[%s395 + $0x130] sm:$0xff] %v472
          %v474 = vld [vmem:[%s394 + $0x138] sm:$0xff]
          %475 = vst [vmem:[%s395 + $0x138] sm:$0xff] %v474
          %v476 = vld [vmem:[%s394 + $0x140] sm:$0xff]
          %477 = vst [vmem:[%s395 + $0x140] sm:$0xff] %v476
          %v478 = vld [vmem:[%s394 + $0x148] sm:$0xff]
          %479 = vst [vmem:[%s395 + $0x148] sm:$0xff] %v478
          %v480 = vld [vmem:[%s394 + $0x150] sm:$0xff]
          %481 = vst [vmem:[%s395 + $0x150] sm:$0xff] %v480
          %v482 = vld [vmem:[%s394 + $0x158] sm:$0xff]
          %483 = vst [vmem:[%s395 + $0x158] sm:$0xff] %v482
          %v484 = vld [vmem:[%s394 + $0x160] sm:$0xff]
          %485 = vst [vmem:[%s395 + $0x160] sm:$0xff] %v484
          %v486 = vld [vmem:[%s394 + $0x168] sm:$0xff]
          %487 = vst [vmem:[%s395 + $0x168] sm:$0xff] %v486
          %v488 = vld [vmem:[%s394 + $0x170] sm:$0xff]
          %489 = vst [vmem:[%s395 + $0x170] sm:$0xff] %v488
          %v490 = vld [vmem:[%s394 + $0x178] sm:$0xff]
          %491 = vst [vmem:[%s395 + $0x178] sm:$0xff] %v490
          %v492 = vld [vmem:[%s394 + $0x180] sm:$0xff]
          %493 = vst [vmem:[%s395 + $0x180] sm:$0xff] %v492
          %v494 = vld [vmem:[%s394 + $0x188] sm:$0xff]
          %495 = vst [vmem:[%s395 + $0x188] sm:$0xff] %v494
          %v496 = vld [vmem:[%s394 + $0x190] sm:$0xff]
          %497 = vst [vmem:[%s395 + $0x190] sm:$0xff] %v496
          %v498 = vld [vmem:[%s394 + $0x198] sm:$0xff]
          %499 = vst [vmem:[%s395 + $0x198] sm:$0xff] %v498
          %v500 = vld [vmem:[%s394 + $0x1a0] sm:$0xff]
          %501 = vst [vmem:[%s395 + $0x1a0] sm:$0xff] %v500
          %v502 = vld [vmem:[%s394 + $0x1a8] sm:$0xff]
          %503 = vst [vmem:[%s395 + $0x1a8] sm:$0xff] %v502
          %v504 = vld [vmem:[%s394 + $0x1b0] sm:$0xff]
          %505 = vst [vmem:[%s395 + $0x1b0] sm:$0xff] %v504
          %v506 = vld [vmem:[%s394 + $0x1b8] sm:$0xff]
          %507 = vst [vmem:[%s395 + $0x1b8] sm:$0xff] %v506
        $region125: #{simple_cnn_forward.1} parent=119 // loop_footer
          %s393 = sadd.s32 1, %s389
        $region126: #{simple_cnn_forward.1} parent=119 // loop_footer_branch
          %388 = sbr.rel target = $region122
        $region127: #{simple_cnn_forward.1} parent=119 // loop_exit
          _
      $region120: #{simple_cnn_forward.1} parent=104 // pred_fallthru
        _
      %p508 = pneg %p384
      // Predicated region
      $region128: #{simple_cnn_forward.1} parent=104 // pred_check
        _
      $region129: #{simple_cnn_forward.1} parent=104 // pred_check_branch
        %510 = sbr.rel (%p384) target = $region131
      $region130: #{simple_cnn_forward.1} parent=104 // pred_region
        %s511 = sand.u32 448, 7
      $region131: #{simple_cnn_forward.1} parent=104 // pred_fallthru
        _
    $region105: #{simple_cnn_forward.1} parent=1 // pred_fallthru
      _
    // Predicated region
    $region106: #{simple_cnn_forward.1} parent=1 // pred_check
      %p368 = pneg %p364
    $region107: #{simple_cnn_forward.1} parent=1 // pred_check_branch
      %370 = sbr.rel (%p368) target = $region109
    $region108: #{simple_cnn_forward.1} parent=1 // pred_region
      %s371 = sshll.u32 1, 448
      %s372 = ssub.s32 %s371, 1
      loop: start=0, step=1, limit=1
      $region110: #{simple_cnn_forward.1} parent=108 // loop_pre_header
        _
      $region111: #{simple_cnn_forward.1} parent=108 // loop_header
        %s374 = sphi 0, %s378
        %p375 = scmp.ge.s32.totalorder %s374, 1
        %s379 = sphi %s360, %s360
        %s380 = sphi %s361, %s361
      $region112: #{simple_cnn_forward.1} parent=108 // loop_header_branch
        %377 = sbr.rel (%p375) target = $region116
      $region113: #{simple_cnn_forward.1} parent=108 // loop_body
        %v381 = vld [vmem:[%s379] sm:%s372]
        %382 = vst [vmem:[%s380] sm:%s372] %v381
      $region114: #{simple_cnn_forward.1} parent=108 // loop_footer
        %s378 = sadd.s32 1, %s374
      $region115: #{simple_cnn_forward.1} parent=108 // loop_footer_branch
        %373 = sbr.rel target = $region111
      $region116: #{simple_cnn_forward.1} parent=108 // loop_exit
        _
    $region109: #{simple_cnn_forward.1} parent=1 // pred_fallthru
      _
    // Predicated region
    $region132: #{simple_cnn_forward.1} parent=1 // pred_check
      _
    $region133: #{simple_cnn_forward.1} parent=1 // pred_check_branch
      %514 = sbr.rel (0) target = $region135
    $region134: #{simple_cnn_forward.1} parent=1 // pred_region
      %515 = vsyncadd %s362, 7168
    $region135: #{simple_cnn_forward.1} parent=1 // pred_fallthru
      _
    %s516 = scalar_lea.vmem %s3, 1344
    %s517 = scalar_lea.vmem [#allocation2], 1344
    %s518 = scalar_lea.sflag [#allocation3], 3
    %p520 = scmp.lt.u32.totalorder 448, 8
    %p521 = pneg %p520
    // Predicated region
    $region136: #{simple_cnn_forward.1} parent=1 // pred_check
      _
    $region137: #{simple_cnn_forward.1} parent=1 // pred_check_branch
      %523 = sbr.rel (%p520) target = $region139
    $region138: #{simple_cnn_forward.1} parent=1 // pred_region
      %s539 = sand.u32 448, 7
      %p540 = scmp.eq.s32.totalorder %s539, 0
      // Predicated region
      $region151: #{simple_cnn_forward.1} parent=138 // pred_check
        %p541 = pneg %p540
      $region152: #{simple_cnn_forward.1} parent=138 // pred_check_branch
        %543 = sbr.rel (%p541) target = $region154
      $region153: #{simple_cnn_forward.1} parent=138 // pred_region
        loop: start=0, step=1, limit=1
        $region155: #{simple_cnn_forward.1} parent=153 // loop_pre_header
          _
        $region156: #{simple_cnn_forward.1} parent=153 // loop_header
          %s545 = sphi 0, %s549
          %p546 = scmp.ge.s32.totalorder %s545, 1
          %s550 = sphi %s516, %s516
          %s551 = sphi %s517, %s517
        $region157: #{simple_cnn_forward.1} parent=153 // loop_header_branch
          %548 = sbr.rel (%p546) target = $region161
        $region158: #{simple_cnn_forward.1} parent=153 // loop_body
          %v552 = vld [vmem:[%s550] sm:$0xff]
          %553 = vst [vmem:[%s551] sm:$0xff] %v552
          %v554 = vld [vmem:[%s550 + $0x8] sm:$0xff]
          %555 = vst [vmem:[%s551 + $0x8] sm:$0xff] %v554
          %v556 = vld [vmem:[%s550 + $0x10] sm:$0xff]
          %557 = vst [vmem:[%s551 + $0x10] sm:$0xff] %v556
          %v558 = vld [vmem:[%s550 + $0x18] sm:$0xff]
          %559 = vst [vmem:[%s551 + $0x18] sm:$0xff] %v558
          %v560 = vld [vmem:[%s550 + $0x20] sm:$0xff]
          %561 = vst [vmem:[%s551 + $0x20] sm:$0xff] %v560
          %v562 = vld [vmem:[%s550 + $0x28] sm:$0xff]
          %563 = vst [vmem:[%s551 + $0x28] sm:$0xff] %v562
          %v564 = vld [vmem:[%s550 + $0x30] sm:$0xff]
          %565 = vst [vmem:[%s551 + $0x30] sm:$0xff] %v564
          %v566 = vld [vmem:[%s550 + $0x38] sm:$0xff]
          %567 = vst [vmem:[%s551 + $0x38] sm:$0xff] %v566
          %v568 = vld [vmem:[%s550 + $0x40] sm:$0xff]
          %569 = vst [vmem:[%s551 + $0x40] sm:$0xff] %v568
          %v570 = vld [vmem:[%s550 + $0x48] sm:$0xff]
          %571 = vst [vmem:[%s551 + $0x48] sm:$0xff] %v570
          %v572 = vld [vmem:[%s550 + $0x50] sm:$0xff]
          %573 = vst [vmem:[%s551 + $0x50] sm:$0xff] %v572
          %v574 = vld [vmem:[%s550 + $0x58] sm:$0xff]
          %575 = vst [vmem:[%s551 + $0x58] sm:$0xff] %v574
          %v576 = vld [vmem:[%s550 + $0x60] sm:$0xff]
          %577 = vst [vmem:[%s551 + $0x60] sm:$0xff] %v576
          %v578 = vld [vmem:[%s550 + $0x68] sm:$0xff]
          %579 = vst [vmem:[%s551 + $0x68] sm:$0xff] %v578
          %v580 = vld [vmem:[%s550 + $0x70] sm:$0xff]
          %581 = vst [vmem:[%s551 + $0x70] sm:$0xff] %v580
          %v582 = vld [vmem:[%s550 + $0x78] sm:$0xff]
          %583 = vst [vmem:[%s551 + $0x78] sm:$0xff] %v582
          %v584 = vld [vmem:[%s550 + $0x80] sm:$0xff]
          %585 = vst [vmem:[%s551 + $0x80] sm:$0xff] %v584
          %v586 = vld [vmem:[%s550 + $0x88] sm:$0xff]
          %587 = vst [vmem:[%s551 + $0x88] sm:$0xff] %v586
          %v588 = vld [vmem:[%s550 + $0x90] sm:$0xff]
          %589 = vst [vmem:[%s551 + $0x90] sm:$0xff] %v588
          %v590 = vld [vmem:[%s550 + $0x98] sm:$0xff]
          %591 = vst [vmem:[%s551 + $0x98] sm:$0xff] %v590
          %v592 = vld [vmem:[%s550 + $0xa0] sm:$0xff]
          %593 = vst [vmem:[%s551 + $0xa0] sm:$0xff] %v592
          %v594 = vld [vmem:[%s550 + $0xa8] sm:$0xff]
          %595 = vst [vmem:[%s551 + $0xa8] sm:$0xff] %v594
          %v596 = vld [vmem:[%s550 + $0xb0] sm:$0xff]
          %597 = vst [vmem:[%s551 + $0xb0] sm:$0xff] %v596
          %v598 = vld [vmem:[%s550 + $0xb8] sm:$0xff]
          %599 = vst [vmem:[%s551 + $0xb8] sm:$0xff] %v598
          %v600 = vld [vmem:[%s550 + $0xc0] sm:$0xff]
          %601 = vst [vmem:[%s551 + $0xc0] sm:$0xff] %v600
          %v602 = vld [vmem:[%s550 + $0xc8] sm:$0xff]
          %603 = vst [vmem:[%s551 + $0xc8] sm:$0xff] %v602
          %v604 = vld [vmem:[%s550 + $0xd0] sm:$0xff]
          %605 = vst [vmem:[%s551 + $0xd0] sm:$0xff] %v604
          %v606 = vld [vmem:[%s550 + $0xd8] sm:$0xff]
          %607 = vst [vmem:[%s551 + $0xd8] sm:$0xff] %v606
          %v608 = vld [vmem:[%s550 + $0xe0] sm:$0xff]
          %609 = vst [vmem:[%s551 + $0xe0] sm:$0xff] %v608
          %v610 = vld [vmem:[%s550 + $0xe8] sm:$0xff]
          %611 = vst [vmem:[%s551 + $0xe8] sm:$0xff] %v610
          %v612 = vld [vmem:[%s550 + $0xf0] sm:$0xff]
          %613 = vst [vmem:[%s551 + $0xf0] sm:$0xff] %v612
          %v614 = vld [vmem:[%s550 + $0xf8] sm:$0xff]
          %615 = vst [vmem:[%s551 + $0xf8] sm:$0xff] %v614
          %v616 = vld [vmem:[%s550 + $0x100] sm:$0xff]
          %617 = vst [vmem:[%s551 + $0x100] sm:$0xff] %v616
          %v618 = vld [vmem:[%s550 + $0x108] sm:$0xff]
          %619 = vst [vmem:[%s551 + $0x108] sm:$0xff] %v618
          %v620 = vld [vmem:[%s550 + $0x110] sm:$0xff]
          %621 = vst [vmem:[%s551 + $0x110] sm:$0xff] %v620
          %v622 = vld [vmem:[%s550 + $0x118] sm:$0xff]
          %623 = vst [vmem:[%s551 + $0x118] sm:$0xff] %v622
          %v624 = vld [vmem:[%s550 + $0x120] sm:$0xff]
          %625 = vst [vmem:[%s551 + $0x120] sm:$0xff] %v624
          %v626 = vld [vmem:[%s550 + $0x128] sm:$0xff]
          %627 = vst [vmem:[%s551 + $0x128] sm:$0xff] %v626
          %v628 = vld [vmem:[%s550 + $0x130] sm:$0xff]
          %629 = vst [vmem:[%s551 + $0x130] sm:$0xff] %v628
          %v630 = vld [vmem:[%s550 + $0x138] sm:$0xff]
          %631 = vst [vmem:[%s551 + $0x138] sm:$0xff] %v630
          %v632 = vld [vmem:[%s550 + $0x140] sm:$0xff]
          %633 = vst [vmem:[%s551 + $0x140] sm:$0xff] %v632
          %v634 = vld [vmem:[%s550 + $0x148] sm:$0xff]
          %635 = vst [vmem:[%s551 + $0x148] sm:$0xff] %v634
          %v636 = vld [vmem:[%s550 + $0x150] sm:$0xff]
          %637 = vst [vmem:[%s551 + $0x150] sm:$0xff] %v636
          %v638 = vld [vmem:[%s550 + $0x158] sm:$0xff]
          %639 = vst [vmem:[%s551 + $0x158] sm:$0xff] %v638
          %v640 = vld [vmem:[%s550 + $0x160] sm:$0xff]
          %641 = vst [vmem:[%s551 + $0x160] sm:$0xff] %v640
          %v642 = vld [vmem:[%s550 + $0x168] sm:$0xff]
          %643 = vst [vmem:[%s551 + $0x168] sm:$0xff] %v642
          %v644 = vld [vmem:[%s550 + $0x170] sm:$0xff]
          %645 = vst [vmem:[%s551 + $0x170] sm:$0xff] %v644
          %v646 = vld [vmem:[%s550 + $0x178] sm:$0xff]
          %647 = vst [vmem:[%s551 + $0x178] sm:$0xff] %v646
          %v648 = vld [vmem:[%s550 + $0x180] sm:$0xff]
          %649 = vst [vmem:[%s551 + $0x180] sm:$0xff] %v648
          %v650 = vld [vmem:[%s550 + $0x188] sm:$0xff]
          %651 = vst [vmem:[%s551 + $0x188] sm:$0xff] %v650
          %v652 = vld [vmem:[%s550 + $0x190] sm:$0xff]
          %653 = vst [vmem:[%s551 + $0x190] sm:$0xff] %v652
          %v654 = vld [vmem:[%s550 + $0x198] sm:$0xff]
          %655 = vst [vmem:[%s551 + $0x198] sm:$0xff] %v654
          %v656 = vld [vmem:[%s550 + $0x1a0] sm:$0xff]
          %657 = vst [vmem:[%s551 + $0x1a0] sm:$0xff] %v656
          %v658 = vld [vmem:[%s550 + $0x1a8] sm:$0xff]
          %659 = vst [vmem:[%s551 + $0x1a8] sm:$0xff] %v658
          %v660 = vld [vmem:[%s550 + $0x1b0] sm:$0xff]
          %661 = vst [vmem:[%s551 + $0x1b0] sm:$0xff] %v660
          %v662 = vld [vmem:[%s550 + $0x1b8] sm:$0xff]
          %663 = vst [vmem:[%s551 + $0x1b8] sm:$0xff] %v662
        $region159: #{simple_cnn_forward.1} parent=153 // loop_footer
          %s549 = sadd.s32 1, %s545
        $region160: #{simple_cnn_forward.1} parent=153 // loop_footer_branch
          %544 = sbr.rel target = $region156
        $region161: #{simple_cnn_forward.1} parent=153 // loop_exit
          _
      $region154: #{simple_cnn_forward.1} parent=138 // pred_fallthru
        _
      %p664 = pneg %p540
      // Predicated region
      $region162: #{simple_cnn_forward.1} parent=138 // pred_check
        _
      $region163: #{simple_cnn_forward.1} parent=138 // pred_check_branch
        %666 = sbr.rel (%p540) target = $region165
      $region164: #{simple_cnn_forward.1} parent=138 // pred_region
        %s667 = sand.u32 448, 7
      $region165: #{simple_cnn_forward.1} parent=138 // pred_fallthru
        _
    $region139: #{simple_cnn_forward.1} parent=1 // pred_fallthru
      _
    // Predicated region
    $region140: #{simple_cnn_forward.1} parent=1 // pred_check
      %p524 = pneg %p520
    $region141: #{simple_cnn_forward.1} parent=1 // pred_check_branch
      %526 = sbr.rel (%p524) target = $region143
    $region142: #{simple_cnn_forward.1} parent=1 // pred_region
      %s527 = sshll.u32 1, 448
      %s528 = ssub.s32 %s527, 1
      loop: start=0, step=1, limit=1
      $region144: #{simple_cnn_forward.1} parent=142 // loop_pre_header
        _
      $region145: #{simple_cnn_forward.1} parent=142 // loop_header
        %s530 = sphi 0, %s534
        %p531 = scmp.ge.s32.totalorder %s530, 1
        %s535 = sphi %s516, %s516
        %s536 = sphi %s517, %s517
      $region146: #{simple_cnn_forward.1} parent=142 // loop_header_branch
        %533 = sbr.rel (%p531) target = $region150
      $region147: #{simple_cnn_forward.1} parent=142 // loop_body
        %v537 = vld [vmem:[%s535] sm:%s528]
        %538 = vst [vmem:[%s536] sm:%s528] %v537
      $region148: #{simple_cnn_forward.1} parent=142 // loop_footer
        %s534 = sadd.s32 1, %s530
      $region149: #{simple_cnn_forward.1} parent=142 // loop_footer_branch
        %529 = sbr.rel target = $region145
      $region150: #{simple_cnn_forward.1} parent=142 // loop_exit
        _
    $region143: #{simple_cnn_forward.1} parent=1 // pred_fallthru
      _
    // Predicated region
    $region166: #{simple_cnn_forward.1} parent=1 // pred_check
      _
    $region167: #{simple_cnn_forward.1} parent=1 // pred_check_branch
      %670 = sbr.rel (0) target = $region169
    $region168: #{simple_cnn_forward.1} parent=1 // pred_region
      %671 = vsyncadd %s518, 7168
    $region169: #{simple_cnn_forward.1} parent=1 // pred_fallthru
      _
    %s672 = scalar_lea.vmem %s3, 1792
    %s673 = scalar_lea.vmem [#allocation2], 1792
    %s674 = scalar_lea.sflag [#allocation3], 4
    %p676 = scmp.lt.u32.totalorder 448, 8
    %p677 = pneg %p676
    // Predicated region
    $region170: #{simple_cnn_forward.1} parent=1 // pred_check
      _
    $region171: #{simple_cnn_forward.1} parent=1 // pred_check_branch
      %679 = sbr.rel (%p676) target = $region173
    $region172: #{simple_cnn_forward.1} parent=1 // pred_region
      %s695 = sand.u32 448, 7
      %p696 = scmp.eq.s32.totalorder %s695, 0
      // Predicated region
      $region185: #{simple_cnn_forward.1} parent=172 // pred_check
        %p697 = pneg %p696
      $region186: #{simple_cnn_forward.1} parent=172 // pred_check_branch
        %699 = sbr.rel (%p697) target = $region188
      $region187: #{simple_cnn_forward.1} parent=172 // pred_region
        loop: start=0, step=1, limit=1
        $region189: #{simple_cnn_forward.1} parent=187 // loop_pre_header
          _
        $region190: #{simple_cnn_forward.1} parent=187 // loop_header
          %s701 = sphi 0, %s705
          %p702 = scmp.ge.s32.totalorder %s701, 1
          %s706 = sphi %s672, %s672
          %s707 = sphi %s673, %s673
        $region191: #{simple_cnn_forward.1} parent=187 // loop_header_branch
          %704 = sbr.rel (%p702) target = $region195
        $region192: #{simple_cnn_forward.1} parent=187 // loop_body
          %v708 = vld [vmem:[%s706] sm:$0xff]
          %709 = vst [vmem:[%s707] sm:$0xff] %v708
          %v710 = vld [vmem:[%s706 + $0x8] sm:$0xff]
          %711 = vst [vmem:[%s707 + $0x8] sm:$0xff] %v710
          %v712 = vld [vmem:[%s706 + $0x10] sm:$0xff]
          %713 = vst [vmem:[%s707 + $0x10] sm:$0xff] %v712
          %v714 = vld [vmem:[%s706 + $0x18] sm:$0xff]
          %715 = vst [vmem:[%s707 + $0x18] sm:$0xff] %v714
          %v716 = vld [vmem:[%s706 + $0x20] sm:$0xff]
          %717 = vst [vmem:[%s707 + $0x20] sm:$0xff] %v716
          %v718 = vld [vmem:[%s706 + $0x28] sm:$0xff]
          %719 = vst [vmem:[%s707 + $0x28] sm:$0xff] %v718
          %v720 = vld [vmem:[%s706 + $0x30] sm:$0xff]
          %721 = vst [vmem:[%s707 + $0x30] sm:$0xff] %v720
          %v722 = vld [vmem:[%s706 + $0x38] sm:$0xff]
          %723 = vst [vmem:[%s707 + $0x38] sm:$0xff] %v722
          %v724 = vld [vmem:[%s706 + $0x40] sm:$0xff]
          %725 = vst [vmem:[%s707 + $0x40] sm:$0xff] %v724
          %v726 = vld [vmem:[%s706 + $0x48] sm:$0xff]
          %727 = vst [vmem:[%s707 + $0x48] sm:$0xff] %v726
          %v728 = vld [vmem:[%s706 + $0x50] sm:$0xff]
          %729 = vst [vmem:[%s707 + $0x50] sm:$0xff] %v728
          %v730 = vld [vmem:[%s706 + $0x58] sm:$0xff]
          %731 = vst [vmem:[%s707 + $0x58] sm:$0xff] %v730
          %v732 = vld [vmem:[%s706 + $0x60] sm:$0xff]
          %733 = vst [vmem:[%s707 + $0x60] sm:$0xff] %v732
          %v734 = vld [vmem:[%s706 + $0x68] sm:$0xff]
          %735 = vst [vmem:[%s707 + $0x68] sm:$0xff] %v734
          %v736 = vld [vmem:[%s706 + $0x70] sm:$0xff]
          %737 = vst [vmem:[%s707 + $0x70] sm:$0xff] %v736
          %v738 = vld [vmem:[%s706 + $0x78] sm:$0xff]
          %739 = vst [vmem:[%s707 + $0x78] sm:$0xff] %v738
          %v740 = vld [vmem:[%s706 + $0x80] sm:$0xff]
          %741 = vst [vmem:[%s707 + $0x80] sm:$0xff] %v740
          %v742 = vld [vmem:[%s706 + $0x88] sm:$0xff]
          %743 = vst [vmem:[%s707 + $0x88] sm:$0xff] %v742
          %v744 = vld [vmem:[%s706 + $0x90] sm:$0xff]
          %745 = vst [vmem:[%s707 + $0x90] sm:$0xff] %v744
          %v746 = vld [vmem:[%s706 + $0x98] sm:$0xff]
          %747 = vst [vmem:[%s707 + $0x98] sm:$0xff] %v746
          %v748 = vld [vmem:[%s706 + $0xa0] sm:$0xff]
          %749 = vst [vmem:[%s707 + $0xa0] sm:$0xff] %v748
          %v750 = vld [vmem:[%s706 + $0xa8] sm:$0xff]
          %751 = vst [vmem:[%s707 + $0xa8] sm:$0xff] %v750
          %v752 = vld [vmem:[%s706 + $0xb0] sm:$0xff]
          %753 = vst [vmem:[%s707 + $0xb0] sm:$0xff] %v752
          %v754 = vld [vmem:[%s706 + $0xb8] sm:$0xff]
          %755 = vst [vmem:[%s707 + $0xb8] sm:$0xff] %v754
          %v756 = vld [vmem:[%s706 + $0xc0] sm:$0xff]
          %757 = vst [vmem:[%s707 + $0xc0] sm:$0xff] %v756
          %v758 = vld [vmem:[%s706 + $0xc8] sm:$0xff]
          %759 = vst [vmem:[%s707 + $0xc8] sm:$0xff] %v758
          %v760 = vld [vmem:[%s706 + $0xd0] sm:$0xff]
          %761 = vst [vmem:[%s707 + $0xd0] sm:$0xff] %v760
          %v762 = vld [vmem:[%s706 + $0xd8] sm:$0xff]
          %763 = vst [vmem:[%s707 + $0xd8] sm:$0xff] %v762
          %v764 = vld [vmem:[%s706 + $0xe0] sm:$0xff]
          %765 = vst [vmem:[%s707 + $0xe0] sm:$0xff] %v764
          %v766 = vld [vmem:[%s706 + $0xe8] sm:$0xff]
          %767 = vst [vmem:[%s707 + $0xe8] sm:$0xff] %v766
          %v768 = vld [vmem:[%s706 + $0xf0] sm:$0xff]
          %769 = vst [vmem:[%s707 + $0xf0] sm:$0xff] %v768
          %v770 = vld [vmem:[%s706 + $0xf8] sm:$0xff]
          %771 = vst [vmem:[%s707 + $0xf8] sm:$0xff] %v770
          %v772 = vld [vmem:[%s706 + $0x100] sm:$0xff]
          %773 = vst [vmem:[%s707 + $0x100] sm:$0xff] %v772
          %v774 = vld [vmem:[%s706 + $0x108] sm:$0xff]
          %775 = vst [vmem:[%s707 + $0x108] sm:$0xff] %v774
          %v776 = vld [vmem:[%s706 + $0x110] sm:$0xff]
          %777 = vst [vmem:[%s707 + $0x110] sm:$0xff] %v776
          %v778 = vld [vmem:[%s706 + $0x118] sm:$0xff]
          %779 = vst [vmem:[%s707 + $0x118] sm:$0xff] %v778
          %v780 = vld [vmem:[%s706 + $0x120] sm:$0xff]
          %781 = vst [vmem:[%s707 + $0x120] sm:$0xff] %v780
          %v782 = vld [vmem:[%s706 + $0x128] sm:$0xff]
          %783 = vst [vmem:[%s707 + $0x128] sm:$0xff] %v782
          %v784 = vld [vmem:[%s706 + $0x130] sm:$0xff]
          %785 = vst [vmem:[%s707 + $0x130] sm:$0xff] %v784
          %v786 = vld [vmem:[%s706 + $0x138] sm:$0xff]
          %787 = vst [vmem:[%s707 + $0x138] sm:$0xff] %v786
          %v788 = vld [vmem:[%s706 + $0x140] sm:$0xff]
          %789 = vst [vmem:[%s707 + $0x140] sm:$0xff] %v788
          %v790 = vld [vmem:[%s706 + $0x148] sm:$0xff]
          %791 = vst [vmem:[%s707 + $0x148] sm:$0xff] %v790
          %v792 = vld [vmem:[%s706 + $0x150] sm:$0xff]
          %793 = vst [vmem:[%s707 + $0x150] sm:$0xff] %v792
          %v794 = vld [vmem:[%s706 + $0x158] sm:$0xff]
          %795 = vst [vmem:[%s707 + $0x158] sm:$0xff] %v794
          %v796 = vld [vmem:[%s706 + $0x160] sm:$0xff]
          %797 = vst [vmem:[%s707 + $0x160] sm:$0xff] %v796
          %v798 = vld [vmem:[%s706 + $0x168] sm:$0xff]
          %799 = vst [vmem:[%s707 + $0x168] sm:$0xff] %v798
          %v800 = vld [vmem:[%s706 + $0x170] sm:$0xff]
          %801 = vst [vmem:[%s707 + $0x170] sm:$0xff] %v800
          %v802 = vld [vmem:[%s706 + $0x178] sm:$0xff]
          %803 = vst [vmem:[%s707 + $0x178] sm:$0xff] %v802
          %v804 = vld [vmem:[%s706 + $0x180] sm:$0xff]
          %805 = vst [vmem:[%s707 + $0x180] sm:$0xff] %v804
          %v806 = vld [vmem:[%s706 + $0x188] sm:$0xff]
          %807 = vst [vmem:[%s707 + $0x188] sm:$0xff] %v806
          %v808 = vld [vmem:[%s706 + $0x190] sm:$0xff]
          %809 = vst [vmem:[%s707 + $0x190] sm:$0xff] %v808
          %v810 = vld [vmem:[%s706 + $0x198] sm:$0xff]
          %811 = vst [vmem:[%s707 + $0x198] sm:$0xff] %v810
          %v812 = vld [vmem:[%s706 + $0x1a0] sm:$0xff]
          %813 = vst [vmem:[%s707 + $0x1a0] sm:$0xff] %v812
          %v814 = vld [vmem:[%s706 + $0x1a8] sm:$0xff]
          %815 = vst [vmem:[%s707 + $0x1a8] sm:$0xff] %v814
          %v816 = vld [vmem:[%s706 + $0x1b0] sm:$0xff]
          %817 = vst [vmem:[%s707 + $0x1b0] sm:$0xff] %v816
          %v818 = vld [vmem:[%s706 + $0x1b8] sm:$0xff]
          %819 = vst [vmem:[%s707 + $0x1b8] sm:$0xff] %v818
        $region193: #{simple_cnn_forward.1} parent=187 // loop_footer
          %s705 = sadd.s32 1, %s701
        $region194: #{simple_cnn_forward.1} parent=187 // loop_footer_branch
          %700 = sbr.rel target = $region190
        $region195: #{simple_cnn_forward.1} parent=187 // loop_exit
          _
      $region188: #{simple_cnn_forward.1} parent=172 // pred_fallthru
        _
      %p820 = pneg %p696
      // Predicated region
      $region196: #{simple_cnn_forward.1} parent=172 // pred_check
        _
      $region197: #{simple_cnn_forward.1} parent=172 // pred_check_branch
        %822 = sbr.rel (%p696) target = $region199
      $region198: #{simple_cnn_forward.1} parent=172 // pred_region
        %s823 = sand.u32 448, 7
      $region199: #{simple_cnn_forward.1} parent=172 // pred_fallthru
        _
    $region173: #{simple_cnn_forward.1} parent=1 // pred_fallthru
      _
    // Predicated region
    $region174: #{simple_cnn_forward.1} parent=1 // pred_check
      %p680 = pneg %p676
    $region175: #{simple_cnn_forward.1} parent=1 // pred_check_branch
      %682 = sbr.rel (%p680) target = $region177
    $region176: #{simple_cnn_forward.1} parent=1 // pred_region
      %s683 = sshll.u32 1, 448
      %s684 = ssub.s32 %s683, 1
      loop: start=0, step=1, limit=1
      $region178: #{simple_cnn_forward.1} parent=176 // loop_pre_header
        _
      $region179: #{simple_cnn_forward.1} parent=176 // loop_header
        %s686 = sphi 0, %s690
        %p687 = scmp.ge.s32.totalorder %s686, 1
        %s691 = sphi %s672, %s672
        %s692 = sphi %s673, %s673
      $region180: #{simple_cnn_forward.1} parent=176 // loop_header_branch
        %689 = sbr.rel (%p687) target = $region184
      $region181: #{simple_cnn_forward.1} parent=176 // loop_body
        %v693 = vld [vmem:[%s691] sm:%s684]
        %694 = vst [vmem:[%s692] sm:%s684] %v693
      $region182: #{simple_cnn_forward.1} parent=176 // loop_footer
        %s690 = sadd.s32 1, %s686
      $region183: #{simple_cnn_forward.1} parent=176 // loop_footer_branch
        %685 = sbr.rel target = $region179
      $region184: #{simple_cnn_forward.1} parent=176 // loop_exit
        _
    $region177: #{simple_cnn_forward.1} parent=1 // pred_fallthru
      _
    // Predicated region
    $region200: #{simple_cnn_forward.1} parent=1 // pred_check
      _
    $region201: #{simple_cnn_forward.1} parent=1 // pred_check_branch
      %826 = sbr.rel (0) target = $region203
    $region202: #{simple_cnn_forward.1} parent=1 // pred_region
      %827 = vsyncadd %s674, 7168
    $region203: #{simple_cnn_forward.1} parent=1 // pred_fallthru
      _
    %v828 = vld [vmem:[%s0] sm:$0xff]
    %v829 = vld [vmem:[%s0 + $0x8] sm:$0x3f]
    %s830 = sld [smem:[#allocation4]]
    %v831 = vstv %s830
    %v832 = vmul.f32 %v831, %v828
    %v833 = vmul.f32 %v831, %v829
    %v834 = vadd.f32 %v832, 0.0
    %v835 = vadd.f32 %v833, 0.0
    %s836 = sld [smem:[#allocation4 + $0x80]]
    %v837 = vstv %s836
    %v838 = vmul.f32 %v837, %v828
    %v839 = vmul.f32 %v837, %v829
    %v840 = vadd.f32 %v838, 0.0
    %v841 = vadd.f32 %v839, 0.0
    %s842 = sld [smem:[#allocation4 + $0x100]]
    %v843 = vstv %s842
    %v844 = vmul.f32 %v843, %v828
    %v845 = vmul.f32 %v843, %v829
    %v846 = vadd.f32 %v844, 0.0
    %v847 = vadd.f32 %v845, 0.0
    %s848 = sld [smem:[#allocation4 + $0x180]]
    %v849 = vstv %s848
    %v850 = vmul.f32 %v849, %v828
    %v851 = vmul.f32 %v849, %v829
    %v852 = vadd.f32 %v850, 0.0
    %v853 = vadd.f32 %v851, 0.0
    %s854 = sld [smem:[#allocation4 + $0x200]]
    %v855 = vstv %s854
    %v856 = vmul.f32 %v855, %v828
    %v857 = vmul.f32 %v855, %v829
    %v858 = vadd.f32 %v856, 0.0
    %v859 = vadd.f32 %v857, 0.0
    %s860 = scalar_lea.vmem %s0, 14
    %v861 = vld [vmem:[%s860] sm:$0xff]
    %v862 = vld [vmem:[%s860 + $0x8] sm:$0x3f]
    %s863 = sld [smem:[#allocation4 + $0x1]]
    %v864 = vstv %s863
    %v865 = vmul.f32 %v864, %v861
    %v866 = vmul.f32 %v864, %v862
    %v867 = vadd.f32 %v834, %v865
    %v868 = vadd.f32 %v835, %v866
    %s869 = sld [smem:[#allocation4 + $0x81]]
    %v870 = vstv %s869
    %v871 = vmul.f32 %v870, %v861
    %v872 = vmul.f32 %v870, %v862
    %v873 = vadd.f32 %v840, %v871
    %v874 = vadd.f32 %v841, %v872
    %s875 = sld [smem:[#allocation4 + $0x101]]
    %v876 = vstv %s875
    %v877 = vmul.f32 %v876, %v861
    %v878 = vmul.f32 %v876, %v862
    %v879 = vadd.f32 %v846, %v877
    %v880 = vadd.f32 %v847, %v878
    %s881 = sld [smem:[#allocation4 + $0x181]]
    %v882 = vstv %s881
    %v883 = vmul.f32 %v882, %v861
    %v884 = vmul.f32 %v882, %v862
    %v885 = vadd.f32 %v852, %v883
    %v886 = vadd.f32 %v853, %v884
    %s887 = sld [smem:[#allocation4 + $0x201]]
    %v888 = vstv %s887
    %v889 = vmul.f32 %v888, %v861
    %v890 = vmul.f32 %v888, %v862
    %v891 = vadd.f32 %v858, %v889
    %v892 = vadd.f32 %v859, %v890
    %s893 = scalar_lea.vmem %s0, 28
    %v894 = vld [vmem:[%s893] sm:$0xff]
    %v895 = vld [vmem:[%s893 + $0x8] sm:$0x3f]
    %s896 = sld [smem:[#allocation4 + $0x2]]
    %v897 = vstv %s896
    %v898 = vmul.f32 %v897, %v894
    %v899 = vmul.f32 %v897, %v895
    %v900 = vadd.f32 %v867, %v898
    %v901 = vadd.f32 %v868, %v899
    %s902 = sld [smem:[#allocation4 + $0x82]]
    %v903 = vstv %s902
    %v904 = vmul.f32 %v903, %v894
    %v905 = vmul.f32 %v903, %v895
    %v906 = vadd.f32 %v873, %v904
    %v907 = vadd.f32 %v874, %v905
    %s908 = sld [smem:[#allocation4 + $0x102]]
    %v909 = vstv %s908
    %v910 = vmul.f32 %v909, %v894
    %v911 = vmul.f32 %v909, %v895
    %v912 = vadd.f32 %v879, %v910
    %v913 = vadd.f32 %v880, %v911
    %s914 = sld [smem:[#allocation4 + $0x182]]
    %v915 = vstv %s914
    %v916 = vmul.f32 %v915, %v894
    %v917 = vmul.f32 %v915, %v895
    %v918 = vadd.f32 %v885, %v916
    %v919 = vadd.f32 %v886, %v917
    %s920 = sld [smem:[#allocation4 + $0x202]]
    %v921 = vstv %s920
    %v922 = vmul.f32 %v921, %v894
    %v923 = vmul.f32 %v921, %v895
    %v924 = vadd.f32 %v891, %v922
    %v925 = vadd.f32 %v892, %v923
    %s926 = scalar_lea.vmem %s0, 42
    %v927 = vld [vmem:[%s926] sm:$0xff]
    %v928 = vld [vmem:[%s926 + $0x8] sm:$0x3f]
    %s929 = sld [smem:[#allocation4 + $0x3]]
    %v930 = vstv %s929
    %v931 = vmul.f32 %v930, %v927
    %v932 = vmul.f32 %v930, %v928
    %v933 = vadd.f32 %v900, %v931
    %v934 = vadd.f32 %v901, %v932
    %s935 = sld [smem:[#allocation4 + $0x83]]
    %v936 = vstv %s935
    %v937 = vmul.f32 %v936, %v927
    %v938 = vmul.f32 %v936, %v928
    %v939 = vadd.f32 %v906, %v937
    %v940 = vadd.f32 %v907, %v938
    %s941 = sld [smem:[#allocation4 + $0x103]]
    %v942 = vstv %s941
    %v943 = vmul.f32 %v942, %v927
    %v944 = vmul.f32 %v942, %v928
    %v945 = vadd.f32 %v912, %v943
    %v946 = vadd.f32 %v913, %v944
    %s947 = sld [smem:[#allocation4 + $0x183]]
    %v948 = vstv %s947
    %v949 = vmul.f32 %v948, %v927
    %v950 = vmul.f32 %v948, %v928
    %v951 = vadd.f32 %v918, %v949
    %v952 = vadd.f32 %v919, %v950
    %s953 = sld [smem:[#allocation4 + $0x203]]
    %v954 = vstv %s953
    %v955 = vmul.f32 %v954, %v927
    %v956 = vmul.f32 %v954, %v928
    %v957 = vadd.f32 %v924, %v955
    %v958 = vadd.f32 %v925, %v956
    %s959 = scalar_lea.vmem %s0, 56
    %v960 = vld [vmem:[%s959] sm:$0xff]
    %v961 = vld [vmem:[%s959 + $0x8] sm:$0x3f]
    %s962 = sld [smem:[#allocation4 + $0x4]]
    %v963 = vstv %s962
    %v964 = vmul.f32 %v963, %v960
    %v965 = vmul.f32 %v963, %v961
    %v966 = vadd.f32 %v933, %v964
    %v967 = vadd.f32 %v934, %v965
    %s968 = sld [smem:[#allocation4 + $0x84]]
    %v969 = vstv %s968
    %v970 = vmul.f32 %v969, %v960
    %v971 = vmul.f32 %v969, %v961
    %v972 = vadd.f32 %v939, %v970
    %v973 = vadd.f32 %v940, %v971
    %s974 = sld [smem:[#allocation4 + $0x104]]
    %v975 = vstv %s974
    %v976 = vmul.f32 %v975, %v960
    %v977 = vmul.f32 %v975, %v961
    %v978 = vadd.f32 %v945, %v976
    %v979 = vadd.f32 %v946, %v977
    %s980 = sld [smem:[#allocation4 + $0x184]]
    %v981 = vstv %s980
    %v982 = vmul.f32 %v981, %v960
    %v983 = vmul.f32 %v981, %v961
    %v984 = vadd.f32 %v951, %v982
    %v985 = vadd.f32 %v952, %v983
    %s986 = sld [smem:[#allocation4 + $0x204]]
    %v987 = vstv %s986
    %v988 = vmul.f32 %v987, %v960
    %v989 = vmul.f32 %v987, %v961
    %v990 = vadd.f32 %v957, %v988
    %v991 = vadd.f32 %v958, %v989
    %s992 = scalar_lea.vmem %s0, 70
    %v993 = vld [vmem:[%s992] sm:$0xff]
    %v994 = vld [vmem:[%s992 + $0x8] sm:$0x3f]
    %s995 = sld [smem:[#allocation4 + $0x5]]
    %v996 = vstv %s995
    %v997 = vmul.f32 %v996, %v993
    %v998 = vmul.f32 %v996, %v994
    %v999 = vadd.f32 %v966, %v997
    %v1000 = vadd.f32 %v967, %v998
    %s1001 = sld [smem:[#allocation4 + $0x85]]
    %v1002 = vstv %s1001
    %v1003 = vmul.f32 %v1002, %v993
    %v1004 = vmul.f32 %v1002, %v994
    %v1005 = vadd.f32 %v972, %v1003
    %v1006 = vadd.f32 %v973, %v1004
    %s1007 = sld [smem:[#allocation4 + $0x105]]
    %v1008 = vstv %s1007
    %v1009 = vmul.f32 %v1008, %v993
    %v1010 = vmul.f32 %v1008, %v994
    %v1011 = vadd.f32 %v978, %v1009
    %v1012 = vadd.f32 %v979, %v1010
    %s1013 = sld [smem:[#allocation4 + $0x185]]
    %v1014 = vstv %s1013
    %v1015 = vmul.f32 %v1014, %v993
    %v1016 = vmul.f32 %v1014, %v994
    %v1017 = vadd.f32 %v984, %v1015
    %v1018 = vadd.f32 %v985, %v1016
    %s1019 = sld [smem:[#allocation4 + $0x205]]
    %v1020 = vstv %s1019
    %v1021 = vmul.f32 %v1020, %v993
    %v1022 = vmul.f32 %v1020, %v994
    %v1023 = vadd.f32 %v990, %v1021
    %v1024 = vadd.f32 %v991, %v1022
    %s1025 = scalar_lea.vmem %s0, 84
    %v1026 = vld [vmem:[%s1025] sm:$0xff]
    %v1027 = vld [vmem:[%s1025 + $0x8] sm:$0x3f]
    %s1028 = sld [smem:[#allocation4 + $0x6]]
    %v1029 = vstv %s1028
    %v1030 = vmul.f32 %v1029, %v1026
    %v1031 = vmul.f32 %v1029, %v1027
    %v1032 = vadd.f32 %v999, %v1030
    %v1033 = vadd.f32 %v1000, %v1031
    %s1034 = sld [smem:[#allocation4 + $0x86]]
    %v1035 = vstv %s1034
    %v1036 = vmul.f32 %v1035, %v1026
    %v1037 = vmul.f32 %v1035, %v1027
    %v1038 = vadd.f32 %v1005, %v1036
    %v1039 = vadd.f32 %v1006, %v1037
    %s1040 = sld [smem:[#allocation4 + $0x106]]
    %v1041 = vstv %s1040
    %v1042 = vmul.f32 %v1041, %v1026
    %v1043 = vmul.f32 %v1041, %v1027
    %v1044 = vadd.f32 %v1011, %v1042
    %v1045 = vadd.f32 %v1012, %v1043
    %s1046 = sld [smem:[#allocation4 + $0x186]]
    %v1047 = vstv %s1046
    %v1048 = vmul.f32 %v1047, %v1026
    %v1049 = vmul.f32 %v1047, %v1027
    %v1050 = vadd.f32 %v1017, %v1048
    %v1051 = vadd.f32 %v1018, %v1049
    %s1052 = sld [smem:[#allocation4 + $0x206]]
    %v1053 = vstv %s1052
    %v1054 = vmul.f32 %v1053, %v1026
    %v1055 = vmul.f32 %v1053, %v1027
    %v1056 = vadd.f32 %v1023, %v1054
    %v1057 = vadd.f32 %v1024, %v1055
    %s1058 = scalar_lea.vmem %s0, 98
    %v1059 = vld [vmem:[%s1058] sm:$0xff]
    %v1060 = vld [vmem:[%s1058 + $0x8] sm:$0x3f]
    %s1061 = sld [smem:[#allocation4 + $0x7]]
    %v1062 = vstv %s1061
    %v1063 = vmul.f32 %v1062, %v1059
    %v1064 = vmul.f32 %v1062, %v1060
    %v1065 = vadd.f32 %v1032, %v1063
    %v1066 = vadd.f32 %v1033, %v1064
    %s1067 = sld [smem:[#allocation4 + $0x87]]
    %v1068 = vstv %s1067
    %v1069 = vmul.f32 %v1068, %v1059
    %v1070 = vmul.f32 %v1068, %v1060
    %v1071 = vadd.f32 %v1038, %v1069
    %v1072 = vadd.f32 %v1039, %v1070
    %s1073 = sld [smem:[#allocation4 + $0x107]]
    %v1074 = vstv %s1073
    %v1075 = vmul.f32 %v1074, %v1059
    %v1076 = vmul.f32 %v1074, %v1060
    %v1077 = vadd.f32 %v1044, %v1075
    %v1078 = vadd.f32 %v1045, %v1076
    %s1079 = sld [smem:[#allocation4 + $0x187]]
    %v1080 = vstv %s1079
    %v1081 = vmul.f32 %v1080, %v1059
    %v1082 = vmul.f32 %v1080, %v1060
    %v1083 = vadd.f32 %v1050, %v1081
    %v1084 = vadd.f32 %v1051, %v1082
    %s1085 = sld [smem:[#allocation4 + $0x207]]
    %v1086 = vstv %s1085
    %v1087 = vmul.f32 %v1086, %v1059
    %v1088 = vmul.f32 %v1086, %v1060
    %v1089 = vadd.f32 %v1056, %v1087
    %v1090 = vadd.f32 %v1057, %v1088
    %s1091 = scalar_lea.vmem %s0, 112
    %v1092 = vld [vmem:[%s1091] sm:$0xff]
    %v1093 = vld [vmem:[%s1091 + $0x8] sm:$0x3f]
    %s1094 = sld [smem:[#allocation4 + $0x8]]
    %v1095 = vstv %s1094
    %v1096 = vmul.f32 %v1095, %v1092
    %v1097 = vmul.f32 %v1095, %v1093
    %v1098 = vadd.f32 %v1065, %v1096
    %v1099 = vadd.f32 %v1066, %v1097
    %s1100 = sld [smem:[#allocation4 + $0x88]]
    %v1101 = vstv %s1100
    %v1102 = vmul.f32 %v1101, %v1092
    %v1103 = vmul.f32 %v1101, %v1093
    %v1104 = vadd.f32 %v1071, %v1102
    %v1105 = vadd.f32 %v1072, %v1103
    %s1106 = sld [smem:[#allocation4 + $0x108]]
    %v1107 = vstv %s1106
    %v1108 = vmul.f32 %v1107, %v1092
    %v1109 = vmul.f32 %v1107, %v1093
    %v1110 = vadd.f32 %v1077, %v1108
    %v1111 = vadd.f32 %v1078, %v1109
    %s1112 = sld [smem:[#allocation4 + $0x188]]
    %v1113 = vstv %s1112
    %v1114 = vmul.f32 %v1113, %v1092
    %v1115 = vmul.f32 %v1113, %v1093
    %v1116 = vadd.f32 %v1083, %v1114
    %v1117 = vadd.f32 %v1084, %v1115
    %s1118 = sld [smem:[#allocation4 + $0x208]]
    %v1119 = vstv %s1118
    %v1120 = vmul.f32 %v1119, %v1092
    %v1121 = vmul.f32 %v1119, %v1093
    %v1122 = vadd.f32 %v1089, %v1120
    %v1123 = vadd.f32 %v1090, %v1121
    %s1124 = sld [smem:[#allocation7]]
    %v1125 = vstv %s1124
    %v1126 = vadd.f32 %v1098, %v1125
    %v1127 = vadd.f32 %v1099, %v1125
    %v1128 = vxor.u32 %v1126, 2147483648
    %v1129 = vxor.u32 %v1127, 2147483648
    %v1130 = vmul.f32 %v1128, 1.442695
    %v1131 = vpow.pop %v1130
    %v1132 = vmul.f32 %v1129, 1.442695
    %v1133 = vpow.pop %v1132
    %v1134 = vadd.f32 %v1131, 1.0
    %v1135 = vadd.f32 %v1133, 1.0
    %v1136 = vrcp.pop %v1134
    %v1137 = vmul.f32 1.0, %v1136
    %v1138 = vrcp.pop %v1135
    %v1139 = vmul.f32 1.0, %v1138
    %v1142 = vcombine.high %v1137, %v1137
    %v1144 = vunpack.c.l.s4 1983009808
    %v1145 = vunpack.c.0.s8 %v1144
    %v1146 = vlaneseq
    %v1147 = vshrl.u32 %v1146, 7
    %v1148 = vsub.s32 %v1145, %v1147
    %v1149 = vrot.slane %v1137, %v1148
    %v1151 = vunpack.c.l.s4 1983009808
    %v1152 = vunpack.c.0.s8 %v1151
    %v1153 = vlaneseq
    %v1154 = vshrl.u32 %v1153, 7
    %v1155 = vsub.s32 %v1152, %v1154
    %v1156 = vrot.slane %v1142, %v1155
    %v1157 = vcombine.high %v1149, %v1149
    %v1158 = vcombine.high %v1156, %v1156
    %v1159 = vcombine.high %v1139, %v1139
    %v1161 = vunpack.c.l.s4 1983009808
    %v1162 = vunpack.c.0.s8 %v1161
    %v1163 = vlaneseq
    %v1164 = vshrl.u32 %v1163, 7
    %v1165 = vsub.s32 %v1162, %v1164
    %v1166 = vrot.slane %v1139, %v1165
    %v1168 = vunpack.c.l.s4 1983009808
    %v1169 = vunpack.c.0.s8 %v1168
    %v1170 = vlaneseq
    %v1171 = vshrl.u32 %v1170, 7
    %v1172 = vsub.s32 %v1169, %v1171
    %v1173 = vrot.slane %v1159, %v1172
    %v1174 = vcombine.high %v1166, %v1166
    %v1182 = vpack.c.bf16 %v1149, %v1149
    %v1183 = vpack.c.bf16 %v1157, %v1157
    %v1184 = vpack.c.bf16 %v1156, %v1156
    %v1185 = vpack.c.bf16 %v1158, %v1158
    %v1186 = vpack.c.bf16 %v1166, %v1166
    %v1187 = vpack.c.bf16 %v1174, %v1174
    %v1188 = vpack.c.bf16 %v1173, %v1173
    %s1189 = smul.u32 4, 112
    %s1190 = smul.u32 %s1189, 1
    %s1191 = sshll.u32 %s1190, 4
    %1192 = dma.done [#allocation3], %s1191
    %v1193 = vld [vmem:[#allocation2] sm:$0xf]
    %v1194 = vld [vmem:[#allocation2 + $0x4] sm:$0xf]
    %v1195 = vld [vmem:[#allocation2 + $0x8] sm:$0xf]
    %v1196 = vld [vmem:[#allocation2 + $0xc] sm:$0xf]
    %v1197 = vld [vmem:[#allocation2 + $0x10] sm:$0xf]
    %v1198 = vld [vmem:[#allocation2 + $0x14] sm:$0xf]
    %v1199 = vld [vmem:[#allocation2 + $0x18] sm:$0xf]
    %v1200 = vld [vmem:[#allocation2 + $0x1c] sm:$0xf]
    %v1201 = vld [vmem:[#allocation2 + $0x20] sm:$0xf]
    %v1202 = vld [vmem:[#allocation2 + $0x24] sm:$0xf]
    %v1203 = vld [vmem:[#allocation2 + $0x28] sm:$0xf]
    %v1204 = vld [vmem:[#allocation2 + $0x2c] sm:$0xf]
    %v1205 = vld [vmem:[#allocation2 + $0x30] sm:$0xf]
    %v1206 = vld [vmem:[#allocation2 + $0x34] sm:$0xf]
    %v1207 = vld [vmem:[#allocation2 + $0x38] sm:$0xf]
    %v1208 = vld [vmem:[#allocation2 + $0x3c] sm:$0xf]
    %v1209 = vld [vmem:[#allocation2 + $0x40] sm:$0xf]
    %v1210 = vld [vmem:[#allocation2 + $0x44] sm:$0xf]
    %v1211 = vld [vmem:[#allocation2 + $0x48] sm:$0xf]
    %v1212 = vld [vmem:[#allocation2 + $0x4c] sm:$0xf]
    %v1213 = vld [vmem:[#allocation2 + $0x50] sm:$0xf]
    %v1214 = vld [vmem:[#allocation2 + $0x54] sm:$0xf]
    %v1215 = vld [vmem:[#allocation2 + $0x58] sm:$0xf]
    %v1216 = vld [vmem:[#allocation2 + $0x5c] sm:$0xf]
    %v1217 = vld [vmem:[#allocation2 + $0x60] sm:$0xf]
    %v1218 = vld [vmem:[#allocation2 + $0x64] sm:$0xf]
    %v1219 = vld [vmem:[#allocation2 + $0x68] sm:$0xf]
    %v1220 = vld [vmem:[#allocation2 + $0x6c] sm:$0xf]
    %v1221 = vld [vmem:[#allocation2 + $0x70] sm:$0xf]
    %v1222 = vld [vmem:[#allocation2 + $0x74] sm:$0xf]
    %v1223 = vld [vmem:[#allocation2 + $0x78] sm:$0xf]
    %v1224 = vld [vmem:[#allocation2 + $0x7c] sm:$0xf]
    %v1225 = vld [vmem:[#allocation2 + $0x80] sm:$0xf]
    %v1226 = vld [vmem:[#allocation2 + $0x84] sm:$0xf]
    %v1227 = vld [vmem:[#allocation2 + $0x88] sm:$0xf]
    %v1228 = vld [vmem:[#allocation2 + $0x8c] sm:$0xf]
    %v1229 = vld [vmem:[#allocation2 + $0x90] sm:$0xf]
    %v1230 = vld [vmem:[#allocation2 + $0x94] sm:$0xf]
    %v1231 = vld [vmem:[#allocation2 + $0x98] sm:$0xf]
    %v1232 = vld [vmem:[#allocation2 + $0x9c] sm:$0xf]
    %v1233 = vld [vmem:[#allocation2 + $0xa0] sm:$0xf]
    %v1234 = vld [vmem:[#allocation2 + $0xa4] sm:$0xf]
    %v1235 = vld [vmem:[#allocation2 + $0xa8] sm:$0xf]
    %v1236 = vld [vmem:[#allocation2 + $0xac] sm:$0xf]
    %v1237 = vld [vmem:[#allocation2 + $0xb0] sm:$0xf]
    %v1238 = vld [vmem:[#allocation2 + $0xb4] sm:$0xf]
    %v1239 = vld [vmem:[#allocation2 + $0xb8] sm:$0xf]
    %v1240 = vld [vmem:[#allocation2 + $0xbc] sm:$0xf]
    %v1241 = vld [vmem:[#allocation2 + $0xc0] sm:$0xf]
    %v1242 = vld [vmem:[#allocation2 + $0xc4] sm:$0xf]
    %v1243 = vld [vmem:[#allocation2 + $0xc8] sm:$0xf]
    %v1244 = vld [vmem:[#allocation2 + $0xcc] sm:$0xf]
    %v1245 = vld [vmem:[#allocation2 + $0xd0] sm:$0xf]
    %v1246 = vld [vmem:[#allocation2 + $0xd4] sm:$0xf]
    %v1247 = vld [vmem:[#allocation2 + $0xd8] sm:$0xf]
    %v1248 = vld [vmem:[#allocation2 + $0xdc] sm:$0xf]
    %v1249 = vld [vmem:[#allocation2 + $0xe0] sm:$0xf]
    %v1250 = vld [vmem:[#allocation2 + $0xe4] sm:$0xf]
    %v1251 = vld [vmem:[#allocation2 + $0xe8] sm:$0xf]
    %v1252 = vld [vmem:[#allocation2 + $0xec] sm:$0xf]
    %v1253 = vld [vmem:[#allocation2 + $0xf0] sm:$0xf]
    %v1254 = vld [vmem:[#allocation2 + $0xf4] sm:$0xf]
    %v1255 = vld [vmem:[#allocation2 + $0xf8] sm:$0xf]
    %v1256 = vld [vmem:[#allocation2 + $0xfc] sm:$0xf]
    %v1257 = vld [vmem:[#allocation2 + $0x100] sm:$0xf]
    %v1258 = vld [vmem:[#allocation2 + $0x104] sm:$0xf]
    %v1259 = vld [vmem:[#allocation2 + $0x108] sm:$0xf]
    %v1260 = vld [vmem:[#allocation2 + $0x10c] sm:$0xf]
    %v1261 = vld [vmem:[#allocation2 + $0x110] sm:$0xf]
    %v1262 = vld [vmem:[#allocation2 + $0x114] sm:$0xf]
    %v1263 = vld [vmem:[#allocation2 + $0x118] sm:$0xf]
    %v1264 = vld [vmem:[#allocation2 + $0x11c] sm:$0xf]
    %v1265 = vld [vmem:[#allocation2 + $0x120] sm:$0xf]
    %v1266 = vld [vmem:[#allocation2 + $0x124] sm:$0xf]
    %v1267 = vld [vmem:[#allocation2 + $0x128] sm:$0xf]
    %v1268 = vld [vmem:[#allocation2 + $0x12c] sm:$0xf]
    %v1269 = vld [vmem:[#allocation2 + $0x130] sm:$0xf]
    %v1270 = vld [vmem:[#allocation2 + $0x134] sm:$0xf]
    %v1271 = vld [vmem:[#allocation2 + $0x138] sm:$0xf]
    %v1272 = vld [vmem:[#allocation2 + $0x13c] sm:$0xf]
    %v1273 = vld [vmem:[#allocation2 + $0x140] sm:$0xf]
    %v1274 = vld [vmem:[#allocation2 + $0x144] sm:$0xf]
    %v1275 = vld [vmem:[#allocation2 + $0x148] sm:$0xf]
    %v1276 = vld [vmem:[#allocation2 + $0x14c] sm:$0xf]
    %v1277 = vld [vmem:[#allocation2 + $0x150] sm:$0xf]
    %v1278 = vld [vmem:[#allocation2 + $0x154] sm:$0xf]
    %v1279 = vld [vmem:[#allocation2 + $0x158] sm:$0xf]
    %v1280 = vld [vmem:[#allocation2 + $0x15c] sm:$0xf]
    %v1281 = vld [vmem:[#allocation2 + $0x160] sm:$0xf]
    %v1282 = vld [vmem:[#allocation2 + $0x164] sm:$0xf]
    %v1283 = vld [vmem:[#allocation2 + $0x168] sm:$0xf]
    %v1284 = vld [vmem:[#allocation2 + $0x16c] sm:$0xf]
    %v1285 = vld [vmem:[#allocation2 + $0x170] sm:$0xf]
    %v1286 = vld [vmem:[#allocation2 + $0x174] sm:$0xf]
    %v1287 = vld [vmem:[#allocation2 + $0x178] sm:$0xf]
    %v1288 = vld [vmem:[#allocation2 + $0x17c] sm:$0xf]
    %v1289 = vld [vmem:[#allocation2 + $0x180] sm:$0xf]
    %v1290 = vld [vmem:[#allocation2 + $0x184] sm:$0xf]
    %v1291 = vld [vmem:[#allocation2 + $0x188] sm:$0xf]
    %v1292 = vld [vmem:[#allocation2 + $0x18c] sm:$0xf]
    %v1293 = vld [vmem:[#allocation2 + $0x190] sm:$0xf]
    %v1294 = vld [vmem:[#allocation2 + $0x194] sm:$0xf]
    %v1295 = vld [vmem:[#allocation2 + $0x198] sm:$0xf]
    %v1296 = vld [vmem:[#allocation2 + $0x19c] sm:$0xf]
    %v1297 = vld [vmem:[#allocation2 + $0x1a0] sm:$0xf]
    %v1298 = vld [vmem:[#allocation2 + $0x1a4] sm:$0xf]
    %v1299 = vld [vmem:[#allocation2 + $0x1a8] sm:$0xf]
    %v1300 = vld [vmem:[#allocation2 + $0x1ac] sm:$0xf]
    %v1301 = vld [vmem:[#allocation2 + $0x1b0] sm:$0xf]
    %v1302 = vld [vmem:[#allocation2 + $0x1b4] sm:$0xf]
    %v1303 = vld [vmem:[#allocation2 + $0x1b8] sm:$0xf]
    %v1304 = vld [vmem:[#allocation2 + $0x1bc] sm:$0xf]
    %s1305 = sld [smem:[#allocation7 + $0x1]]
    %v1306 = vstv %s1305
    %v1307 = vadd.f32 %v1104, %v1306
    %v1308 = vadd.f32 %v1105, %v1306
    %v1309 = vxor.u32 %v1307, 2147483648
    %v1310 = vxor.u32 %v1308, 2147483648
    %v1311 = vmul.f32 %v1309, 1.442695
    %v1312 = vpow.pop %v1311
    %v1313 = vmul.f32 %v1310, 1.442695
    %v1314 = vpow.pop %v1313
    %v1315 = vadd.f32 %v1312, 1.0
    %v1316 = vadd.f32 %v1314, 1.0
    %v1317 = vrcp.pop %v1315
    %v1318 = vmul.f32 1.0, %v1317
    %v1319 = vrcp.pop %v1316
    %v1320 = vmul.f32 1.0, %v1319
    %v1323 = vcombine.high %v1318, %v1318
    %v1325 = vunpack.c.l.s4 1983009808
    %v1326 = vunpack.c.0.s8 %v1325
    %v1327 = vlaneseq
    %v1328 = vshrl.u32 %v1327, 7
    %v1329 = vsub.s32 %v1326, %v1328
    %v1330 = vrot.slane %v1318, %v1329
    %v1332 = vunpack.c.l.s4 1983009808
    %v1333 = vunpack.c.0.s8 %v1332
    %v1334 = vlaneseq
    %v1335 = vshrl.u32 %v1334, 7
    %v1336 = vsub.s32 %v1333, %v1335
    %v1337 = vrot.slane %v1323, %v1336
    %v1338 = vcombine.high %v1330, %v1330
    %v1339 = vcombine.high %v1337, %v1337
    %v1340 = vcombine.high %v1320, %v1320
    %v1342 = vunpack.c.l.s4 1983009808
    %v1343 = vunpack.c.0.s8 %v1342
    %v1344 = vlaneseq
    %v1345 = vshrl.u32 %v1344, 7
    %v1346 = vsub.s32 %v1343, %v1345
    %v1347 = vrot.slane %v1320, %v1346
    %v1349 = vunpack.c.l.s4 1983009808
    %v1350 = vunpack.c.0.s8 %v1349
    %v1351 = vlaneseq
    %v1352 = vshrl.u32 %v1351, 7
    %v1353 = vsub.s32 %v1350, %v1352
    %v1354 = vrot.slane %v1340, %v1353
    %v1355 = vcombine.high %v1347, %v1347
    %v1363 = vpack.c.bf16 %v1330, %v1330
    %v1364 = vpack.c.bf16 %v1338, %v1338
    %v1365 = vpack.c.bf16 %v1337, %v1337
    %v1366 = vpack.c.bf16 %v1339, %v1339
    %v1367 = vpack.c.bf16 %v1347, %v1347
    %v1368 = vpack.c.bf16 %v1355, %v1355
    %v1369 = vpack.c.bf16 %v1354, %v1354
    %s1370 = sshll.u32 %s1190, 4
    %1371 = dma.done %s206, %s1370
    %v1372 = vld [vmem:[%s205] sm:$0xf]
    %v1373 = vld [vmem:[%s205 + $0x4] sm:$0xf]
    %v1374 = vld [vmem:[%s205 + $0x8] sm:$0xf]
    %v1375 = vld [vmem:[%s205 + $0xc] sm:$0xf]
    %v1376 = vld [vmem:[%s205 + $0x10] sm:$0xf]
    %v1377 = vld [vmem:[%s205 + $0x14] sm:$0xf]
    %v1378 = vld [vmem:[%s205 + $0x18] sm:$0xf]
    %v1379 = vld [vmem:[%s205 + $0x1c] sm:$0xf]
    %v1380 = vld [vmem:[%s205 + $0x20] sm:$0xf]
    %v1381 = vld [vmem:[%s205 + $0x24] sm:$0xf]
    %v1382 = vld [vmem:[%s205 + $0x28] sm:$0xf]
    %v1383 = vld [vmem:[%s205 + $0x2c] sm:$0xf]
    %v1384 = vld [vmem:[%s205 + $0x30] sm:$0xf]
    %v1385 = vld [vmem:[%s205 + $0x34] sm:$0xf]
    %v1386 = vld [vmem:[%s205 + $0x38] sm:$0xf]
    %v1387 = vld [vmem:[%s205 + $0x3c] sm:$0xf]
    %v1388 = vld [vmem:[%s205 + $0x40] sm:$0xf]
    %v1389 = vld [vmem:[%s205 + $0x44] sm:$0xf]
    %v1390 = vld [vmem:[%s205 + $0x48] sm:$0xf]
    %v1391 = vld [vmem:[%s205 + $0x4c] sm:$0xf]
    %v1392 = vld [vmem:[%s205 + $0x50] sm:$0xf]
    %v1393 = vld [vmem:[%s205 + $0x54] sm:$0xf]
    %v1394 = vld [vmem:[%s205 + $0x58] sm:$0xf]
    %v1395 = vld [vmem:[%s205 + $0x5c] sm:$0xf]
    %v1396 = vld [vmem:[%s205 + $0x60] sm:$0xf]
    %v1397 = vld [vmem:[%s205 + $0x64] sm:$0xf]
    %v1398 = vld [vmem:[%s205 + $0x68] sm:$0xf]
    %v1399 = vld [vmem:[%s205 + $0x6c] sm:$0xf]
    %v1400 = vld [vmem:[%s205 + $0x70] sm:$0xf]
    %v1401 = vld [vmem:[%s205 + $0x74] sm:$0xf]
    %v1402 = vld [vmem:[%s205 + $0x78] sm:$0xf]
    %v1403 = vld [vmem:[%s205 + $0x7c] sm:$0xf]
    %v1404 = vld [vmem:[%s205 + $0x80] sm:$0xf]
    %v1405 = vld [vmem:[%s205 + $0x84] sm:$0xf]
    %v1406 = vld [vmem:[%s205 + $0x88] sm:$0xf]
    %v1407 = vld [vmem:[%s205 + $0x8c] sm:$0xf]
    %v1408 = vld [vmem:[%s205 + $0x90] sm:$0xf]
    %v1409 = vld [vmem:[%s205 + $0x94] sm:$0xf]
    %v1410 = vld [vmem:[%s205 + $0x98] sm:$0xf]
    %v1411 = vld [vmem:[%s205 + $0x9c] sm:$0xf]
    %v1412 = vld [vmem:[%s205 + $0xa0] sm:$0xf]
    %v1413 = vld [vmem:[%s205 + $0xa4] sm:$0xf]
    %v1414 = vld [vmem:[%s205 + $0xa8] sm:$0xf]
    %v1415 = vld [vmem:[%s205 + $0xac] sm:$0xf]
    %v1416 = vld [vmem:[%s205 + $0xb0] sm:$0xf]
    %v1417 = vld [vmem:[%s205 + $0xb4] sm:$0xf]
    %v1418 = vld [vmem:[%s205 + $0xb8] sm:$0xf]
    %v1419 = vld [vmem:[%s205 + $0xbc] sm:$0xf]
    %v1420 = vld [vmem:[%s205 + $0xc0] sm:$0xf]
    %v1421 = vld [vmem:[%s205 + $0xc4] sm:$0xf]
    %v1422 = vld [vmem:[%s205 + $0xc8] sm:$0xf]
    %v1423 = vld [vmem:[%s205 + $0xcc] sm:$0xf]
    %v1424 = vld [vmem:[%s205 + $0xd0] sm:$0xf]
    %v1425 = vld [vmem:[%s205 + $0xd4] sm:$0xf]
    %v1426 = vld [vmem:[%s205 + $0xd8] sm:$0xf]
    %v1427 = vld [vmem:[%s205 + $0xdc] sm:$0xf]
    %v1428 = vld [vmem:[%s205 + $0xe0] sm:$0xf]
    %v1429 = vld [vmem:[%s205 + $0xe4] sm:$0xf]
    %v1430 = vld [vmem:[%s205 + $0xe8] sm:$0xf]
    %v1431 = vld [vmem:[%s205 + $0xec] sm:$0xf]
    %v1432 = vld [vmem:[%s205 + $0xf0] sm:$0xf]
    %v1433 = vld [vmem:[%s205 + $0xf4] sm:$0xf]
    %v1434 = vld [vmem:[%s205 + $0xf8] sm:$0xf]
    %v1435 = vld [vmem:[%s205 + $0xfc] sm:$0xf]
    %v1436 = vld [vmem:[%s205 + $0x100] sm:$0xf]
    %v1437 = vld [vmem:[%s205 + $0x104] sm:$0xf]
    %v1438 = vld [vmem:[%s205 + $0x108] sm:$0xf]
    %v1439 = vld [vmem:[%s205 + $0x10c] sm:$0xf]
    %v1440 = vld [vmem:[%s205 + $0x110] sm:$0xf]
    %v1441 = vld [vmem:[%s205 + $0x114] sm:$0xf]
    %v1442 = vld [vmem:[%s205 + $0x118] sm:$0xf]
    %v1443 = vld [vmem:[%s205 + $0x11c] sm:$0xf]
    %v1444 = vld [vmem:[%s205 + $0x120] sm:$0xf]
    %v1445 = vld [vmem:[%s205 + $0x124] sm:$0xf]
    %v1446 = vld [vmem:[%s205 + $0x128] sm:$0xf]
    %v1447 = vld [vmem:[%s205 + $0x12c] sm:$0xf]
    %v1448 = vld [vmem:[%s205 + $0x130] sm:$0xf]
    %v1449 = vld [vmem:[%s205 + $0x134] sm:$0xf]
    %v1450 = vld [vmem:[%s205 + $0x138] sm:$0xf]
    %v1451 = vld [vmem:[%s205 + $0x13c] sm:$0xf]
    %v1452 = vld [vmem:[%s205 + $0x140] sm:$0xf]
    %v1453 = vld [vmem:[%s205 + $0x144] sm:$0xf]
    %v1454 = vld [vmem:[%s205 + $0x148] sm:$0xf]
    %v1455 = vld [vmem:[%s205 + $0x14c] sm:$0xf]
    %v1456 = vld [vmem:[%s205 + $0x150] sm:$0xf]
    %v1457 = vld [vmem:[%s205 + $0x154] sm:$0xf]
    %v1458 = vld [vmem:[%s205 + $0x158] sm:$0xf]
    %v1459 = vld [vmem:[%s205 + $0x15c] sm:$0xf]
    %v1460 = vld [vmem:[%s205 + $0x160] sm:$0xf]
    %v1461 = vld [vmem:[%s205 + $0x164] sm:$0xf]
    %v1462 = vld [vmem:[%s205 + $0x168] sm:$0xf]
    %v1463 = vld [vmem:[%s205 + $0x16c] sm:$0xf]
    %v1464 = vld [vmem:[%s205 + $0x170] sm:$0xf]
    %v1465 = vld [vmem:[%s205 + $0x174] sm:$0xf]
    %v1466 = vld [vmem:[%s205 + $0x178] sm:$0xf]
    %v1467 = vld [vmem:[%s205 + $0x17c] sm:$0xf]
    %v1468 = vld [vmem:[%s205 + $0x180] sm:$0xf]
    %v1469 = vld [vmem:[%s205 + $0x184] sm:$0xf]
    %v1470 = vld [vmem:[%s205 + $0x188] sm:$0xf]
    %v1471 = vld [vmem:[%s205 + $0x18c] sm:$0xf]
    %v1472 = vld [vmem:[%s205 + $0x190] sm:$0xf]
    %v1473 = vld [vmem:[%s205 + $0x194] sm:$0xf]
    %v1474 = vld [vmem:[%s205 + $0x198] sm:$0xf]
    %v1475 = vld [vmem:[%s205 + $0x19c] sm:$0xf]
    %v1476 = vld [vmem:[%s205 + $0x1a0] sm:$0xf]
    %v1477 = vld [vmem:[%s205 + $0x1a4] sm:$0xf]
    %v1478 = vld [vmem:[%s205 + $0x1a8] sm:$0xf]
    %v1479 = vld [vmem:[%s205 + $0x1ac] sm:$0xf]
    %v1480 = vld [vmem:[%s205 + $0x1b0] sm:$0xf]
    %v1481 = vld [vmem:[%s205 + $0x1b4] sm:$0xf]
    %v1482 = vld [vmem:[%s205 + $0x1b8] sm:$0xf]
    %v1483 = vld [vmem:[%s205 + $0x1bc] sm:$0xf]
    %v1596 = vunpack.c.l.b16 %v1372
    %v1597 = vunpack.c.l.b16 %v1373
    %v1598 = vunpack.c.l.b16 %v1374
    %v1599 = vunpack.c.l.b16 %v1375
    %v1600 = vunpack.c.l.b16 %v1376
    %v1601 = vunpack.c.l.b16 %v1377
    %v1602 = vunpack.c.l.b16 %v1378
    %v1603 = vunpack.c.l.b16 %v1379
    %v1604 = vunpack.c.l.b16 %v1380
    %v1605 = vunpack.c.l.b16 %v1381
    %v1606 = vunpack.c.l.b16 %v1382
    %v1607 = vunpack.c.l.b16 %v1383
    %v1608 = vunpack.c.l.b16 %v1384
    %v1609 = vunpack.c.l.b16 %v1385
    %v1610 = vunpack.c.l.b16 %v1386
    %v1611 = vunpack.c.l.b16 %v1387
    %v1612 = vunpack.c.l.b16 %v1388
    %v1613 = vunpack.c.l.b16 %v1389
    %v1614 = vunpack.c.l.b16 %v1390
    %v1615 = vunpack.c.l.b16 %v1391
    %v1616 = vunpack.c.l.b16 %v1392
    %v1617 = vunpack.c.l.b16 %v1393
    %v1618 = vunpack.c.l.b16 %v1394
    %v1619 = vunpack.c.l.b16 %v1395
    %v1620 = vunpack.c.l.b16 %v1396
    %v1621 = vunpack.c.l.b16 %v1397
    %v1622 = vunpack.c.l.b16 %v1398
    %v1623 = vunpack.c.l.b16 %v1399
    %v1624 = vunpack.c.l.b16 %v1400
    %v1625 = vunpack.c.l.b16 %v1401
    %v1626 = vunpack.c.l.b16 %v1402
    %v1627 = vunpack.c.l.b16 %v1403
    %v1628 = vunpack.c.l.b16 %v1404
    %v1629 = vunpack.c.l.b16 %v1405
    %v1630 = vunpack.c.l.b16 %v1406
    %v1631 = vunpack.c.l.b16 %v1407
    %v1632 = vunpack.c.l.b16 %v1408
    %v1633 = vunpack.c.l.b16 %v1409
    %v1634 = vunpack.c.l.b16 %v1410
    %v1635 = vunpack.c.l.b16 %v1411
    %v1636 = vunpack.c.l.b16 %v1412
    %v1637 = vunpack.c.l.b16 %v1413
    %v1638 = vunpack.c.l.b16 %v1414
    %v1639 = vunpack.c.l.b16 %v1415
    %v1640 = vunpack.c.l.b16 %v1416
    %v1641 = vunpack.c.l.b16 %v1417
    %v1642 = vunpack.c.l.b16 %v1418
    %v1643 = vunpack.c.l.b16 %v1419
    %v1644 = vunpack.c.l.b16 %v1420
    %v1645 = vunpack.c.l.b16 %v1421
    %v1646 = vunpack.c.l.b16 %v1422
    %v1647 = vunpack.c.l.b16 %v1423
    %v1648 = vunpack.c.l.b16 %v1424
    %v1649 = vunpack.c.l.b16 %v1425
    %v1650 = vunpack.c.l.b16 %v1426
    %v1651 = vunpack.c.l.b16 %v1427
    %v1652 = vunpack.c.l.b16 %v1428
    %v1653 = vunpack.c.l.b16 %v1429
    %v1654 = vunpack.c.l.b16 %v1430
    %v1655 = vunpack.c.l.b16 %v1431
    %v1656 = vunpack.c.l.b16 %v1432
    %v1657 = vunpack.c.l.b16 %v1433
    %v1658 = vunpack.c.l.b16 %v1434
    %v1659 = vunpack.c.l.b16 %v1435
    %v1660 = vunpack.c.l.b16 %v1436
    %v1661 = vunpack.c.l.b16 %v1437
    %v1662 = vunpack.c.l.b16 %v1438
    %v1663 = vunpack.c.l.b16 %v1439
    %v1664 = vunpack.c.l.b16 %v1440
    %v1665 = vunpack.c.l.b16 %v1441
    %v1666 = vunpack.c.l.b16 %v1442
    %v1667 = vunpack.c.l.b16 %v1443
    %v1668 = vunpack.c.l.b16 %v1444
    %v1669 = vunpack.c.l.b16 %v1445
    %v1670 = vunpack.c.l.b16 %v1446
    %v1671 = vunpack.c.l.b16 %v1447
    %v1672 = vunpack.c.l.b16 %v1448
    %v1673 = vunpack.c.l.b16 %v1449
    %v1674 = vunpack.c.l.b16 %v1450
    %v1675 = vunpack.c.l.b16 %v1451
    %v1676 = vunpack.c.l.b16 %v1452
    %v1677 = vunpack.c.l.b16 %v1453
    %v1678 = vunpack.c.l.b16 %v1454
    %v1679 = vunpack.c.l.b16 %v1455
    %v1680 = vunpack.c.l.b16 %v1456
    %v1681 = vunpack.c.l.b16 %v1457
    %v1682 = vunpack.c.l.b16 %v1458
    %v1683 = vunpack.c.l.b16 %v1459
    %v1684 = vunpack.c.l.b16 %v1460
    %v1685 = vunpack.c.l.b16 %v1461
    %v1686 = vunpack.c.l.b16 %v1462
    %v1687 = vunpack.c.l.b16 %v1463
    %v1688 = vunpack.c.l.b16 %v1464
    %v1689 = vunpack.c.l.b16 %v1465
    %v1690 = vunpack.c.l.b16 %v1466
    %v1691 = vunpack.c.l.b16 %v1467
    %v1692 = vunpack.c.l.b16 %v1468
    %v1693 = vunpack.c.l.b16 %v1469
    %v1694 = vunpack.c.l.b16 %v1470
    %v1695 = vunpack.c.l.b16 %v1471
    %v1696 = vunpack.c.l.b16 %v1472
    %v1697 = vunpack.c.l.b16 %v1473
    %v1698 = vunpack.c.l.b16 %v1474
    %v1699 = vunpack.c.l.b16 %v1475
    %v1700 = vunpack.c.l.b16 %v1476
    %v1701 = vunpack.c.l.b16 %v1477
    %v1702 = vunpack.c.l.b16 %v1478
    %v1703 = vunpack.c.l.b16 %v1479
    %v1704 = vunpack.c.l.b16 %v1480
    %v1705 = vunpack.c.l.b16 %v1481
    %v1706 = vunpack.c.l.b16 %v1482
    %v1707 = vunpack.c.l.b16 %v1483
    %v1708 = vpack.c.b16 %v1597, %v1596
    %v1709 = vpack.c.b16 %v1599, %v1598
    %v1710 = vpack.c.b16 %v1601, %v1600
    %v1711 = vpack.c.b16 %v1603, %v1602
    %v1712 = vpack.c.b16 %v1605, %v1604
    %v1713 = vpack.c.b16 %v1607, %v1606
    %v1714 = vpack.c.b16 %v1609, %v1608
    %v1715 = vpack.c.b16 %v1611, %v1610
    %v1716 = vpack.c.b16 %v1613, %v1612
    %v1717 = vpack.c.b16 %v1615, %v1614
    %v1718 = vpack.c.b16 %v1617, %v1616
    %v1719 = vpack.c.b16 %v1619, %v1618
    %v1720 = vpack.c.b16 %v1621, %v1620
    %v1721 = vpack.c.b16 %v1623, %v1622
    %v1722 = vpack.c.b16 %v1625, %v1624
    %v1723 = vpack.c.b16 %v1627, %v1626
    %v1724 = vpack.c.b16 %v1629, %v1628
    %v1725 = vpack.c.b16 %v1631, %v1630
    %v1726 = vpack.c.b16 %v1633, %v1632
    %v1727 = vpack.c.b16 %v1635, %v1634
    %v1728 = vpack.c.b16 %v1637, %v1636
    %v1729 = vpack.c.b16 %v1639, %v1638
    %v1730 = vpack.c.b16 %v1641, %v1640
    %v1731 = vpack.c.b16 %v1643, %v1642
    %v1732 = vpack.c.b16 %v1645, %v1644
    %v1733 = vpack.c.b16 %v1647, %v1646
    %v1734 = vpack.c.b16 %v1649, %v1648
    %v1735 = vpack.c.b16 %v1651, %v1650
    %v1736 = vpack.c.b16 %v1653, %v1652
    %v1737 = vpack.c.b16 %v1655, %v1654
    %v1738 = vpack.c.b16 %v1657, %v1656
    %v1739 = vpack.c.b16 %v1659, %v1658
    %v1740 = vpack.c.b16 %v1661, %v1660
    %v1741 = vpack.c.b16 %v1663, %v1662
    %v1742 = vpack.c.b16 %v1665, %v1664
    %v1743 = vpack.c.b16 %v1667, %v1666
    %v1744 = vpack.c.b16 %v1669, %v1668
    %v1745 = vpack.c.b16 %v1671, %v1670
    %v1746 = vpack.c.b16 %v1673, %v1672
    %v1747 = vpack.c.b16 %v1675, %v1674
    %v1748 = vpack.c.b16 %v1677, %v1676
    %v1749 = vpack.c.b16 %v1679, %v1678
    %v1750 = vpack.c.b16 %v1681, %v1680
    %v1751 = vpack.c.b16 %v1683, %v1682
    %v1752 = vpack.c.b16 %v1685, %v1684
    %v1753 = vpack.c.b16 %v1687, %v1686
    %v1754 = vpack.c.b16 %v1689, %v1688
    %v1755 = vpack.c.b16 %v1691, %v1690
    %v1756 = vpack.c.b16 %v1693, %v1692
    %v1757 = vpack.c.b16 %v1695, %v1694
    %v1758 = vpack.c.b16 %v1697, %v1696
    %v1759 = vpack.c.b16 %v1699, %v1698
    %v1760 = vpack.c.b16 %v1701, %v1700
    %v1761 = vpack.c.b16 %v1703, %v1702
    %v1762 = vpack.c.b16 %v1705, %v1704
    %v1763 = vpack.c.b16 %v1707, %v1706
    %1820 = vmatprep.subr.bf16.mxu0 0
    %1821 = vmatpush1.bf16.msra.mxu0 %v1715
    %1822 = vmatprep.subr.bf16.mxu0 0
    %1823 = vmatpush1.bf16.msra.mxu0 %v1714
    %1824 = vmatprep.subr.bf16.mxu0 0
    %1825 = vmatpush1.bf16.msra.mxu0 %v1713
    %1826 = vmatprep.subr.bf16.mxu0 0
    %1827 = vmatpush1.bf16.msra.mxu0 %v1712
    %1828 = vmatprep.subr.bf16.mxu0 0
    %1829 = vmatpush1.bf16.msra.mxu0 %v1711
    %1830 = vmatprep.subr.bf16.mxu0 0
    %1831 = vmatpush1.bf16.msra.mxu0 %v1710
    %1832 = vmatprep.subr.bf16.mxu0 0
    %1833 = vmatpush1.bf16.msra.mxu0 %v1709
    %1834 = vmatprep.subr.bf16.mxu0 0
    %1835 = vmatpush1.bf16.msra.mxu0 %v1708
    %1836 = vmatprep.subr.bf16.mxu0 0
    %1837 = vmatpush2.bf16.msra.mxu0 %v1723
    %1838 = vmatprep.subr.bf16.mxu0 0
    %1839 = vmatpush2.bf16.msra.mxu0 %v1722
    %1840 = vmatprep.subr.bf16.mxu0 0
    %1841 = vmatpush2.bf16.msra.mxu0 %v1721
    %1842 = vmatprep.subr.bf16.mxu0 0
    %1843 = vmatpush2.bf16.msra.mxu0 %v1720
    %1844 = vmatprep.subr.bf16.mxu0 0
    %1845 = vmatpush2.bf16.msra.mxu0 %v1719
    %1846 = vmatprep.subr.bf16.mxu0 0
    %1847 = vmatpush2.bf16.msra.mxu0 %v1718
    %1848 = vmatprep.subr.bf16.mxu0 0
    %1849 = vmatpush2.bf16.msra.mxu0 %v1717
    %1850 = vmatprep.subr.bf16.mxu0 0
    %1851 = vmatpush2.bf16.msra.mxu0 %v1716
    %1852 = vmatprep.mubr.bf16.mxu0 %v1364
    %1853 = vmatmul.mubr.bf16.gmra.mxu0 %v1363
    %v1854 = vpop.f32.mrf.mxu0
    %v1855 = vadd.f32 0.0, %v1854
    %v1856 = vpop.f32.mrf.mxu0
    %v1857 = vpop.f32.mrf.mxu0
    %v1858 = vpop.f32.mrf.mxu0
    %1859 = vdwg.mxu0
    %1860 = vmatprep.subr.bf16.mxu0 0
    %1861 = vmatpush1.bf16.msra.mxu0 %v1731
    %1862 = vmatprep.subr.bf16.mxu0 0
    %1863 = vmatpush1.bf16.msra.mxu0 %v1730
    %1864 = vmatprep.subr.bf16.mxu0 0
    %1865 = vmatpush1.bf16.msra.mxu0 %v1729
    %1866 = vmatprep.subr.bf16.mxu0 0
    %1867 = vmatpush1.bf16.msra.mxu0 %v1728
    %1868 = vmatprep.subr.bf16.mxu0 0
    %1869 = vmatpush1.bf16.msra.mxu0 %v1727
    %1870 = vmatprep.subr.bf16.mxu0 0
    %1871 = vmatpush1.bf16.msra.mxu0 %v1726
    %1872 = vmatprep.subr.bf16.mxu0 0
    %1873 = vmatpush1.bf16.msra.mxu0 %v1725
    %1874 = vmatprep.subr.bf16.mxu0 0
    %1875 = vmatpush1.bf16.msra.mxu0 %v1724
    %1876 = vmatprep.subr.bf16.mxu0 0
    %1877 = vmatpush2.bf16.msra.mxu0 %v1739
    %1878 = vmatprep.subr.bf16.mxu0 0
    %1879 = vmatpush2.bf16.msra.mxu0 %v1738
    %1880 = vmatprep.subr.bf16.mxu0 0
    %1881 = vmatpush2.bf16.msra.mxu0 %v1737
    %1882 = vmatprep.subr.bf16.mxu0 0
    %1883 = vmatpush2.bf16.msra.mxu0 %v1736
    %1884 = vmatprep.subr.bf16.mxu0 0
    %1885 = vmatpush2.bf16.msra.mxu0 %v1735
    %1886 = vmatprep.subr.bf16.mxu0 0
    %1887 = vmatpush2.bf16.msra.mxu0 %v1734
    %1888 = vmatprep.subr.bf16.mxu0 0
    %1889 = vmatpush2.bf16.msra.mxu0 %v1733
    %1890 = vmatprep.subr.bf16.mxu0 0
    %1891 = vmatpush2.bf16.msra.mxu0 %v1732
    %1892 = vmatprep.mubr.bf16.mxu0 %v1366
    %1893 = vmatmul.mubr.bf16.gmra.mxu0 %v1365
    %v1894 = vpop.f32.mrf.mxu0
    %v1895 = vadd.f32 %v1855, %v1894
    %v1896 = vpop.f32.mrf.mxu0
    %v1897 = vpop.f32.mrf.mxu0
    %v1898 = vpop.f32.mrf.mxu0
    %1899 = vdwg.mxu0
    %1900 = vmatprep.subr.bf16.mxu0 0
    %1901 = vmatpush1.bf16.msra.mxu0 %v1747
    %1902 = vmatprep.subr.bf16.mxu0 0
    %1903 = vmatpush1.bf16.msra.mxu0 %v1746
    %1904 = vmatprep.subr.bf16.mxu0 0
    %1905 = vmatpush1.bf16.msra.mxu0 %v1745
    %1906 = vmatprep.subr.bf16.mxu0 0
    %1907 = vmatpush1.bf16.msra.mxu0 %v1744
    %1908 = vmatprep.subr.bf16.mxu0 0
    %1909 = vmatpush1.bf16.msra.mxu0 %v1743
    %1910 = vmatprep.subr.bf16.mxu0 0
    %1911 = vmatpush1.bf16.msra.mxu0 %v1742
    %1912 = vmatprep.subr.bf16.mxu0 0
    %1913 = vmatpush1.bf16.msra.mxu0 %v1741
    %1914 = vmatprep.subr.bf16.mxu0 0
    %1915 = vmatpush1.bf16.msra.mxu0 %v1740
    %1916 = vmatprep.subr.bf16.mxu0 0
    %1917 = vmatpush2.bf16.msra.mxu0 %v1755
    %1918 = vmatprep.subr.bf16.mxu0 0
    %1919 = vmatpush2.bf16.msra.mxu0 %v1754
    %1920 = vmatprep.subr.bf16.mxu0 0
    %1921 = vmatpush2.bf16.msra.mxu0 %v1753
    %1922 = vmatprep.subr.bf16.mxu0 0
    %1923 = vmatpush2.bf16.msra.mxu0 %v1752
    %1924 = vmatprep.subr.bf16.mxu0 0
    %1925 = vmatpush2.bf16.msra.mxu0 %v1751
    %1926 = vmatprep.subr.bf16.mxu0 0
    %1927 = vmatpush2.bf16.msra.mxu0 %v1750
    %1928 = vmatprep.subr.bf16.mxu0 0
    %1929 = vmatpush2.bf16.msra.mxu0 %v1749
    %1930 = vmatprep.subr.bf16.mxu0 0
    %1931 = vmatpush2.bf16.msra.mxu0 %v1748
    %1932 = vmatprep.mubr.bf16.mxu0 %v1368
    %1933 = vmatmul.mubr.bf16.gmra.mxu0 %v1367
    %v1934 = vpop.f32.mrf.mxu0
    %v1935 = vadd.f32 %v1895, %v1934
    %v1936 = vpop.f32.mrf.mxu0
    %v1937 = vpop.f32.mrf.mxu0
    %v1938 = vpop.f32.mrf.mxu0
    %1939 = vdwg.mxu0
    %1940 = vmatprep.subr.bf16.mxu0 0
    %1941 = vmatpush1.bf16.msra.mxu0 %v1763
    %1942 = vmatprep.subr.bf16.mxu0 0
    %1943 = vmatpush1.bf16.msra.mxu0 %v1762
    %1944 = vmatprep.subr.bf16.mxu0 0
    %1945 = vmatpush1.bf16.msra.mxu0 %v1761
    %1946 = vmatprep.subr.bf16.mxu0 0
    %1947 = vmatpush1.bf16.msra.mxu0 %v1760
    %1948 = vmatprep.subr.bf16.mxu0 0
    %1949 = vmatpush1.bf16.msra.mxu0 %v1759
    %1950 = vmatprep.subr.bf16.mxu0 0
    %1951 = vmatpush1.bf16.msra.mxu0 %v1758
    %1952 = vmatprep.subr.bf16.mxu0 0
    %1953 = vmatpush1.bf16.msra.mxu0 %v1757
    %1954 = vmatprep.subr.bf16.mxu0 0
    %1955 = vmatpush1.bf16.msra.mxu0 %v1756
    %1956 = vmatprep.subr.bf16.mxu0 0
    %1957 = vmatpush2.bf16.msra.mxu0 0
    %1958 = vmatprep.subr.bf16.mxu0 0
    %1959 = vmatpush2.bf16.msra.mxu0 0
    %1960 = vmatprep.subr.bf16.mxu0 0
    %1961 = vmatpush2.bf16.msra.mxu0 0
    %1962 = vmatprep.subr.bf16.mxu0 0
    %1963 = vmatpush2.bf16.msra.mxu0 0
    %1964 = vmatprep.subr.bf16.mxu0 0
    %1965 = vmatpush2.bf16.msra.mxu0 0
    %1966 = vmatprep.subr.bf16.mxu0 0
    %1967 = vmatpush2.bf16.msra.mxu0 0
    %1968 = vmatprep.subr.bf16.mxu0 0
    %1969 = vmatpush2.bf16.msra.mxu0 0
    %1970 = vmatprep.subr.bf16.mxu0 0
    %1971 = vmatpush2.bf16.msra.mxu0 0
    %1972 = vmatprep.mubr.bf16.mxu0 0
    %1973 = vmatmul.mubr.bf16.gmra.mxu0 %v1369
    %v1974 = vpop.f32.mrf.mxu0
    %v1975 = vadd.f32 %v1935, %v1974
    %v1976 = vpop.f32.mrf.mxu0
    %v1977 = vpop.f32.mrf.mxu0
    %v1978 = vpop.f32.mrf.mxu0
    %1979 = vdwg.mxu0
    %v2092 = vunpack.c.l.b16 %v1193
    %v2093 = vunpack.c.l.b16 %v1194
    %v2094 = vunpack.c.l.b16 %v1195
    %v2095 = vunpack.c.l.b16 %v1196
    %v2096 = vunpack.c.l.b16 %v1197
    %v2097 = vunpack.c.l.b16 %v1198
    %v2098 = vunpack.c.l.b16 %v1199
    %v2099 = vunpack.c.l.b16 %v1200
    %v2100 = vunpack.c.l.b16 %v1201
    %v2101 = vunpack.c.l.b16 %v1202
    %v2102 = vunpack.c.l.b16 %v1203
    %v2103 = vunpack.c.l.b16 %v1204
    %v2104 = vunpack.c.l.b16 %v1205
    %v2105 = vunpack.c.l.b16 %v1206
    %v2106 = vunpack.c.l.b16 %v1207
    %v2107 = vunpack.c.l.b16 %v1208
    %v2108 = vunpack.c.l.b16 %v1209
    %v2109 = vunpack.c.l.b16 %v1210
    %v2110 = vunpack.c.l.b16 %v1211
    %v2111 = vunpack.c.l.b16 %v1212
    %v2112 = vunpack.c.l.b16 %v1213
    %v2113 = vunpack.c.l.b16 %v1214
    %v2114 = vunpack.c.l.b16 %v1215
    %v2115 = vunpack.c.l.b16 %v1216
    %v2116 = vunpack.c.l.b16 %v1217
    %v2117 = vunpack.c.l.b16 %v1218
    %v2118 = vunpack.c.l.b16 %v1219
    %v2119 = vunpack.c.l.b16 %v1220
    %v2120 = vunpack.c.l.b16 %v1221
    %v2121 = vunpack.c.l.b16 %v1222
    %v2122 = vunpack.c.l.b16 %v1223
    %v2123 = vunpack.c.l.b16 %v1224
    %v2124 = vunpack.c.l.b16 %v1225
    %v2125 = vunpack.c.l.b16 %v1226
    %v2126 = vunpack.c.l.b16 %v1227
    %v2127 = vunpack.c.l.b16 %v1228
    %v2128 = vunpack.c.l.b16 %v1229
    %v2129 = vunpack.c.l.b16 %v1230
    %v2130 = vunpack.c.l.b16 %v1231
    %v2131 = vunpack.c.l.b16 %v1232
    %v2132 = vunpack.c.l.b16 %v1233
    %v2133 = vunpack.c.l.b16 %v1234
    %v2134 = vunpack.c.l.b16 %v1235
    %v2135 = vunpack.c.l.b16 %v1236
    %v2136 = vunpack.c.l.b16 %v1237
    %v2137 = vunpack.c.l.b16 %v1238
    %v2138 = vunpack.c.l.b16 %v1239
    %v2139 = vunpack.c.l.b16 %v1240
    %v2140 = vunpack.c.l.b16 %v1241
    %v2141 = vunpack.c.l.b16 %v1242
    %v2142 = vunpack.c.l.b16 %v1243
    %v2143 = vunpack.c.l.b16 %v1244
    %v2144 = vunpack.c.l.b16 %v1245
    %v2145 = vunpack.c.l.b16 %v1246
    %v2146 = vunpack.c.l.b16 %v1247
    %v2147 = vunpack.c.l.b16 %v1248
    %v2148 = vunpack.c.l.b16 %v1249
    %v2149 = vunpack.c.l.b16 %v1250
    %v2150 = vunpack.c.l.b16 %v1251
    %v2151 = vunpack.c.l.b16 %v1252
    %v2152 = vunpack.c.l.b16 %v1253
    %v2153 = vunpack.c.l.b16 %v1254
    %v2154 = vunpack.c.l.b16 %v1255
    %v2155 = vunpack.c.l.b16 %v1256
    %v2156 = vunpack.c.l.b16 %v1257
    %v2157 = vunpack.c.l.b16 %v1258
    %v2158 = vunpack.c.l.b16 %v1259
    %v2159 = vunpack.c.l.b16 %v1260
    %v2160 = vunpack.c.l.b16 %v1261
    %v2161 = vunpack.c.l.b16 %v1262
    %v2162 = vunpack.c.l.b16 %v1263
    %v2163 = vunpack.c.l.b16 %v1264
    %v2164 = vunpack.c.l.b16 %v1265
    %v2165 = vunpack.c.l.b16 %v1266
    %v2166 = vunpack.c.l.b16 %v1267
    %v2167 = vunpack.c.l.b16 %v1268
    %v2168 = vunpack.c.l.b16 %v1269
    %v2169 = vunpack.c.l.b16 %v1270
    %v2170 = vunpack.c.l.b16 %v1271
    %v2171 = vunpack.c.l.b16 %v1272
    %v2172 = vunpack.c.l.b16 %v1273
    %v2173 = vunpack.c.l.b16 %v1274
    %v2174 = vunpack.c.l.b16 %v1275
    %v2175 = vunpack.c.l.b16 %v1276
    %v2176 = vunpack.c.l.b16 %v1277
    %v2177 = vunpack.c.l.b16 %v1278
    %v2178 = vunpack.c.l.b16 %v1279
    %v2179 = vunpack.c.l.b16 %v1280
    %v2180 = vunpack.c.l.b16 %v1281
    %v2181 = vunpack.c.l.b16 %v1282
    %v2182 = vunpack.c.l.b16 %v1283
    %v2183 = vunpack.c.l.b16 %v1284
    %v2184 = vunpack.c.l.b16 %v1285
    %v2185 = vunpack.c.l.b16 %v1286
    %v2186 = vunpack.c.l.b16 %v1287
    %v2187 = vunpack.c.l.b16 %v1288
    %v2188 = vunpack.c.l.b16 %v1289
    %v2189 = vunpack.c.l.b16 %v1290
    %v2190 = vunpack.c.l.b16 %v1291
    %v2191 = vunpack.c.l.b16 %v1292
    %v2192 = vunpack.c.l.b16 %v1293
    %v2193 = vunpack.c.l.b16 %v1294
    %v2194 = vunpack.c.l.b16 %v1295
    %v2195 = vunpack.c.l.b16 %v1296
    %v2196 = vunpack.c.l.b16 %v1297
    %v2197 = vunpack.c.l.b16 %v1298
    %v2198 = vunpack.c.l.b16 %v1299
    %v2199 = vunpack.c.l.b16 %v1300
    %v2200 = vunpack.c.l.b16 %v1301
    %v2201 = vunpack.c.l.b16 %v1302
    %v2202 = vunpack.c.l.b16 %v1303
    %v2203 = vunpack.c.l.b16 %v1304
    %v2204 = vpack.c.b16 %v2093, %v2092
    %v2205 = vpack.c.b16 %v2095, %v2094
    %v2206 = vpack.c.b16 %v2097, %v2096
    %v2207 = vpack.c.b16 %v2099, %v2098
    %v2208 = vpack.c.b16 %v2101, %v2100
    %v2209 = vpack.c.b16 %v2103, %v2102
    %v2210 = vpack.c.b16 %v2105, %v2104
    %v2211 = vpack.c.b16 %v2107, %v2106
    %v2212 = vpack.c.b16 %v2109, %v2108
    %v2213 = vpack.c.b16 %v2111, %v2110
    %v2214 = vpack.c.b16 %v2113, %v2112
    %v2215 = vpack.c.b16 %v2115, %v2114
    %v2216 = vpack.c.b16 %v2117, %v2116
    %v2217 = vpack.c.b16 %v2119, %v2118
    %v2218 = vpack.c.b16 %v2121, %v2120
    %v2219 = vpack.c.b16 %v2123, %v2122
    %v2220 = vpack.c.b16 %v2125, %v2124
    %v2221 = vpack.c.b16 %v2127, %v2126
    %v2222 = vpack.c.b16 %v2129, %v2128
    %v2223 = vpack.c.b16 %v2131, %v2130
    %v2224 = vpack.c.b16 %v2133, %v2132
    %v2225 = vpack.c.b16 %v2135, %v2134
    %v2226 = vpack.c.b16 %v2137, %v2136
    %v2227 = vpack.c.b16 %v2139, %v2138
    %v2228 = vpack.c.b16 %v2141, %v2140
    %v2229 = vpack.c.b16 %v2143, %v2142
    %v2230 = vpack.c.b16 %v2145, %v2144
    %v2231 = vpack.c.b16 %v2147, %v2146
    %v2232 = vpack.c.b16 %v2149, %v2148
    %v2233 = vpack.c.b16 %v2151, %v2150
    %v2234 = vpack.c.b16 %v2153, %v2152
    %v2235 = vpack.c.b16 %v2155, %v2154
    %v2236 = vpack.c.b16 %v2157, %v2156
    %v2237 = vpack.c.b16 %v2159, %v2158
    %v2238 = vpack.c.b16 %v2161, %v2160
    %v2239 = vpack.c.b16 %v2163, %v2162
    %v2240 = vpack.c.b16 %v2165, %v2164
    %v2241 = vpack.c.b16 %v2167, %v2166
    %v2242 = vpack.c.b16 %v2169, %v2168
    %v2243 = vpack.c.b16 %v2171, %v2170
    %v2244 = vpack.c.b16 %v2173, %v2172
    %v2245 = vpack.c.b16 %v2175, %v2174
    %v2246 = vpack.c.b16 %v2177, %v2176
    %v2247 = vpack.c.b16 %v2179, %v2178
    %v2248 = vpack.c.b16 %v2181, %v2180
    %v2249 = vpack.c.b16 %v2183, %v2182
    %v2250 = vpack.c.b16 %v2185, %v2184
    %v2251 = vpack.c.b16 %v2187, %v2186
    %v2252 = vpack.c.b16 %v2189, %v2188
    %v2253 = vpack.c.b16 %v2191, %v2190
    %v2254 = vpack.c.b16 %v2193, %v2192
    %v2255 = vpack.c.b16 %v2195, %v2194
    %v2256 = vpack.c.b16 %v2197, %v2196
    %v2257 = vpack.c.b16 %v2199, %v2198
    %v2258 = vpack.c.b16 %v2201, %v2200
    %v2259 = vpack.c.b16 %v2203, %v2202
    %2316 = vmatprep.subr.bf16.mxu0 0
    %2317 = vmatpush1.bf16.msra.mxu0 %v2211
    %2318 = vmatprep.subr.bf16.mxu0 0
    %2319 = vmatpush1.bf16.msra.mxu0 %v2210
    %2320 = vmatprep.subr.bf16.mxu0 0
    %2321 = vmatpush1.bf16.msra.mxu0 %v2209
    %2322 = vmatprep.subr.bf16.mxu0 0
    %2323 = vmatpush1.bf16.msra.mxu0 %v2208
    %2324 = vmatprep.subr.bf16.mxu0 0
    %2325 = vmatpush1.bf16.msra.mxu0 %v2207
    %2326 = vmatprep.subr.bf16.mxu0 0
    %2327 = vmatpush1.bf16.msra.mxu0 %v2206
    %2328 = vmatprep.subr.bf16.mxu0 0
    %2329 = vmatpush1.bf16.msra.mxu0 %v2205
    %2330 = vmatprep.subr.bf16.mxu0 0
    %2331 = vmatpush1.bf16.msra.mxu0 %v2204
    %2332 = vmatprep.subr.bf16.mxu0 0
    %2333 = vmatpush2.bf16.msra.mxu0 %v2219
    %2334 = vmatprep.subr.bf16.mxu0 0
    %2335 = vmatpush2.bf16.msra.mxu0 %v2218
    %2336 = vmatprep.subr.bf16.mxu0 0
    %2337 = vmatpush2.bf16.msra.mxu0 %v2217
    %2338 = vmatprep.subr.bf16.mxu0 0
    %2339 = vmatpush2.bf16.msra.mxu0 %v2216
    %2340 = vmatprep.subr.bf16.mxu0 0
    %2341 = vmatpush2.bf16.msra.mxu0 %v2215
    %2342 = vmatprep.subr.bf16.mxu0 0
    %2343 = vmatpush2.bf16.msra.mxu0 %v2214
    %2344 = vmatprep.subr.bf16.mxu0 0
    %2345 = vmatpush2.bf16.msra.mxu0 %v2213
    %2346 = vmatprep.subr.bf16.mxu0 0
    %2347 = vmatpush2.bf16.msra.mxu0 %v2212
    %2348 = vmatprep.mubr.bf16.mxu0 %v1183
    %2349 = vmatmul.mubr.bf16.gmra.mxu0 %v1182
    %v2350 = vpop.f32.mrf.mxu0
    %v2351 = vadd.f32 %v1975, %v2350
    %v2352 = vpop.f32.mrf.mxu0
    %v2353 = vpop.f32.mrf.mxu0
    %v2354 = vpop.f32.mrf.mxu0
    %2355 = vdwg.mxu0
    %2356 = vmatprep.subr.bf16.mxu0 0
    %2357 = vmatpush1.bf16.msra.mxu0 %v2227
    %2358 = vmatprep.subr.bf16.mxu0 0
    %2359 = vmatpush1.bf16.msra.mxu0 %v2226
    %2360 = vmatprep.subr.bf16.mxu0 0
    %2361 = vmatpush1.bf16.msra.mxu0 %v2225
    %2362 = vmatprep.subr.bf16.mxu0 0
    %2363 = vmatpush1.bf16.msra.mxu0 %v2224
    %2364 = vmatprep.subr.bf16.mxu0 0
    %2365 = vmatpush1.bf16.msra.mxu0 %v2223
    %2366 = vmatprep.subr.bf16.mxu0 0
    %2367 = vmatpush1.bf16.msra.mxu0 %v2222
    %2368 = vmatprep.subr.bf16.mxu0 0
    %2369 = vmatpush1.bf16.msra.mxu0 %v2221
    %2370 = vmatprep.subr.bf16.mxu0 0
    %2371 = vmatpush1.bf16.msra.mxu0 %v2220
    %2372 = vmatprep.subr.bf16.mxu0 0
    %2373 = vmatpush2.bf16.msra.mxu0 %v2235
    %2374 = vmatprep.subr.bf16.mxu0 0
    %2375 = vmatpush2.bf16.msra.mxu0 %v2234
    %2376 = vmatprep.subr.bf16.mxu0 0
    %2377 = vmatpush2.bf16.msra.mxu0 %v2233
    %2378 = vmatprep.subr.bf16.mxu0 0
    %2379 = vmatpush2.bf16.msra.mxu0 %v2232
    %2380 = vmatprep.subr.bf16.mxu0 0
    %2381 = vmatpush2.bf16.msra.mxu0 %v2231
    %2382 = vmatprep.subr.bf16.mxu0 0
    %2383 = vmatpush2.bf16.msra.mxu0 %v2230
    %2384 = vmatprep.subr.bf16.mxu0 0
    %2385 = vmatpush2.bf16.msra.mxu0 %v2229
    %2386 = vmatprep.subr.bf16.mxu0 0
    %2387 = vmatpush2.bf16.msra.mxu0 %v2228
    %2388 = vmatprep.mubr.bf16.mxu0 %v1185
    %2389 = vmatmul.mubr.bf16.gmra.mxu0 %v1184
    %v2390 = vpop.f32.mrf.mxu0
    %v2391 = vadd.f32 %v2351, %v2390
    %v2392 = vpop.f32.mrf.mxu0
    %v2393 = vpop.f32.mrf.mxu0
    %v2394 = vpop.f32.mrf.mxu0
    %2395 = vdwg.mxu0
    %2396 = vmatprep.subr.bf16.mxu0 0
    %2397 = vmatpush1.bf16.msra.mxu0 %v2243
    %2398 = vmatprep.subr.bf16.mxu0 0
    %2399 = vmatpush1.bf16.msra.mxu0 %v2242
    %2400 = vmatprep.subr.bf16.mxu0 0
    %2401 = vmatpush1.bf16.msra.mxu0 %v2241
    %2402 = vmatprep.subr.bf16.mxu0 0
    %2403 = vmatpush1.bf16.msra.mxu0 %v2240
    %2404 = vmatprep.subr.bf16.mxu0 0
    %2405 = vmatpush1.bf16.msra.mxu0 %v2239
    %2406 = vmatprep.subr.bf16.mxu0 0
    %2407 = vmatpush1.bf16.msra.mxu0 %v2238
    %2408 = vmatprep.subr.bf16.mxu0 0
    %2409 = vmatpush1.bf16.msra.mxu0 %v2237
    %2410 = vmatprep.subr.bf16.mxu0 0
    %2411 = vmatpush1.bf16.msra.mxu0 %v2236
    %2412 = vmatprep.subr.bf16.mxu0 0
    %2413 = vmatpush2.bf16.msra.mxu0 %v2251
    %2414 = vmatprep.subr.bf16.mxu0 0
    %2415 = vmatpush2.bf16.msra.mxu0 %v2250
    %2416 = vmatprep.subr.bf16.mxu0 0
    %2417 = vmatpush2.bf16.msra.mxu0 %v2249
    %2418 = vmatprep.subr.bf16.mxu0 0
    %2419 = vmatpush2.bf16.msra.mxu0 %v2248
    %2420 = vmatprep.subr.bf16.mxu0 0
    %2421 = vmatpush2.bf16.msra.mxu0 %v2247
    %2422 = vmatprep.subr.bf16.mxu0 0
    %2423 = vmatpush2.bf16.msra.mxu0 %v2246
    %2424 = vmatprep.subr.bf16.mxu0 0
    %2425 = vmatpush2.bf16.msra.mxu0 %v2245
    %2426 = vmatprep.subr.bf16.mxu0 0
    %2427 = vmatpush2.bf16.msra.mxu0 %v2244
    %2428 = vmatprep.mubr.bf16.mxu0 %v1187
    %2429 = vmatmul.mubr.bf16.gmra.mxu0 %v1186
    %v2430 = vpop.f32.mrf.mxu0
    %v2431 = vadd.f32 %v2391, %v2430
    %v2432 = vpop.f32.mrf.mxu0
    %v2433 = vpop.f32.mrf.mxu0
    %v2434 = vpop.f32.mrf.mxu0
    %2435 = vdwg.mxu0
    %2436 = vmatprep.subr.bf16.mxu0 0
    %2437 = vmatpush1.bf16.msra.mxu0 %v2259
    %2438 = vmatprep.subr.bf16.mxu0 0
    %2439 = vmatpush1.bf16.msra.mxu0 %v2258
    %2440 = vmatprep.subr.bf16.mxu0 0
    %2441 = vmatpush1.bf16.msra.mxu0 %v2257
    %2442 = vmatprep.subr.bf16.mxu0 0
    %2443 = vmatpush1.bf16.msra.mxu0 %v2256
    %2444 = vmatprep.subr.bf16.mxu0 0
    %2445 = vmatpush1.bf16.msra.mxu0 %v2255
    %2446 = vmatprep.subr.bf16.mxu0 0
    %2447 = vmatpush1.bf16.msra.mxu0 %v2254
    %2448 = vmatprep.subr.bf16.mxu0 0
    %2449 = vmatpush1.bf16.msra.mxu0 %v2253
    %2450 = vmatprep.subr.bf16.mxu0 0
    %2451 = vmatpush1.bf16.msra.mxu0 %v2252
    %2452 = vmatprep.subr.bf16.mxu0 0
    %2453 = vmatpush2.bf16.msra.mxu0 0
    %2454 = vmatprep.subr.bf16.mxu0 0
    %2455 = vmatpush2.bf16.msra.mxu0 0
    %2456 = vmatprep.subr.bf16.mxu0 0
    %2457 = vmatpush2.bf16.msra.mxu0 0
    %2458 = vmatprep.subr.bf16.mxu0 0
    %2459 = vmatpush2.bf16.msra.mxu0 0
    %2460 = vmatprep.subr.bf16.mxu0 0
    %2461 = vmatpush2.bf16.msra.mxu0 0
    %2462 = vmatprep.subr.bf16.mxu0 0
    %2463 = vmatpush2.bf16.msra.mxu0 0
    %2464 = vmatprep.subr.bf16.mxu0 0
    %2465 = vmatpush2.bf16.msra.mxu0 0
    %2466 = vmatprep.subr.bf16.mxu0 0
    %2467 = vmatpush2.bf16.msra.mxu0 0
    %2468 = vmatprep.mubr.bf16.mxu0 0
    %2469 = vmatmul.mubr.bf16.gmra.mxu0 %v1188
    %v2470 = vpop.f32.mrf.mxu0
    %v2471 = vadd.f32 %v2431, %v2470
    %v2472 = vpop.f32.mrf.mxu0
    %v2473 = vpop.f32.mrf.mxu0
    %v2474 = vpop.f32.mrf.mxu0
    %2475 = vdwg.mxu0
    %s2476 = sld [smem:[#allocation7 + $0x2]]
    %v2477 = vstv %s2476
    %v2478 = vadd.f32 %v1110, %v2477
    %v2479 = vadd.f32 %v1111, %v2477
    %v2480 = vxor.u32 %v2478, 2147483648
    %v2481 = vxor.u32 %v2479, 2147483648
    %v2482 = vmul.f32 %v2480, 1.442695
    %v2483 = vpow.pop %v2482
    %v2484 = vmul.f32 %v2481, 1.442695
    %v2485 = vpow.pop %v2484
    %v2486 = vadd.f32 %v2483, 1.0
    %v2487 = vadd.f32 %v2485, 1.0
    %v2488 = vrcp.pop %v2486
    %v2489 = vmul.f32 1.0, %v2488
    %v2490 = vrcp.pop %v2487
    %v2491 = vmul.f32 1.0, %v2490
    %v2494 = vcombine.high %v2489, %v2489
    %v2496 = vunpack.c.l.s4 1983009808
    %v2497 = vunpack.c.0.s8 %v2496
    %v2498 = vlaneseq
    %v2499 = vshrl.u32 %v2498, 7
    %v2500 = vsub.s32 %v2497, %v2499
    %v2501 = vrot.slane %v2489, %v2500
    %v2503 = vunpack.c.l.s4 1983009808
    %v2504 = vunpack.c.0.s8 %v2503
    %v2505 = vlaneseq
    %v2506 = vshrl.u32 %v2505, 7
    %v2507 = vsub.s32 %v2504, %v2506
    %v2508 = vrot.slane %v2494, %v2507
    %v2509 = vcombine.high %v2501, %v2501
    %v2510 = vcombine.high %v2508, %v2508
    %v2511 = vcombine.high %v2491, %v2491
    %v2513 = vunpack.c.l.s4 1983009808
    %v2514 = vunpack.c.0.s8 %v2513
    %v2515 = vlaneseq
    %v2516 = vshrl.u32 %v2515, 7
    %v2517 = vsub.s32 %v2514, %v2516
    %v2518 = vrot.slane %v2491, %v2517
    %v2520 = vunpack.c.l.s4 1983009808
    %v2521 = vunpack.c.0.s8 %v2520
    %v2522 = vlaneseq
    %v2523 = vshrl.u32 %v2522, 7
    %v2524 = vsub.s32 %v2521, %v2523
    %v2525 = vrot.slane %v2511, %v2524
    %v2526 = vcombine.high %v2518, %v2518
    %v2534 = vpack.c.bf16 %v2501, %v2501
    %v2535 = vpack.c.bf16 %v2509, %v2509
    %v2536 = vpack.c.bf16 %v2508, %v2508
    %v2537 = vpack.c.bf16 %v2510, %v2510
    %v2538 = vpack.c.bf16 %v2518, %v2518
    %v2539 = vpack.c.bf16 %v2526, %v2526
    %v2540 = vpack.c.bf16 %v2525, %v2525
    %s2541 = sshll.u32 %s1190, 4
    %2542 = dma.done %s362, %s2541
    %v2543 = vld [vmem:[%s361] sm:$0xf]
    %v2544 = vld [vmem:[%s361 + $0x4] sm:$0xf]
    %v2545 = vld [vmem:[%s361 + $0x8] sm:$0xf]
    %v2546 = vld [vmem:[%s361 + $0xc] sm:$0xf]
    %v2547 = vld [vmem:[%s361 + $0x10] sm:$0xf]
    %v2548 = vld [vmem:[%s361 + $0x14] sm:$0xf]
    %v2549 = vld [vmem:[%s361 + $0x18] sm:$0xf]
    %v2550 = vld [vmem:[%s361 + $0x1c] sm:$0xf]
    %v2551 = vld [vmem:[%s361 + $0x20] sm:$0xf]
    %v2552 = vld [vmem:[%s361 + $0x24] sm:$0xf]
    %v2553 = vld [vmem:[%s361 + $0x28] sm:$0xf]
    %v2554 = vld [vmem:[%s361 + $0x2c] sm:$0xf]
    %v2555 = vld [vmem:[%s361 + $0x30] sm:$0xf]
    %v2556 = vld [vmem:[%s361 + $0x34] sm:$0xf]
    %v2557 = vld [vmem:[%s361 + $0x38] sm:$0xf]
    %v2558 = vld [vmem:[%s361 + $0x3c] sm:$0xf]
    %v2559 = vld [vmem:[%s361 + $0x40] sm:$0xf]
    %v2560 = vld [vmem:[%s361 + $0x44] sm:$0xf]
    %v2561 = vld [vmem:[%s361 + $0x48] sm:$0xf]
    %v2562 = vld [vmem:[%s361 + $0x4c] sm:$0xf]
    %v2563 = vld [vmem:[%s361 + $0x50] sm:$0xf]
    %v2564 = vld [vmem:[%s361 + $0x54] sm:$0xf]
    %v2565 = vld [vmem:[%s361 + $0x58] sm:$0xf]
    %v2566 = vld [vmem:[%s361 + $0x5c] sm:$0xf]
    %v2567 = vld [vmem:[%s361 + $0x60] sm:$0xf]
    %v2568 = vld [vmem:[%s361 + $0x64] sm:$0xf]
    %v2569 = vld [vmem:[%s361 + $0x68] sm:$0xf]
    %v2570 = vld [vmem:[%s361 + $0x6c] sm:$0xf]
    %v2571 = vld [vmem:[%s361 + $0x70] sm:$0xf]
    %v2572 = vld [vmem:[%s361 + $0x74] sm:$0xf]
    %v2573 = vld [vmem:[%s361 + $0x78] sm:$0xf]
    %v2574 = vld [vmem:[%s361 + $0x7c] sm:$0xf]
    %v2575 = vld [vmem:[%s361 + $0x80] sm:$0xf]
    %v2576 = vld [vmem:[%s361 + $0x84] sm:$0xf]
    %v2577 = vld [vmem:[%s361 + $0x88] sm:$0xf]
    %v2578 = vld [vmem:[%s361 + $0x8c] sm:$0xf]
    %v2579 = vld [vmem:[%s361 + $0x90] sm:$0xf]
    %v2580 = vld [vmem:[%s361 + $0x94] sm:$0xf]
    %v2581 = vld [vmem:[%s361 + $0x98] sm:$0xf]
    %v2582 = vld [vmem:[%s361 + $0x9c] sm:$0xf]
    %v2583 = vld [vmem:[%s361 + $0xa0] sm:$0xf]
    %v2584 = vld [vmem:[%s361 + $0xa4] sm:$0xf]
    %v2585 = vld [vmem:[%s361 + $0xa8] sm:$0xf]
    %v2586 = vld [vmem:[%s361 + $0xac] sm:$0xf]
    %v2587 = vld [vmem:[%s361 + $0xb0] sm:$0xf]
    %v2588 = vld [vmem:[%s361 + $0xb4] sm:$0xf]
    %v2589 = vld [vmem:[%s361 + $0xb8] sm:$0xf]
    %v2590 = vld [vmem:[%s361 + $0xbc] sm:$0xf]
    %v2591 = vld [vmem:[%s361 + $0xc0] sm:$0xf]
    %v2592 = vld [vmem:[%s361 + $0xc4] sm:$0xf]
    %v2593 = vld [vmem:[%s361 + $0xc8] sm:$0xf]
    %v2594 = vld [vmem:[%s361 + $0xcc] sm:$0xf]
    %v2595 = vld [vmem:[%s361 + $0xd0] sm:$0xf]
    %v2596 = vld [vmem:[%s361 + $0xd4] sm:$0xf]
    %v2597 = vld [vmem:[%s361 + $0xd8] sm:$0xf]
    %v2598 = vld [vmem:[%s361 + $0xdc] sm:$0xf]
    %v2599 = vld [vmem:[%s361 + $0xe0] sm:$0xf]
    %v2600 = vld [vmem:[%s361 + $0xe4] sm:$0xf]
    %v2601 = vld [vmem:[%s361 + $0xe8] sm:$0xf]
    %v2602 = vld [vmem:[%s361 + $0xec] sm:$0xf]
    %v2603 = vld [vmem:[%s361 + $0xf0] sm:$0xf]
    %v2604 = vld [vmem:[%s361 + $0xf4] sm:$0xf]
    %v2605 = vld [vmem:[%s361 + $0xf8] sm:$0xf]
    %v2606 = vld [vmem:[%s361 + $0xfc] sm:$0xf]
    %v2607 = vld [vmem:[%s361 + $0x100] sm:$0xf]
    %v2608 = vld [vmem:[%s361 + $0x104] sm:$0xf]
    %v2609 = vld [vmem:[%s361 + $0x108] sm:$0xf]
    %v2610 = vld [vmem:[%s361 + $0x10c] sm:$0xf]
    %v2611 = vld [vmem:[%s361 + $0x110] sm:$0xf]
    %v2612 = vld [vmem:[%s361 + $0x114] sm:$0xf]
    %v2613 = vld [vmem:[%s361 + $0x118] sm:$0xf]
    %v2614 = vld [vmem:[%s361 + $0x11c] sm:$0xf]
    %v2615 = vld [vmem:[%s361 + $0x120] sm:$0xf]
    %v2616 = vld [vmem:[%s361 + $0x124] sm:$0xf]
    %v2617 = vld [vmem:[%s361 + $0x128] sm:$0xf]
    %v2618 = vld [vmem:[%s361 + $0x12c] sm:$0xf]
    %v2619 = vld [vmem:[%s361 + $0x130] sm:$0xf]
    %v2620 = vld [vmem:[%s361 + $0x134] sm:$0xf]
    %v2621 = vld [vmem:[%s361 + $0x138] sm:$0xf]
    %v2622 = vld [vmem:[%s361 + $0x13c] sm:$0xf]
    %v2623 = vld [vmem:[%s361 + $0x140] sm:$0xf]
    %v2624 = vld [vmem:[%s361 + $0x144] sm:$0xf]
    %v2625 = vld [vmem:[%s361 + $0x148] sm:$0xf]
    %v2626 = vld [vmem:[%s361 + $0x14c] sm:$0xf]
    %v2627 = vld [vmem:[%s361 + $0x150] sm:$0xf]
    %v2628 = vld [vmem:[%s361 + $0x154] sm:$0xf]
    %v2629 = vld [vmem:[%s361 + $0x158] sm:$0xf]
    %v2630 = vld [vmem:[%s361 + $0x15c] sm:$0xf]
    %v2631 = vld [vmem:[%s361 + $0x160] sm:$0xf]
    %v2632 = vld [vmem:[%s361 + $0x164] sm:$0xf]
    %v2633 = vld [vmem:[%s361 + $0x168] sm:$0xf]
    %v2634 = vld [vmem:[%s361 + $0x16c] sm:$0xf]
    %v2635 = vld [vmem:[%s361 + $0x170] sm:$0xf]
    %v2636 = vld [vmem:[%s361 + $0x174] sm:$0xf]
    %v2637 = vld [vmem:[%s361 + $0x178] sm:$0xf]
    %v2638 = vld [vmem:[%s361 + $0x17c] sm:$0xf]
    %v2639 = vld [vmem:[%s361 + $0x180] sm:$0xf]
    %v2640 = vld [vmem:[%s361 + $0x184] sm:$0xf]
    %v2641 = vld [vmem:[%s361 + $0x188] sm:$0xf]
    %v2642 = vld [vmem:[%s361 + $0x18c] sm:$0xf]
    %v2643 = vld [vmem:[%s361 + $0x190] sm:$0xf]
    %v2644 = vld [vmem:[%s361 + $0x194] sm:$0xf]
    %v2645 = vld [vmem:[%s361 + $0x198] sm:$0xf]
    %v2646 = vld [vmem:[%s361 + $0x19c] sm:$0xf]
    %v2647 = vld [vmem:[%s361 + $0x1a0] sm:$0xf]
    %v2648 = vld [vmem:[%s361 + $0x1a4] sm:$0xf]
    %v2649 = vld [vmem:[%s361 + $0x1a8] sm:$0xf]
    %v2650 = vld [vmem:[%s361 + $0x1ac] sm:$0xf]
    %v2651 = vld [vmem:[%s361 + $0x1b0] sm:$0xf]
    %v2652 = vld [vmem:[%s361 + $0x1b4] sm:$0xf]
    %v2653 = vld [vmem:[%s361 + $0x1b8] sm:$0xf]
    %v2654 = vld [vmem:[%s361 + $0x1bc] sm:$0xf]
    %v2767 = vunpack.c.l.b16 %v2543
    %v2768 = vunpack.c.l.b16 %v2544
    %v2769 = vunpack.c.l.b16 %v2545
    %v2770 = vunpack.c.l.b16 %v2546
    %v2771 = vunpack.c.l.b16 %v2547
    %v2772 = vunpack.c.l.b16 %v2548
    %v2773 = vunpack.c.l.b16 %v2549
    %v2774 = vunpack.c.l.b16 %v2550
    %v2775 = vunpack.c.l.b16 %v2551
    %v2776 = vunpack.c.l.b16 %v2552
    %v2777 = vunpack.c.l.b16 %v2553
    %v2778 = vunpack.c.l.b16 %v2554
    %v2779 = vunpack.c.l.b16 %v2555
    %v2780 = vunpack.c.l.b16 %v2556
    %v2781 = vunpack.c.l.b16 %v2557
    %v2782 = vunpack.c.l.b16 %v2558
    %v2783 = vunpack.c.l.b16 %v2559
    %v2784 = vunpack.c.l.b16 %v2560
    %v2785 = vunpack.c.l.b16 %v2561
    %v2786 = vunpack.c.l.b16 %v2562
    %v2787 = vunpack.c.l.b16 %v2563
    %v2788 = vunpack.c.l.b16 %v2564
    %v2789 = vunpack.c.l.b16 %v2565
    %v2790 = vunpack.c.l.b16 %v2566
    %v2791 = vunpack.c.l.b16 %v2567
    %v2792 = vunpack.c.l.b16 %v2568
    %v2793 = vunpack.c.l.b16 %v2569
    %v2794 = vunpack.c.l.b16 %v2570
    %v2795 = vunpack.c.l.b16 %v2571
    %v2796 = vunpack.c.l.b16 %v2572
    %v2797 = vunpack.c.l.b16 %v2573
    %v2798 = vunpack.c.l.b16 %v2574
    %v2799 = vunpack.c.l.b16 %v2575
    %v2800 = vunpack.c.l.b16 %v2576
    %v2801 = vunpack.c.l.b16 %v2577
    %v2802 = vunpack.c.l.b16 %v2578
    %v2803 = vunpack.c.l.b16 %v2579
    %v2804 = vunpack.c.l.b16 %v2580
    %v2805 = vunpack.c.l.b16 %v2581
    %v2806 = vunpack.c.l.b16 %v2582
    %v2807 = vunpack.c.l.b16 %v2583
    %v2808 = vunpack.c.l.b16 %v2584
    %v2809 = vunpack.c.l.b16 %v2585
    %v2810 = vunpack.c.l.b16 %v2586
    %v2811 = vunpack.c.l.b16 %v2587
    %v2812 = vunpack.c.l.b16 %v2588
    %v2813 = vunpack.c.l.b16 %v2589
    %v2814 = vunpack.c.l.b16 %v2590
    %v2815 = vunpack.c.l.b16 %v2591
    %v2816 = vunpack.c.l.b16 %v2592
    %v2817 = vunpack.c.l.b16 %v2593
    %v2818 = vunpack.c.l.b16 %v2594
    %v2819 = vunpack.c.l.b16 %v2595
    %v2820 = vunpack.c.l.b16 %v2596
    %v2821 = vunpack.c.l.b16 %v2597
    %v2822 = vunpack.c.l.b16 %v2598
    %v2823 = vunpack.c.l.b16 %v2599
    %v2824 = vunpack.c.l.b16 %v2600
    %v2825 = vunpack.c.l.b16 %v2601
    %v2826 = vunpack.c.l.b16 %v2602
    %v2827 = vunpack.c.l.b16 %v2603
    %v2828 = vunpack.c.l.b16 %v2604
    %v2829 = vunpack.c.l.b16 %v2605
    %v2830 = vunpack.c.l.b16 %v2606
    %v2831 = vunpack.c.l.b16 %v2607
    %v2832 = vunpack.c.l.b16 %v2608
    %v2833 = vunpack.c.l.b16 %v2609
    %v2834 = vunpack.c.l.b16 %v2610
    %v2835 = vunpack.c.l.b16 %v2611
    %v2836 = vunpack.c.l.b16 %v2612
    %v2837 = vunpack.c.l.b16 %v2613
    %v2838 = vunpack.c.l.b16 %v2614
    %v2839 = vunpack.c.l.b16 %v2615
    %v2840 = vunpack.c.l.b16 %v2616
    %v2841 = vunpack.c.l.b16 %v2617
    %v2842 = vunpack.c.l.b16 %v2618
    %v2843 = vunpack.c.l.b16 %v2619
    %v2844 = vunpack.c.l.b16 %v2620
    %v2845 = vunpack.c.l.b16 %v2621
    %v2846 = vunpack.c.l.b16 %v2622
    %v2847 = vunpack.c.l.b16 %v2623
    %v2848 = vunpack.c.l.b16 %v2624
    %v2849 = vunpack.c.l.b16 %v2625
    %v2850 = vunpack.c.l.b16 %v2626
    %v2851 = vunpack.c.l.b16 %v2627
    %v2852 = vunpack.c.l.b16 %v2628
    %v2853 = vunpack.c.l.b16 %v2629
    %v2854 = vunpack.c.l.b16 %v2630
    %v2855 = vunpack.c.l.b16 %v2631
    %v2856 = vunpack.c.l.b16 %v2632
    %v2857 = vunpack.c.l.b16 %v2633
    %v2858 = vunpack.c.l.b16 %v2634
    %v2859 = vunpack.c.l.b16 %v2635
    %v2860 = vunpack.c.l.b16 %v2636
    %v2861 = vunpack.c.l.b16 %v2637
    %v2862 = vunpack.c.l.b16 %v2638
    %v2863 = vunpack.c.l.b16 %v2639
    %v2864 = vunpack.c.l.b16 %v2640
    %v2865 = vunpack.c.l.b16 %v2641
    %v2866 = vunpack.c.l.b16 %v2642
    %v2867 = vunpack.c.l.b16 %v2643
    %v2868 = vunpack.c.l.b16 %v2644
    %v2869 = vunpack.c.l.b16 %v2645
    %v2870 = vunpack.c.l.b16 %v2646
    %v2871 = vunpack.c.l.b16 %v2647
    %v2872 = vunpack.c.l.b16 %v2648
    %v2873 = vunpack.c.l.b16 %v2649
    %v2874 = vunpack.c.l.b16 %v2650
    %v2875 = vunpack.c.l.b16 %v2651
    %v2876 = vunpack.c.l.b16 %v2652
    %v2877 = vunpack.c.l.b16 %v2653
    %v2878 = vunpack.c.l.b16 %v2654
    %v2879 = vpack.c.b16 %v2768, %v2767
    %v2880 = vpack.c.b16 %v2770, %v2769
    %v2881 = vpack.c.b16 %v2772, %v2771
    %v2882 = vpack.c.b16 %v2774, %v2773
    %v2883 = vpack.c.b16 %v2776, %v2775
    %v2884 = vpack.c.b16 %v2778, %v2777
    %v2885 = vpack.c.b16 %v2780, %v2779
    %v2886 = vpack.c.b16 %v2782, %v2781
    %v2887 = vpack.c.b16 %v2784, %v2783
    %v2888 = vpack.c.b16 %v2786, %v2785
    %v2889 = vpack.c.b16 %v2788, %v2787
    %v2890 = vpack.c.b16 %v2790, %v2789
    %v2891 = vpack.c.b16 %v2792, %v2791
    %v2892 = vpack.c.b16 %v2794, %v2793
    %v2893 = vpack.c.b16 %v2796, %v2795
    %v2894 = vpack.c.b16 %v2798, %v2797
    %v2895 = vpack.c.b16 %v2800, %v2799
    %v2896 = vpack.c.b16 %v2802, %v2801
    %v2897 = vpack.c.b16 %v2804, %v2803
    %v2898 = vpack.c.b16 %v2806, %v2805
    %v2899 = vpack.c.b16 %v2808, %v2807
    %v2900 = vpack.c.b16 %v2810, %v2809
    %v2901 = vpack.c.b16 %v2812, %v2811
    %v2902 = vpack.c.b16 %v2814, %v2813
    %v2903 = vpack.c.b16 %v2816, %v2815
    %v2904 = vpack.c.b16 %v2818, %v2817
    %v2905 = vpack.c.b16 %v2820, %v2819
    %v2906 = vpack.c.b16 %v2822, %v2821
    %v2907 = vpack.c.b16 %v2824, %v2823
    %v2908 = vpack.c.b16 %v2826, %v2825
    %v2909 = vpack.c.b16 %v2828, %v2827
    %v2910 = vpack.c.b16 %v2830, %v2829
    %v2911 = vpack.c.b16 %v2832, %v2831
    %v2912 = vpack.c.b16 %v2834, %v2833
    %v2913 = vpack.c.b16 %v2836, %v2835
    %v2914 = vpack.c.b16 %v2838, %v2837
    %v2915 = vpack.c.b16 %v2840, %v2839
    %v2916 = vpack.c.b16 %v2842, %v2841
    %v2917 = vpack.c.b16 %v2844, %v2843
    %v2918 = vpack.c.b16 %v2846, %v2845
    %v2919 = vpack.c.b16 %v2848, %v2847
    %v2920 = vpack.c.b16 %v2850, %v2849
    %v2921 = vpack.c.b16 %v2852, %v2851
    %v2922 = vpack.c.b16 %v2854, %v2853
    %v2923 = vpack.c.b16 %v2856, %v2855
    %v2924 = vpack.c.b16 %v2858, %v2857
    %v2925 = vpack.c.b16 %v2860, %v2859
    %v2926 = vpack.c.b16 %v2862, %v2861
    %v2927 = vpack.c.b16 %v2864, %v2863
    %v2928 = vpack.c.b16 %v2866, %v2865
    %v2929 = vpack.c.b16 %v2868, %v2867
    %v2930 = vpack.c.b16 %v2870, %v2869
    %v2931 = vpack.c.b16 %v2872, %v2871
    %v2932 = vpack.c.b16 %v2874, %v2873
    %v2933 = vpack.c.b16 %v2876, %v2875
    %v2934 = vpack.c.b16 %v2878, %v2877
    %2991 = vmatprep.subr.bf16.mxu0 0
    %2992 = vmatpush1.bf16.msra.mxu0 %v2886
    %2993 = vmatprep.subr.bf16.mxu0 0
    %2994 = vmatpush1.bf16.msra.mxu0 %v2885
    %2995 = vmatprep.subr.bf16.mxu0 0
    %2996 = vmatpush1.bf16.msra.mxu0 %v2884
    %2997 = vmatprep.subr.bf16.mxu0 0
    %2998 = vmatpush1.bf16.msra.mxu0 %v2883
    %2999 = vmatprep.subr.bf16.mxu0 0
    %3000 = vmatpush1.bf16.msra.mxu0 %v2882
    %3001 = vmatprep.subr.bf16.mxu0 0
    %3002 = vmatpush1.bf16.msra.mxu0 %v2881
    %3003 = vmatprep.subr.bf16.mxu0 0
    %3004 = vmatpush1.bf16.msra.mxu0 %v2880
    %3005 = vmatprep.subr.bf16.mxu0 0
    %3006 = vmatpush1.bf16.msra.mxu0 %v2879
    %3007 = vmatprep.subr.bf16.mxu0 0
    %3008 = vmatpush2.bf16.msra.mxu0 %v2894
    %3009 = vmatprep.subr.bf16.mxu0 0
    %3010 = vmatpush2.bf16.msra.mxu0 %v2893
    %3011 = vmatprep.subr.bf16.mxu0 0
    %3012 = vmatpush2.bf16.msra.mxu0 %v2892
    %3013 = vmatprep.subr.bf16.mxu0 0
    %3014 = vmatpush2.bf16.msra.mxu0 %v2891
    %3015 = vmatprep.subr.bf16.mxu0 0
    %3016 = vmatpush2.bf16.msra.mxu0 %v2890
    %3017 = vmatprep.subr.bf16.mxu0 0
    %3018 = vmatpush2.bf16.msra.mxu0 %v2889
    %3019 = vmatprep.subr.bf16.mxu0 0
    %3020 = vmatpush2.bf16.msra.mxu0 %v2888
    %3021 = vmatprep.subr.bf16.mxu0 0
    %3022 = vmatpush2.bf16.msra.mxu0 %v2887
    %3023 = vmatprep.mubr.bf16.mxu0 %v2535
    %3024 = vmatmul.mubr.bf16.gmra.mxu0 %v2534
    %v3025 = vpop.f32.mrf.mxu0
    %v3026 = vadd.f32 0.0, %v3025
    %v3027 = vpop.f32.mrf.mxu0
    %v3028 = vpop.f32.mrf.mxu0
    %v3029 = vpop.f32.mrf.mxu0
    %3030 = vdwg.mxu0
    %3031 = vmatprep.subr.bf16.mxu0 0
    %3032 = vmatpush1.bf16.msra.mxu0 %v2902
    %3033 = vmatprep.subr.bf16.mxu0 0
    %3034 = vmatpush1.bf16.msra.mxu0 %v2901
    %3035 = vmatprep.subr.bf16.mxu0 0
    %3036 = vmatpush1.bf16.msra.mxu0 %v2900
    %3037 = vmatprep.subr.bf16.mxu0 0
    %3038 = vmatpush1.bf16.msra.mxu0 %v2899
    %3039 = vmatprep.subr.bf16.mxu0 0
    %3040 = vmatpush1.bf16.msra.mxu0 %v2898
    %3041 = vmatprep.subr.bf16.mxu0 0
    %3042 = vmatpush1.bf16.msra.mxu0 %v2897
    %3043 = vmatprep.subr.bf16.mxu0 0
    %3044 = vmatpush1.bf16.msra.mxu0 %v2896
    %3045 = vmatprep.subr.bf16.mxu0 0
    %3046 = vmatpush1.bf16.msra.mxu0 %v2895
    %3047 = vmatprep.subr.bf16.mxu0 0
    %3048 = vmatpush2.bf16.msra.mxu0 %v2910
    %3049 = vmatprep.subr.bf16.mxu0 0
    %3050 = vmatpush2.bf16.msra.mxu0 %v2909
    %3051 = vmatprep.subr.bf16.mxu0 0
    %3052 = vmatpush2.bf16.msra.mxu0 %v2908
    %3053 = vmatprep.subr.bf16.mxu0 0
    %3054 = vmatpush2.bf16.msra.mxu0 %v2907
    %3055 = vmatprep.subr.bf16.mxu0 0
    %3056 = vmatpush2.bf16.msra.mxu0 %v2906
    %3057 = vmatprep.subr.bf16.mxu0 0
    %3058 = vmatpush2.bf16.msra.mxu0 %v2905
    %3059 = vmatprep.subr.bf16.mxu0 0
    %3060 = vmatpush2.bf16.msra.mxu0 %v2904
    %3061 = vmatprep.subr.bf16.mxu0 0
    %3062 = vmatpush2.bf16.msra.mxu0 %v2903
    %3063 = vmatprep.mubr.bf16.mxu0 %v2537
    %3064 = vmatmul.mubr.bf16.gmra.mxu0 %v2536
    %v3065 = vpop.f32.mrf.mxu0
    %v3066 = vadd.f32 %v3026, %v3065
    %v3067 = vpop.f32.mrf.mxu0
    %v3068 = vpop.f32.mrf.mxu0
    %v3069 = vpop.f32.mrf.mxu0
    %3070 = vdwg.mxu0
    %3071 = vmatprep.subr.bf16.mxu0 0
    %3072 = vmatpush1.bf16.msra.mxu0 %v2918
    %3073 = vmatprep.subr.bf16.mxu0 0
    %3074 = vmatpush1.bf16.msra.mxu0 %v2917
    %3075 = vmatprep.subr.bf16.mxu0 0
    %3076 = vmatpush1.bf16.msra.mxu0 %v2916
    %3077 = vmatprep.subr.bf16.mxu0 0
    %3078 = vmatpush1.bf16.msra.mxu0 %v2915
    %3079 = vmatprep.subr.bf16.mxu0 0
    %3080 = vmatpush1.bf16.msra.mxu0 %v2914
    %3081 = vmatprep.subr.bf16.mxu0 0
    %3082 = vmatpush1.bf16.msra.mxu0 %v2913
    %3083 = vmatprep.subr.bf16.mxu0 0
    %3084 = vmatpush1.bf16.msra.mxu0 %v2912
    %3085 = vmatprep.subr.bf16.mxu0 0
    %3086 = vmatpush1.bf16.msra.mxu0 %v2911
    %3087 = vmatprep.subr.bf16.mxu0 0
    %3088 = vmatpush2.bf16.msra.mxu0 %v2926
    %3089 = vmatprep.subr.bf16.mxu0 0
    %3090 = vmatpush2.bf16.msra.mxu0 %v2925
    %3091 = vmatprep.subr.bf16.mxu0 0
    %3092 = vmatpush2.bf16.msra.mxu0 %v2924
    %3093 = vmatprep.subr.bf16.mxu0 0
    %3094 = vmatpush2.bf16.msra.mxu0 %v2923
    %3095 = vmatprep.subr.bf16.mxu0 0
    %3096 = vmatpush2.bf16.msra.mxu0 %v2922
    %3097 = vmatprep.subr.bf16.mxu0 0
    %3098 = vmatpush2.bf16.msra.mxu0 %v2921
    %3099 = vmatprep.subr.bf16.mxu0 0
    %3100 = vmatpush2.bf16.msra.mxu0 %v2920
    %3101 = vmatprep.subr.bf16.mxu0 0
    %3102 = vmatpush2.bf16.msra.mxu0 %v2919
    %3103 = vmatprep.mubr.bf16.mxu0 %v2539
    %3104 = vmatmul.mubr.bf16.gmra.mxu0 %v2538
    %v3105 = vpop.f32.mrf.mxu0
    %v3106 = vadd.f32 %v3066, %v3105
    %v3107 = vpop.f32.mrf.mxu0
    %v3108 = vpop.f32.mrf.mxu0
    %v3109 = vpop.f32.mrf.mxu0
    %3110 = vdwg.mxu0
    %3111 = vmatprep.subr.bf16.mxu0 0
    %3112 = vmatpush1.bf16.msra.mxu0 %v2934
    %3113 = vmatprep.subr.bf16.mxu0 0
    %3114 = vmatpush1.bf16.msra.mxu0 %v2933
    %3115 = vmatprep.subr.bf16.mxu0 0
    %3116 = vmatpush1.bf16.msra.mxu0 %v2932
    %3117 = vmatprep.subr.bf16.mxu0 0
    %3118 = vmatpush1.bf16.msra.mxu0 %v2931
    %3119 = vmatprep.subr.bf16.mxu0 0
    %3120 = vmatpush1.bf16.msra.mxu0 %v2930
    %3121 = vmatprep.subr.bf16.mxu0 0
    %3122 = vmatpush1.bf16.msra.mxu0 %v2929
    %3123 = vmatprep.subr.bf16.mxu0 0
    %3124 = vmatpush1.bf16.msra.mxu0 %v2928
    %3125 = vmatprep.subr.bf16.mxu0 0
    %3126 = vmatpush1.bf16.msra.mxu0 %v2927
    %3127 = vmatprep.subr.bf16.mxu0 0
    %3128 = vmatpush2.bf16.msra.mxu0 0
    %3129 = vmatprep.subr.bf16.mxu0 0
    %3130 = vmatpush2.bf16.msra.mxu0 0
    %3131 = vmatprep.subr.bf16.mxu0 0
    %3132 = vmatpush2.bf16.msra.mxu0 0
    %3133 = vmatprep.subr.bf16.mxu0 0
    %3134 = vmatpush2.bf16.msra.mxu0 0
    %3135 = vmatprep.subr.bf16.mxu0 0
    %3136 = vmatpush2.bf16.msra.mxu0 0
    %3137 = vmatprep.subr.bf16.mxu0 0
    %3138 = vmatpush2.bf16.msra.mxu0 0
    %3139 = vmatprep.subr.bf16.mxu0 0
    %3140 = vmatpush2.bf16.msra.mxu0 0
    %3141 = vmatprep.subr.bf16.mxu0 0
    %3142 = vmatpush2.bf16.msra.mxu0 0
    %3143 = vmatprep.mubr.bf16.mxu0 0
    %3144 = vmatmul.mubr.bf16.gmra.mxu0 %v2540
    %v3145 = vpop.f32.mrf.mxu0
    %v3146 = vadd.f32 %v3106, %v3145
    %v3147 = vpop.f32.mrf.mxu0
    %v3148 = vpop.f32.mrf.mxu0
    %v3149 = vpop.f32.mrf.mxu0
    %3150 = vdwg.mxu0
    %v3151 = vadd.f32 %v2471, %v3146
    %s3152 = sld [smem:[#allocation7 + $0x3]]
    %v3153 = vstv %s3152
    %v3154 = vadd.f32 %v1116, %v3153
    %v3155 = vadd.f32 %v1117, %v3153
    %v3156 = vxor.u32 %v3154, 2147483648
    %v3157 = vxor.u32 %v3155, 2147483648
    %v3158 = vmul.f32 %v3156, 1.442695
    %v3159 = vpow.pop %v3158
    %v3160 = vmul.f32 %v3157, 1.442695
    %v3161 = vpow.pop %v3160
    %v3162 = vadd.f32 %v3159, 1.0
    %v3163 = vadd.f32 %v3161, 1.0
    %v3164 = vrcp.pop %v3162
    %v3165 = vmul.f32 1.0, %v3164
    %v3166 = vrcp.pop %v3163
    %v3167 = vmul.f32 1.0, %v3166
    %v3170 = vcombine.high %v3165, %v3165
    %v3172 = vunpack.c.l.s4 1983009808
    %v3173 = vunpack.c.0.s8 %v3172
    %v3174 = vlaneseq
    %v3175 = vshrl.u32 %v3174, 7
    %v3176 = vsub.s32 %v3173, %v3175
    %v3177 = vrot.slane %v3165, %v3176
    %v3179 = vunpack.c.l.s4 1983009808
    %v3180 = vunpack.c.0.s8 %v3179
    %v3181 = vlaneseq
    %v3182 = vshrl.u32 %v3181, 7
    %v3183 = vsub.s32 %v3180, %v3182
    %v3184 = vrot.slane %v3170, %v3183
    %v3185 = vcombine.high %v3177, %v3177
    %v3186 = vcombine.high %v3184, %v3184
    %v3187 = vcombine.high %v3167, %v3167
    %v3189 = vunpack.c.l.s4 1983009808
    %v3190 = vunpack.c.0.s8 %v3189
    %v3191 = vlaneseq
    %v3192 = vshrl.u32 %v3191, 7
    %v3193 = vsub.s32 %v3190, %v3192
    %v3194 = vrot.slane %v3167, %v3193
    %v3196 = vunpack.c.l.s4 1983009808
    %v3197 = vunpack.c.0.s8 %v3196
    %v3198 = vlaneseq
    %v3199 = vshrl.u32 %v3198, 7
    %v3200 = vsub.s32 %v3197, %v3199
    %v3201 = vrot.slane %v3187, %v3200
    %v3202 = vcombine.high %v3194, %v3194
    %v3210 = vpack.c.bf16 %v3177, %v3177
    %v3211 = vpack.c.bf16 %v3185, %v3185
    %v3212 = vpack.c.bf16 %v3184, %v3184
    %v3213 = vpack.c.bf16 %v3186, %v3186
    %v3214 = vpack.c.bf16 %v3194, %v3194
    %v3215 = vpack.c.bf16 %v3202, %v3202
    %v3216 = vpack.c.bf16 %v3201, %v3201
    %s3217 = sshll.u32 %s1190, 4
    %3218 = dma.done %s518, %s3217
    %v3219 = vld [vmem:[%s517] sm:$0xf]
    %v3220 = vld [vmem:[%s517 + $0x4] sm:$0xf]
    %v3221 = vld [vmem:[%s517 + $0x8] sm:$0xf]
    %v3222 = vld [vmem:[%s517 + $0xc] sm:$0xf]
    %v3223 = vld [vmem:[%s517 + $0x10] sm:$0xf]
    %v3224 = vld [vmem:[%s517 + $0x14] sm:$0xf]
    %v3225 = vld [vmem:[%s517 + $0x18] sm:$0xf]
    %v3226 = vld [vmem:[%s517 + $0x1c] sm:$0xf]
    %v3227 = vld [vmem:[%s517 + $0x20] sm:$0xf]
    %v3228 = vld [vmem:[%s517 + $0x24] sm:$0xf]
    %v3229 = vld [vmem:[%s517 + $0x28] sm:$0xf]
    %v3230 = vld [vmem:[%s517 + $0x2c] sm:$0xf]
    %v3231 = vld [vmem:[%s517 + $0x30] sm:$0xf]
    %v3232 = vld [vmem:[%s517 + $0x34] sm:$0xf]
    %v3233 = vld [vmem:[%s517 + $0x38] sm:$0xf]
    %v3234 = vld [vmem:[%s517 + $0x3c] sm:$0xf]
    %v3235 = vld [vmem:[%s517 + $0x40] sm:$0xf]
    %v3236 = vld [vmem:[%s517 + $0x44] sm:$0xf]
    %v3237 = vld [vmem:[%s517 + $0x48] sm:$0xf]
    %v3238 = vld [vmem:[%s517 + $0x4c] sm:$0xf]
    %v3239 = vld [vmem:[%s517 + $0x50] sm:$0xf]
    %v3240 = vld [vmem:[%s517 + $0x54] sm:$0xf]
    %v3241 = vld [vmem:[%s517 + $0x58] sm:$0xf]
    %v3242 = vld [vmem:[%s517 + $0x5c] sm:$0xf]
    %v3243 = vld [vmem:[%s517 + $0x60] sm:$0xf]
    %v3244 = vld [vmem:[%s517 + $0x64] sm:$0xf]
    %v3245 = vld [vmem:[%s517 + $0x68] sm:$0xf]
    %v3246 = vld [vmem:[%s517 + $0x6c] sm:$0xf]
    %v3247 = vld [vmem:[%s517 + $0x70] sm:$0xf]
    %v3248 = vld [vmem:[%s517 + $0x74] sm:$0xf]
    %v3249 = vld [vmem:[%s517 + $0x78] sm:$0xf]
    %v3250 = vld [vmem:[%s517 + $0x7c] sm:$0xf]
    %v3251 = vld [vmem:[%s517 + $0x80] sm:$0xf]
    %v3252 = vld [vmem:[%s517 + $0x84] sm:$0xf]
    %v3253 = vld [vmem:[%s517 + $0x88] sm:$0xf]
    %v3254 = vld [vmem:[%s517 + $0x8c] sm:$0xf]
    %v3255 = vld [vmem:[%s517 + $0x90] sm:$0xf]
    %v3256 = vld [vmem:[%s517 + $0x94] sm:$0xf]
    %v3257 = vld [vmem:[%s517 + $0x98] sm:$0xf]
    %v3258 = vld [vmem:[%s517 + $0x9c] sm:$0xf]
    %v3259 = vld [vmem:[%s517 + $0xa0] sm:$0xf]
    %v3260 = vld [vmem:[%s517 + $0xa4] sm:$0xf]
    %v3261 = vld [vmem:[%s517 + $0xa8] sm:$0xf]
    %v3262 = vld [vmem:[%s517 + $0xac] sm:$0xf]
    %v3263 = vld [vmem:[%s517 + $0xb0] sm:$0xf]
    %v3264 = vld [vmem:[%s517 + $0xb4] sm:$0xf]
    %v3265 = vld [vmem:[%s517 + $0xb8] sm:$0xf]
    %v3266 = vld [vmem:[%s517 + $0xbc] sm:$0xf]
    %v3267 = vld [vmem:[%s517 + $0xc0] sm:$0xf]
    %v3268 = vld [vmem:[%s517 + $0xc4] sm:$0xf]
    %v3269 = vld [vmem:[%s517 + $0xc8] sm:$0xf]
    %v3270 = vld [vmem:[%s517 + $0xcc] sm:$0xf]
    %v3271 = vld [vmem:[%s517 + $0xd0] sm:$0xf]
    %v3272 = vld [vmem:[%s517 + $0xd4] sm:$0xf]
    %v3273 = vld [vmem:[%s517 + $0xd8] sm:$0xf]
    %v3274 = vld [vmem:[%s517 + $0xdc] sm:$0xf]
    %v3275 = vld [vmem:[%s517 + $0xe0] sm:$0xf]
    %v3276 = vld [vmem:[%s517 + $0xe4] sm:$0xf]
    %v3277 = vld [vmem:[%s517 + $0xe8] sm:$0xf]
    %v3278 = vld [vmem:[%s517 + $0xec] sm:$0xf]
    %v3279 = vld [vmem:[%s517 + $0xf0] sm:$0xf]
    %v3280 = vld [vmem:[%s517 + $0xf4] sm:$0xf]
    %v3281 = vld [vmem:[%s517 + $0xf8] sm:$0xf]
    %v3282 = vld [vmem:[%s517 + $0xfc] sm:$0xf]
    %v3283 = vld [vmem:[%s517 + $0x100] sm:$0xf]
    %v3284 = vld [vmem:[%s517 + $0x104] sm:$0xf]
    %v3285 = vld [vmem:[%s517 + $0x108] sm:$0xf]
    %v3286 = vld [vmem:[%s517 + $0x10c] sm:$0xf]
    %v3287 = vld [vmem:[%s517 + $0x110] sm:$0xf]
    %v3288 = vld [vmem:[%s517 + $0x114] sm:$0xf]
    %v3289 = vld [vmem:[%s517 + $0x118] sm:$0xf]
    %v3290 = vld [vmem:[%s517 + $0x11c] sm:$0xf]
    %v3291 = vld [vmem:[%s517 + $0x120] sm:$0xf]
    %v3292 = vld [vmem:[%s517 + $0x124] sm:$0xf]
    %v3293 = vld [vmem:[%s517 + $0x128] sm:$0xf]
    %v3294 = vld [vmem:[%s517 + $0x12c] sm:$0xf]
    %v3295 = vld [vmem:[%s517 + $0x130] sm:$0xf]
    %v3296 = vld [vmem:[%s517 + $0x134] sm:$0xf]
    %v3297 = vld [vmem:[%s517 + $0x138] sm:$0xf]
    %v3298 = vld [vmem:[%s517 + $0x13c] sm:$0xf]
    %v3299 = vld [vmem:[%s517 + $0x140] sm:$0xf]
    %v3300 = vld [vmem:[%s517 + $0x144] sm:$0xf]
    %v3301 = vld [vmem:[%s517 + $0x148] sm:$0xf]
    %v3302 = vld [vmem:[%s517 + $0x14c] sm:$0xf]
    %v3303 = vld [vmem:[%s517 + $0x150] sm:$0xf]
    %v3304 = vld [vmem:[%s517 + $0x154] sm:$0xf]
    %v3305 = vld [vmem:[%s517 + $0x158] sm:$0xf]
    %v3306 = vld [vmem:[%s517 + $0x15c] sm:$0xf]
    %v3307 = vld [vmem:[%s517 + $0x160] sm:$0xf]
    %v3308 = vld [vmem:[%s517 + $0x164] sm:$0xf]
    %v3309 = vld [vmem:[%s517 + $0x168] sm:$0xf]
    %v3310 = vld [vmem:[%s517 + $0x16c] sm:$0xf]
    %v3311 = vld [vmem:[%s517 + $0x170] sm:$0xf]
    %v3312 = vld [vmem:[%s517 + $0x174] sm:$0xf]
    %v3313 = vld [vmem:[%s517 + $0x178] sm:$0xf]
    %v3314 = vld [vmem:[%s517 + $0x17c] sm:$0xf]
    %v3315 = vld [vmem:[%s517 + $0x180] sm:$0xf]
    %v3316 = vld [vmem:[%s517 + $0x184] sm:$0xf]
    %v3317 = vld [vmem:[%s517 + $0x188] sm:$0xf]
    %v3318 = vld [vmem:[%s517 + $0x18c] sm:$0xf]
    %v3319 = vld [vmem:[%s517 + $0x190] sm:$0xf]
    %v3320 = vld [vmem:[%s517 + $0x194] sm:$0xf]
    %v3321 = vld [vmem:[%s517 + $0x198] sm:$0xf]
    %v3322 = vld [vmem:[%s517 + $0x19c] sm:$0xf]
    %v3323 = vld [vmem:[%s517 + $0x1a0] sm:$0xf]
    %v3324 = vld [vmem:[%s517 + $0x1a4] sm:$0xf]
    %v3325 = vld [vmem:[%s517 + $0x1a8] sm:$0xf]
    %v3326 = vld [vmem:[%s517 + $0x1ac] sm:$0xf]
    %v3327 = vld [vmem:[%s517 + $0x1b0] sm:$0xf]
    %v3328 = vld [vmem:[%s517 + $0x1b4] sm:$0xf]
    %v3329 = vld [vmem:[%s517 + $0x1b8] sm:$0xf]
    %v3330 = vld [vmem:[%s517 + $0x1bc] sm:$0xf]
    %v3443 = vunpack.c.l.b16 %v3219
    %v3444 = vunpack.c.l.b16 %v3220
    %v3445 = vunpack.c.l.b16 %v3221
    %v3446 = vunpack.c.l.b16 %v3222
    %v3447 = vunpack.c.l.b16 %v3223
    %v3448 = vunpack.c.l.b16 %v3224
    %v3449 = vunpack.c.l.b16 %v3225
    %v3450 = vunpack.c.l.b16 %v3226
    %v3451 = vunpack.c.l.b16 %v3227
    %v3452 = vunpack.c.l.b16 %v3228
    %v3453 = vunpack.c.l.b16 %v3229
    %v3454 = vunpack.c.l.b16 %v3230
    %v3455 = vunpack.c.l.b16 %v3231
    %v3456 = vunpack.c.l.b16 %v3232
    %v3457 = vunpack.c.l.b16 %v3233
    %v3458 = vunpack.c.l.b16 %v3234
    %v3459 = vunpack.c.l.b16 %v3235
    %v3460 = vunpack.c.l.b16 %v3236
    %v3461 = vunpack.c.l.b16 %v3237
    %v3462 = vunpack.c.l.b16 %v3238
    %v3463 = vunpack.c.l.b16 %v3239
    %v3464 = vunpack.c.l.b16 %v3240
    %v3465 = vunpack.c.l.b16 %v3241
    %v3466 = vunpack.c.l.b16 %v3242
    %v3467 = vunpack.c.l.b16 %v3243
    %v3468 = vunpack.c.l.b16 %v3244
    %v3469 = vunpack.c.l.b16 %v3245
    %v3470 = vunpack.c.l.b16 %v3246
    %v3471 = vunpack.c.l.b16 %v3247
    %v3472 = vunpack.c.l.b16 %v3248
    %v3473 = vunpack.c.l.b16 %v3249
    %v3474 = vunpack.c.l.b16 %v3250
    %v3475 = vunpack.c.l.b16 %v3251
    %v3476 = vunpack.c.l.b16 %v3252
    %v3477 = vunpack.c.l.b16 %v3253
    %v3478 = vunpack.c.l.b16 %v3254
    %v3479 = vunpack.c.l.b16 %v3255
    %v3480 = vunpack.c.l.b16 %v3256
    %v3481 = vunpack.c.l.b16 %v3257
    %v3482 = vunpack.c.l.b16 %v3258
    %v3483 = vunpack.c.l.b16 %v3259
    %v3484 = vunpack.c.l.b16 %v3260
    %v3485 = vunpack.c.l.b16 %v3261
    %v3486 = vunpack.c.l.b16 %v3262
    %v3487 = vunpack.c.l.b16 %v3263
    %v3488 = vunpack.c.l.b16 %v3264
    %v3489 = vunpack.c.l.b16 %v3265
    %v3490 = vunpack.c.l.b16 %v3266
    %v3491 = vunpack.c.l.b16 %v3267
    %v3492 = vunpack.c.l.b16 %v3268
    %v3493 = vunpack.c.l.b16 %v3269
    %v3494 = vunpack.c.l.b16 %v3270
    %v3495 = vunpack.c.l.b16 %v3271
    %v3496 = vunpack.c.l.b16 %v3272
    %v3497 = vunpack.c.l.b16 %v3273
    %v3498 = vunpack.c.l.b16 %v3274
    %v3499 = vunpack.c.l.b16 %v3275
    %v3500 = vunpack.c.l.b16 %v3276
    %v3501 = vunpack.c.l.b16 %v3277
    %v3502 = vunpack.c.l.b16 %v3278
    %v3503 = vunpack.c.l.b16 %v3279
    %v3504 = vunpack.c.l.b16 %v3280
    %v3505 = vunpack.c.l.b16 %v3281
    %v3506 = vunpack.c.l.b16 %v3282
    %v3507 = vunpack.c.l.b16 %v3283
    %v3508 = vunpack.c.l.b16 %v3284
    %v3509 = vunpack.c.l.b16 %v3285
    %v3510 = vunpack.c.l.b16 %v3286
    %v3511 = vunpack.c.l.b16 %v3287
    %v3512 = vunpack.c.l.b16 %v3288
    %v3513 = vunpack.c.l.b16 %v3289
    %v3514 = vunpack.c.l.b16 %v3290
    %v3515 = vunpack.c.l.b16 %v3291
    %v3516 = vunpack.c.l.b16 %v3292
    %v3517 = vunpack.c.l.b16 %v3293
    %v3518 = vunpack.c.l.b16 %v3294
    %v3519 = vunpack.c.l.b16 %v3295
    %v3520 = vunpack.c.l.b16 %v3296
    %v3521 = vunpack.c.l.b16 %v3297
    %v3522 = vunpack.c.l.b16 %v3298
    %v3523 = vunpack.c.l.b16 %v3299
    %v3524 = vunpack.c.l.b16 %v3300
    %v3525 = vunpack.c.l.b16 %v3301
    %v3526 = vunpack.c.l.b16 %v3302
    %v3527 = vunpack.c.l.b16 %v3303
    %v3528 = vunpack.c.l.b16 %v3304
    %v3529 = vunpack.c.l.b16 %v3305
    %v3530 = vunpack.c.l.b16 %v3306
    %v3531 = vunpack.c.l.b16 %v3307
    %v3532 = vunpack.c.l.b16 %v3308
    %v3533 = vunpack.c.l.b16 %v3309
    %v3534 = vunpack.c.l.b16 %v3310
    %v3535 = vunpack.c.l.b16 %v3311
    %v3536 = vunpack.c.l.b16 %v3312
    %v3537 = vunpack.c.l.b16 %v3313
    %v3538 = vunpack.c.l.b16 %v3314
    %v3539 = vunpack.c.l.b16 %v3315
    %v3540 = vunpack.c.l.b16 %v3316
    %v3541 = vunpack.c.l.b16 %v3317
    %v3542 = vunpack.c.l.b16 %v3318
    %v3543 = vunpack.c.l.b16 %v3319
    %v3544 = vunpack.c.l.b16 %v3320
    %v3545 = vunpack.c.l.b16 %v3321
    %v3546 = vunpack.c.l.b16 %v3322
    %v3547 = vunpack.c.l.b16 %v3323
    %v3548 = vunpack.c.l.b16 %v3324
    %v3549 = vunpack.c.l.b16 %v3325
    %v3550 = vunpack.c.l.b16 %v3326
    %v3551 = vunpack.c.l.b16 %v3327
    %v3552 = vunpack.c.l.b16 %v3328
    %v3553 = vunpack.c.l.b16 %v3329
    %v3554 = vunpack.c.l.b16 %v3330
    %v3555 = vpack.c.b16 %v3444, %v3443
    %v3556 = vpack.c.b16 %v3446, %v3445
    %v3557 = vpack.c.b16 %v3448, %v3447
    %v3558 = vpack.c.b16 %v3450, %v3449
    %v3559 = vpack.c.b16 %v3452, %v3451
    %v3560 = vpack.c.b16 %v3454, %v3453
    %v3561 = vpack.c.b16 %v3456, %v3455
    %v3562 = vpack.c.b16 %v3458, %v3457
    %v3563 = vpack.c.b16 %v3460, %v3459
    %v3564 = vpack.c.b16 %v3462, %v3461
    %v3565 = vpack.c.b16 %v3464, %v3463
    %v3566 = vpack.c.b16 %v3466, %v3465
    %v3567 = vpack.c.b16 %v3468, %v3467
    %v3568 = vpack.c.b16 %v3470, %v3469
    %v3569 = vpack.c.b16 %v3472, %v3471
    %v3570 = vpack.c.b16 %v3474, %v3473
    %v3571 = vpack.c.b16 %v3476, %v3475
    %v3572 = vpack.c.b16 %v3478, %v3477
    %v3573 = vpack.c.b16 %v3480, %v3479
    %v3574 = vpack.c.b16 %v3482, %v3481
    %v3575 = vpack.c.b16 %v3484, %v3483
    %v3576 = vpack.c.b16 %v3486, %v3485
    %v3577 = vpack.c.b16 %v3488, %v3487
    %v3578 = vpack.c.b16 %v3490, %v3489
    %v3579 = vpack.c.b16 %v3492, %v3491
    %v3580 = vpack.c.b16 %v3494, %v3493
    %v3581 = vpack.c.b16 %v3496, %v3495
    %v3582 = vpack.c.b16 %v3498, %v3497
    %v3583 = vpack.c.b16 %v3500, %v3499
    %v3584 = vpack.c.b16 %v3502, %v3501
    %v3585 = vpack.c.b16 %v3504, %v3503
    %v3586 = vpack.c.b16 %v3506, %v3505
    %v3587 = vpack.c.b16 %v3508, %v3507
    %v3588 = vpack.c.b16 %v3510, %v3509
    %v3589 = vpack.c.b16 %v3512, %v3511
    %v3590 = vpack.c.b16 %v3514, %v3513
    %v3591 = vpack.c.b16 %v3516, %v3515
    %v3592 = vpack.c.b16 %v3518, %v3517
    %v3593 = vpack.c.b16 %v3520, %v3519
    %v3594 = vpack.c.b16 %v3522, %v3521
    %v3595 = vpack.c.b16 %v3524, %v3523
    %v3596 = vpack.c.b16 %v3526, %v3525
    %v3597 = vpack.c.b16 %v3528, %v3527
    %v3598 = vpack.c.b16 %v3530, %v3529
    %v3599 = vpack.c.b16 %v3532, %v3531
    %v3600 = vpack.c.b16 %v3534, %v3533
    %v3601 = vpack.c.b16 %v3536, %v3535
    %v3602 = vpack.c.b16 %v3538, %v3537
    %v3603 = vpack.c.b16 %v3540, %v3539
    %v3604 = vpack.c.b16 %v3542, %v3541
    %v3605 = vpack.c.b16 %v3544, %v3543
    %v3606 = vpack.c.b16 %v3546, %v3545
    %v3607 = vpack.c.b16 %v3548, %v3547
    %v3608 = vpack.c.b16 %v3550, %v3549
    %v3609 = vpack.c.b16 %v3552, %v3551
    %v3610 = vpack.c.b16 %v3554, %v3553
    %3667 = vmatprep.subr.bf16.mxu0 0
    %3668 = vmatpush1.bf16.msra.mxu0 %v3562
    %3669 = vmatprep.subr.bf16.mxu0 0
    %3670 = vmatpush1.bf16.msra.mxu0 %v3561
    %3671 = vmatprep.subr.bf16.mxu0 0
    %3672 = vmatpush1.bf16.msra.mxu0 %v3560
    %3673 = vmatprep.subr.bf16.mxu0 0
    %3674 = vmatpush1.bf16.msra.mxu0 %v3559
    %3675 = vmatprep.subr.bf16.mxu0 0
    %3676 = vmatpush1.bf16.msra.mxu0 %v3558
    %3677 = vmatprep.subr.bf16.mxu0 0
    %3678 = vmatpush1.bf16.msra.mxu0 %v3557
    %3679 = vmatprep.subr.bf16.mxu0 0
    %3680 = vmatpush1.bf16.msra.mxu0 %v3556
    %3681 = vmatprep.subr.bf16.mxu0 0
    %3682 = vmatpush1.bf16.msra.mxu0 %v3555
    %3683 = vmatprep.subr.bf16.mxu0 0
    %3684 = vmatpush2.bf16.msra.mxu0 %v3570
    %3685 = vmatprep.subr.bf16.mxu0 0
    %3686 = vmatpush2.bf16.msra.mxu0 %v3569
    %3687 = vmatprep.subr.bf16.mxu0 0
    %3688 = vmatpush2.bf16.msra.mxu0 %v3568
    %3689 = vmatprep.subr.bf16.mxu0 0
    %3690 = vmatpush2.bf16.msra.mxu0 %v3567
    %3691 = vmatprep.subr.bf16.mxu0 0
    %3692 = vmatpush2.bf16.msra.mxu0 %v3566
    %3693 = vmatprep.subr.bf16.mxu0 0
    %3694 = vmatpush2.bf16.msra.mxu0 %v3565
    %3695 = vmatprep.subr.bf16.mxu0 0
    %3696 = vmatpush2.bf16.msra.mxu0 %v3564
    %3697 = vmatprep.subr.bf16.mxu0 0
    %3698 = vmatpush2.bf16.msra.mxu0 %v3563
    %3699 = vmatprep.mubr.bf16.mxu0 %v3211
    %3700 = vmatmul.mubr.bf16.gmra.mxu0 %v3210
    %v3701 = vpop.f32.mrf.mxu0
    %v3702 = vadd.f32 0.0, %v3701
    %v3703 = vpop.f32.mrf.mxu0
    %v3704 = vpop.f32.mrf.mxu0
    %v3705 = vpop.f32.mrf.mxu0
    %3706 = vdwg.mxu0
    %3707 = vmatprep.subr.bf16.mxu0 0
    %3708 = vmatpush1.bf16.msra.mxu0 %v3578
    %3709 = vmatprep.subr.bf16.mxu0 0
    %3710 = vmatpush1.bf16.msra.mxu0 %v3577
    %3711 = vmatprep.subr.bf16.mxu0 0
    %3712 = vmatpush1.bf16.msra.mxu0 %v3576
    %3713 = vmatprep.subr.bf16.mxu0 0
    %3714 = vmatpush1.bf16.msra.mxu0 %v3575
    %3715 = vmatprep.subr.bf16.mxu0 0
    %3716 = vmatpush1.bf16.msra.mxu0 %v3574
    %3717 = vmatprep.subr.bf16.mxu0 0
    %3718 = vmatpush1.bf16.msra.mxu0 %v3573
    %3719 = vmatprep.subr.bf16.mxu0 0
    %3720 = vmatpush1.bf16.msra.mxu0 %v3572
    %3721 = vmatprep.subr.bf16.mxu0 0
    %3722 = vmatpush1.bf16.msra.mxu0 %v3571
    %3723 = vmatprep.subr.bf16.mxu0 0
    %3724 = vmatpush2.bf16.msra.mxu0 %v3586
    %3725 = vmatprep.subr.bf16.mxu0 0
    %3726 = vmatpush2.bf16.msra.mxu0 %v3585
    %3727 = vmatprep.subr.bf16.mxu0 0
    %3728 = vmatpush2.bf16.msra.mxu0 %v3584
    %3729 = vmatprep.subr.bf16.mxu0 0
    %3730 = vmatpush2.bf16.msra.mxu0 %v3583
    %3731 = vmatprep.subr.bf16.mxu0 0
    %3732 = vmatpush2.bf16.msra.mxu0 %v3582
    %3733 = vmatprep.subr.bf16.mxu0 0
    %3734 = vmatpush2.bf16.msra.mxu0 %v3581
    %3735 = vmatprep.subr.bf16.mxu0 0
    %3736 = vmatpush2.bf16.msra.mxu0 %v3580
    %3737 = vmatprep.subr.bf16.mxu0 0
    %3738 = vmatpush2.bf16.msra.mxu0 %v3579
    %3739 = vmatprep.mubr.bf16.mxu0 %v3213
    %3740 = vmatmul.mubr.bf16.gmra.mxu0 %v3212
    %v3741 = vpop.f32.mrf.mxu0
    %v3742 = vadd.f32 %v3702, %v3741
    %v3743 = vpop.f32.mrf.mxu0
    %v3744 = vpop.f32.mrf.mxu0
    %v3745 = vpop.f32.mrf.mxu0
    %3746 = vdwg.mxu0
    %3747 = vmatprep.subr.bf16.mxu0 0
    %3748 = vmatpush1.bf16.msra.mxu0 %v3594
    %3749 = vmatprep.subr.bf16.mxu0 0
    %3750 = vmatpush1.bf16.msra.mxu0 %v3593
    %3751 = vmatprep.subr.bf16.mxu0 0
    %3752 = vmatpush1.bf16.msra.mxu0 %v3592
    %3753 = vmatprep.subr.bf16.mxu0 0
    %3754 = vmatpush1.bf16.msra.mxu0 %v3591
    %3755 = vmatprep.subr.bf16.mxu0 0
    %3756 = vmatpush1.bf16.msra.mxu0 %v3590
    %3757 = vmatprep.subr.bf16.mxu0 0
    %3758 = vmatpush1.bf16.msra.mxu0 %v3589
    %3759 = vmatprep.subr.bf16.mxu0 0
    %3760 = vmatpush1.bf16.msra.mxu0 %v3588
    %3761 = vmatprep.subr.bf16.mxu0 0
    %3762 = vmatpush1.bf16.msra.mxu0 %v3587
    %3763 = vmatprep.subr.bf16.mxu0 0
    %3764 = vmatpush2.bf16.msra.mxu0 %v3602
    %3765 = vmatprep.subr.bf16.mxu0 0
    %3766 = vmatpush2.bf16.msra.mxu0 %v3601
    %3767 = vmatprep.subr.bf16.mxu0 0
    %3768 = vmatpush2.bf16.msra.mxu0 %v3600
    %3769 = vmatprep.subr.bf16.mxu0 0
    %3770 = vmatpush2.bf16.msra.mxu0 %v3599
    %3771 = vmatprep.subr.bf16.mxu0 0
    %3772 = vmatpush2.bf16.msra.mxu0 %v3598
    %3773 = vmatprep.subr.bf16.mxu0 0
    %3774 = vmatpush2.bf16.msra.mxu0 %v3597
    %3775 = vmatprep.subr.bf16.mxu0 0
    %3776 = vmatpush2.bf16.msra.mxu0 %v3596
    %3777 = vmatprep.subr.bf16.mxu0 0
    %3778 = vmatpush2.bf16.msra.mxu0 %v3595
    %3779 = vmatprep.mubr.bf16.mxu0 %v3215
    %3780 = vmatmul.mubr.bf16.gmra.mxu0 %v3214
    %v3781 = vpop.f32.mrf.mxu0
    %v3782 = vadd.f32 %v3742, %v3781
    %v3783 = vpop.f32.mrf.mxu0
    %v3784 = vpop.f32.mrf.mxu0
    %v3785 = vpop.f32.mrf.mxu0
    %3786 = vdwg.mxu0
    %3787 = vmatprep.subr.bf16.mxu0 0
    %3788 = vmatpush1.bf16.msra.mxu0 %v3610
    %3789 = vmatprep.subr.bf16.mxu0 0
    %3790 = vmatpush1.bf16.msra.mxu0 %v3609
    %3791 = vmatprep.subr.bf16.mxu0 0
    %3792 = vmatpush1.bf16.msra.mxu0 %v3608
    %3793 = vmatprep.subr.bf16.mxu0 0
    %3794 = vmatpush1.bf16.msra.mxu0 %v3607
    %3795 = vmatprep.subr.bf16.mxu0 0
    %3796 = vmatpush1.bf16.msra.mxu0 %v3606
    %3797 = vmatprep.subr.bf16.mxu0 0
    %3798 = vmatpush1.bf16.msra.mxu0 %v3605
    %3799 = vmatprep.subr.bf16.mxu0 0
    %3800 = vmatpush1.bf16.msra.mxu0 %v3604
    %3801 = vmatprep.subr.bf16.mxu0 0
    %3802 = vmatpush1.bf16.msra.mxu0 %v3603
    %3803 = vmatprep.subr.bf16.mxu0 0
    %3804 = vmatpush2.bf16.msra.mxu0 0
    %3805 = vmatprep.subr.bf16.mxu0 0
    %3806 = vmatpush2.bf16.msra.mxu0 0
    %3807 = vmatprep.subr.bf16.mxu0 0
    %3808 = vmatpush2.bf16.msra.mxu0 0
    %3809 = vmatprep.subr.bf16.mxu0 0
    %3810 = vmatpush2.bf16.msra.mxu0 0
    %3811 = vmatprep.subr.bf16.mxu0 0
    %3812 = vmatpush2.bf16.msra.mxu0 0
    %3813 = vmatprep.subr.bf16.mxu0 0
    %3814 = vmatpush2.bf16.msra.mxu0 0
    %3815 = vmatprep.subr.bf16.mxu0 0
    %3816 = vmatpush2.bf16.msra.mxu0 0
    %3817 = vmatprep.subr.bf16.mxu0 0
    %3818 = vmatpush2.bf16.msra.mxu0 0
    %3819 = vmatprep.mubr.bf16.mxu0 0
    %3820 = vmatmul.mubr.bf16.gmra.mxu0 %v3216
    %v3821 = vpop.f32.mrf.mxu0
    %v3822 = vadd.f32 %v3782, %v3821
    %v3823 = vpop.f32.mrf.mxu0
    %v3824 = vpop.f32.mrf.mxu0
    %v3825 = vpop.f32.mrf.mxu0
    %3826 = vdwg.mxu0
    %v3827 = vadd.f32 %v3151, %v3822
    %s3828 = sld [smem:[#allocation7 + $0x4]]
    %v3829 = vstv %s3828
    %v3830 = vadd.f32 %v1122, %v3829
    %v3831 = vadd.f32 %v1123, %v3829
    %v3832 = vxor.u32 %v3830, 2147483648
    %v3833 = vxor.u32 %v3831, 2147483648
    %v3834 = vmul.f32 %v3832, 1.442695
    %v3835 = vpow.pop %v3834
    %v3836 = vmul.f32 %v3833, 1.442695
    %v3837 = vpow.pop %v3836
    %v3838 = vadd.f32 %v3835, 1.0
    %v3839 = vadd.f32 %v3837, 1.0
    %v3840 = vrcp.pop %v3838
    %v3841 = vmul.f32 1.0, %v3840
    %v3842 = vrcp.pop %v3839
    %v3843 = vmul.f32 1.0, %v3842
    %v3846 = vcombine.high %v3841, %v3841
    %v3848 = vunpack.c.l.s4 1983009808
    %v3849 = vunpack.c.0.s8 %v3848
    %v3850 = vlaneseq
    %v3851 = vshrl.u32 %v3850, 7
    %v3852 = vsub.s32 %v3849, %v3851
    %v3853 = vrot.slane %v3841, %v3852
    %v3855 = vunpack.c.l.s4 1983009808
    %v3856 = vunpack.c.0.s8 %v3855
    %v3857 = vlaneseq
    %v3858 = vshrl.u32 %v3857, 7
    %v3859 = vsub.s32 %v3856, %v3858
    %v3860 = vrot.slane %v3846, %v3859
    %v3861 = vcombine.high %v3853, %v3853
    %v3862 = vcombine.high %v3860, %v3860
    %v3863 = vcombine.high %v3843, %v3843
    %v3865 = vunpack.c.l.s4 1983009808
    %v3866 = vunpack.c.0.s8 %v3865
    %v3867 = vlaneseq
    %v3868 = vshrl.u32 %v3867, 7
    %v3869 = vsub.s32 %v3866, %v3868
    %v3870 = vrot.slane %v3843, %v3869
    %v3872 = vunpack.c.l.s4 1983009808
    %v3873 = vunpack.c.0.s8 %v3872
    %v3874 = vlaneseq
    %v3875 = vshrl.u32 %v3874, 7
    %v3876 = vsub.s32 %v3873, %v3875
    %v3877 = vrot.slane %v3863, %v3876
    %v3878 = vcombine.high %v3870, %v3870
    %v3886 = vpack.c.bf16 %v3853, %v3853
    %v3887 = vpack.c.bf16 %v3861, %v3861
    %v3888 = vpack.c.bf16 %v3860, %v3860
    %v3889 = vpack.c.bf16 %v3862, %v3862
    %v3890 = vpack.c.bf16 %v3870, %v3870
    %v3891 = vpack.c.bf16 %v3878, %v3878
    %v3892 = vpack.c.bf16 %v3877, %v3877
    %s3893 = sshll.u32 %s1190, 4
    %3894 = dma.done %s674, %s3893
    %v3895 = vld [vmem:[%s673] sm:$0xf]
    %v3896 = vld [vmem:[%s673 + $0x4] sm:$0xf]
    %v3897 = vld [vmem:[%s673 + $0x8] sm:$0xf]
    %v3898 = vld [vmem:[%s673 + $0xc] sm:$0xf]
    %v3899 = vld [vmem:[%s673 + $0x10] sm:$0xf]
    %v3900 = vld [vmem:[%s673 + $0x14] sm:$0xf]
    %v3901 = vld [vmem:[%s673 + $0x18] sm:$0xf]
    %v3902 = vld [vmem:[%s673 + $0x1c] sm:$0xf]
    %v3903 = vld [vmem:[%s673 + $0x20] sm:$0xf]
    %v3904 = vld [vmem:[%s673 + $0x24] sm:$0xf]
    %v3905 = vld [vmem:[%s673 + $0x28] sm:$0xf]
    %v3906 = vld [vmem:[%s673 + $0x2c] sm:$0xf]
    %v3907 = vld [vmem:[%s673 + $0x30] sm:$0xf]
    %v3908 = vld [vmem:[%s673 + $0x34] sm:$0xf]
    %v3909 = vld [vmem:[%s673 + $0x38] sm:$0xf]
    %v3910 = vld [vmem:[%s673 + $0x3c] sm:$0xf]
    %v3911 = vld [vmem:[%s673 + $0x40] sm:$0xf]
    %v3912 = vld [vmem:[%s673 + $0x44] sm:$0xf]
    %v3913 = vld [vmem:[%s673 + $0x48] sm:$0xf]
    %v3914 = vld [vmem:[%s673 + $0x4c] sm:$0xf]
    %v3915 = vld [vmem:[%s673 + $0x50] sm:$0xf]
    %v3916 = vld [vmem:[%s673 + $0x54] sm:$0xf]
    %v3917 = vld [vmem:[%s673 + $0x58] sm:$0xf]
    %v3918 = vld [vmem:[%s673 + $0x5c] sm:$0xf]
    %v3919 = vld [vmem:[%s673 + $0x60] sm:$0xf]
    %v3920 = vld [vmem:[%s673 + $0x64] sm:$0xf]
    %v3921 = vld [vmem:[%s673 + $0x68] sm:$0xf]
    %v3922 = vld [vmem:[%s673 + $0x6c] sm:$0xf]
    %v3923 = vld [vmem:[%s673 + $0x70] sm:$0xf]
    %v3924 = vld [vmem:[%s673 + $0x74] sm:$0xf]
    %v3925 = vld [vmem:[%s673 + $0x78] sm:$0xf]
    %v3926 = vld [vmem:[%s673 + $0x7c] sm:$0xf]
    %v3927 = vld [vmem:[%s673 + $0x80] sm:$0xf]
    %v3928 = vld [vmem:[%s673 + $0x84] sm:$0xf]
    %v3929 = vld [vmem:[%s673 + $0x88] sm:$0xf]
    %v3930 = vld [vmem:[%s673 + $0x8c] sm:$0xf]
    %v3931 = vld [vmem:[%s673 + $0x90] sm:$0xf]
    %v3932 = vld [vmem:[%s673 + $0x94] sm:$0xf]
    %v3933 = vld [vmem:[%s673 + $0x98] sm:$0xf]
    %v3934 = vld [vmem:[%s673 + $0x9c] sm:$0xf]
    %v3935 = vld [vmem:[%s673 + $0xa0] sm:$0xf]
    %v3936 = vld [vmem:[%s673 + $0xa4] sm:$0xf]
    %v3937 = vld [vmem:[%s673 + $0xa8] sm:$0xf]
    %v3938 = vld [vmem:[%s673 + $0xac] sm:$0xf]
    %v3939 = vld [vmem:[%s673 + $0xb0] sm:$0xf]
    %v3940 = vld [vmem:[%s673 + $0xb4] sm:$0xf]
    %v3941 = vld [vmem:[%s673 + $0xb8] sm:$0xf]
    %v3942 = vld [vmem:[%s673 + $0xbc] sm:$0xf]
    %v3943 = vld [vmem:[%s673 + $0xc0] sm:$0xf]
    %v3944 = vld [vmem:[%s673 + $0xc4] sm:$0xf]
    %v3945 = vld [vmem:[%s673 + $0xc8] sm:$0xf]
    %v3946 = vld [vmem:[%s673 + $0xcc] sm:$0xf]
    %v3947 = vld [vmem:[%s673 + $0xd0] sm:$0xf]
    %v3948 = vld [vmem:[%s673 + $0xd4] sm:$0xf]
    %v3949 = vld [vmem:[%s673 + $0xd8] sm:$0xf]
    %v3950 = vld [vmem:[%s673 + $0xdc] sm:$0xf]
    %v3951 = vld [vmem:[%s673 + $0xe0] sm:$0xf]
    %v3952 = vld [vmem:[%s673 + $0xe4] sm:$0xf]
    %v3953 = vld [vmem:[%s673 + $0xe8] sm:$0xf]
    %v3954 = vld [vmem:[%s673 + $0xec] sm:$0xf]
    %v3955 = vld [vmem:[%s673 + $0xf0] sm:$0xf]
    %v3956 = vld [vmem:[%s673 + $0xf4] sm:$0xf]
    %v3957 = vld [vmem:[%s673 + $0xf8] sm:$0xf]
    %v3958 = vld [vmem:[%s673 + $0xfc] sm:$0xf]
    %v3959 = vld [vmem:[%s673 + $0x100] sm:$0xf]
    %v3960 = vld [vmem:[%s673 + $0x104] sm:$0xf]
    %v3961 = vld [vmem:[%s673 + $0x108] sm:$0xf]
    %v3962 = vld [vmem:[%s673 + $0x10c] sm:$0xf]
    %v3963 = vld [vmem:[%s673 + $0x110] sm:$0xf]
    %v3964 = vld [vmem:[%s673 + $0x114] sm:$0xf]
    %v3965 = vld [vmem:[%s673 + $0x118] sm:$0xf]
    %v3966 = vld [vmem:[%s673 + $0x11c] sm:$0xf]
    %v3967 = vld [vmem:[%s673 + $0x120] sm:$0xf]
    %v3968 = vld [vmem:[%s673 + $0x124] sm:$0xf]
    %v3969 = vld [vmem:[%s673 + $0x128] sm:$0xf]
    %v3970 = vld [vmem:[%s673 + $0x12c] sm:$0xf]
    %v3971 = vld [vmem:[%s673 + $0x130] sm:$0xf]
    %v3972 = vld [vmem:[%s673 + $0x134] sm:$0xf]
    %v3973 = vld [vmem:[%s673 + $0x138] sm:$0xf]
    %v3974 = vld [vmem:[%s673 + $0x13c] sm:$0xf]
    %v3975 = vld [vmem:[%s673 + $0x140] sm:$0xf]
    %v3976 = vld [vmem:[%s673 + $0x144] sm:$0xf]
    %v3977 = vld [vmem:[%s673 + $0x148] sm:$0xf]
    %v3978 = vld [vmem:[%s673 + $0x14c] sm:$0xf]
    %v3979 = vld [vmem:[%s673 + $0x150] sm:$0xf]
    %v3980 = vld [vmem:[%s673 + $0x154] sm:$0xf]
    %v3981 = vld [vmem:[%s673 + $0x158] sm:$0xf]
    %v3982 = vld [vmem:[%s673 + $0x15c] sm:$0xf]
    %v3983 = vld [vmem:[%s673 + $0x160] sm:$0xf]
    %v3984 = vld [vmem:[%s673 + $0x164] sm:$0xf]
    %v3985 = vld [vmem:[%s673 + $0x168] sm:$0xf]
    %v3986 = vld [vmem:[%s673 + $0x16c] sm:$0xf]
    %v3987 = vld [vmem:[%s673 + $0x170] sm:$0xf]
    %v3988 = vld [vmem:[%s673 + $0x174] sm:$0xf]
    %v3989 = vld [vmem:[%s673 + $0x178] sm:$0xf]
    %v3990 = vld [vmem:[%s673 + $0x17c] sm:$0xf]
    %v3991 = vld [vmem:[%s673 + $0x180] sm:$0xf]
    %v3992 = vld [vmem:[%s673 + $0x184] sm:$0xf]
    %v3993 = vld [vmem:[%s673 + $0x188] sm:$0xf]
    %v3994 = vld [vmem:[%s673 + $0x18c] sm:$0xf]
    %v3995 = vld [vmem:[%s673 + $0x190] sm:$0xf]
    %v3996 = vld [vmem:[%s673 + $0x194] sm:$0xf]
    %v3997 = vld [vmem:[%s673 + $0x198] sm:$0xf]
    %v3998 = vld [vmem:[%s673 + $0x19c] sm:$0xf]
    %v3999 = vld [vmem:[%s673 + $0x1a0] sm:$0xf]
    %v4000 = vld [vmem:[%s673 + $0x1a4] sm:$0xf]
    %v4001 = vld [vmem:[%s673 + $0x1a8] sm:$0xf]
    %v4002 = vld [vmem:[%s673 + $0x1ac] sm:$0xf]
    %v4003 = vld [vmem:[%s673 + $0x1b0] sm:$0xf]
    %v4004 = vld [vmem:[%s673 + $0x1b4] sm:$0xf]
    %v4005 = vld [vmem:[%s673 + $0x1b8] sm:$0xf]
    %v4006 = vld [vmem:[%s673 + $0x1bc] sm:$0xf]
    %v4119 = vunpack.c.l.b16 %v3895
    %v4120 = vunpack.c.l.b16 %v3896
    %v4121 = vunpack.c.l.b16 %v3897
    %v4122 = vunpack.c.l.b16 %v3898
    %v4123 = vunpack.c.l.b16 %v3899
    %v4124 = vunpack.c.l.b16 %v3900
    %v4125 = vunpack.c.l.b16 %v3901
    %v4126 = vunpack.c.l.b16 %v3902
    %v4127 = vunpack.c.l.b16 %v3903
    %v4128 = vunpack.c.l.b16 %v3904
    %v4129 = vunpack.c.l.b16 %v3905
    %v4130 = vunpack.c.l.b16 %v3906
    %v4131 = vunpack.c.l.b16 %v3907
    %v4132 = vunpack.c.l.b16 %v3908
    %v4133 = vunpack.c.l.b16 %v3909
    %v4134 = vunpack.c.l.b16 %v3910
    %v4135 = vunpack.c.l.b16 %v3911
    %v4136 = vunpack.c.l.b16 %v3912
    %v4137 = vunpack.c.l.b16 %v3913
    %v4138 = vunpack.c.l.b16 %v3914
    %v4139 = vunpack.c.l.b16 %v3915
    %v4140 = vunpack.c.l.b16 %v3916
    %v4141 = vunpack.c.l.b16 %v3917
    %v4142 = vunpack.c.l.b16 %v3918
    %v4143 = vunpack.c.l.b16 %v3919
    %v4144 = vunpack.c.l.b16 %v3920
    %v4145 = vunpack.c.l.b16 %v3921
    %v4146 = vunpack.c.l.b16 %v3922
    %v4147 = vunpack.c.l.b16 %v3923
    %v4148 = vunpack.c.l.b16 %v3924
    %v4149 = vunpack.c.l.b16 %v3925
    %v4150 = vunpack.c.l.b16 %v3926
    %v4151 = vunpack.c.l.b16 %v3927
    %v4152 = vunpack.c.l.b16 %v3928
    %v4153 = vunpack.c.l.b16 %v3929
    %v4154 = vunpack.c.l.b16 %v3930
    %v4155 = vunpack.c.l.b16 %v3931
    %v4156 = vunpack.c.l.b16 %v3932
    %v4157 = vunpack.c.l.b16 %v3933
    %v4158 = vunpack.c.l.b16 %v3934
    %v4159 = vunpack.c.l.b16 %v3935
    %v4160 = vunpack.c.l.b16 %v3936
    %v4161 = vunpack.c.l.b16 %v3937
    %v4162 = vunpack.c.l.b16 %v3938
    %v4163 = vunpack.c.l.b16 %v3939
    %v4164 = vunpack.c.l.b16 %v3940
    %v4165 = vunpack.c.l.b16 %v3941
    %v4166 = vunpack.c.l.b16 %v3942
    %v4167 = vunpack.c.l.b16 %v3943
    %v4168 = vunpack.c.l.b16 %v3944
    %v4169 = vunpack.c.l.b16 %v3945
    %v4170 = vunpack.c.l.b16 %v3946
    %v4171 = vunpack.c.l.b16 %v3947
    %v4172 = vunpack.c.l.b16 %v3948
    %v4173 = vunpack.c.l.b16 %v3949
    %v4174 = vunpack.c.l.b16 %v3950
    %v4175 = vunpack.c.l.b16 %v3951
    %v4176 = vunpack.c.l.b16 %v3952
    %v4177 = vunpack.c.l.b16 %v3953
    %v4178 = vunpack.c.l.b16 %v3954
    %v4179 = vunpack.c.l.b16 %v3955
    %v4180 = vunpack.c.l.b16 %v3956
    %v4181 = vunpack.c.l.b16 %v3957
    %v4182 = vunpack.c.l.b16 %v3958
    %v4183 = vunpack.c.l.b16 %v3959
    %v4184 = vunpack.c.l.b16 %v3960
    %v4185 = vunpack.c.l.b16 %v3961
    %v4186 = vunpack.c.l.b16 %v3962
    %v4187 = vunpack.c.l.b16 %v3963
    %v4188 = vunpack.c.l.b16 %v3964
    %v4189 = vunpack.c.l.b16 %v3965
    %v4190 = vunpack.c.l.b16 %v3966
    %v4191 = vunpack.c.l.b16 %v3967
    %v4192 = vunpack.c.l.b16 %v3968
    %v4193 = vunpack.c.l.b16 %v3969
    %v4194 = vunpack.c.l.b16 %v3970
    %v4195 = vunpack.c.l.b16 %v3971
    %v4196 = vunpack.c.l.b16 %v3972
    %v4197 = vunpack.c.l.b16 %v3973
    %v4198 = vunpack.c.l.b16 %v3974
    %v4199 = vunpack.c.l.b16 %v3975
    %v4200 = vunpack.c.l.b16 %v3976
    %v4201 = vunpack.c.l.b16 %v3977
    %v4202 = vunpack.c.l.b16 %v3978
    %v4203 = vunpack.c.l.b16 %v3979
    %v4204 = vunpack.c.l.b16 %v3980
    %v4205 = vunpack.c.l.b16 %v3981
    %v4206 = vunpack.c.l.b16 %v3982
    %v4207 = vunpack.c.l.b16 %v3983
    %v4208 = vunpack.c.l.b16 %v3984
    %v4209 = vunpack.c.l.b16 %v3985
    %v4210 = vunpack.c.l.b16 %v3986
    %v4211 = vunpack.c.l.b16 %v3987
    %v4212 = vunpack.c.l.b16 %v3988
    %v4213 = vunpack.c.l.b16 %v3989
    %v4214 = vunpack.c.l.b16 %v3990
    %v4215 = vunpack.c.l.b16 %v3991
    %v4216 = vunpack.c.l.b16 %v3992
    %v4217 = vunpack.c.l.b16 %v3993
    %v4218 = vunpack.c.l.b16 %v3994
    %v4219 = vunpack.c.l.b16 %v3995
    %v4220 = vunpack.c.l.b16 %v3996
    %v4221 = vunpack.c.l.b16 %v3997
    %v4222 = vunpack.c.l.b16 %v3998
    %v4223 = vunpack.c.l.b16 %v3999
    %v4224 = vunpack.c.l.b16 %v4000
    %v4225 = vunpack.c.l.b16 %v4001
    %v4226 = vunpack.c.l.b16 %v4002
    %v4227 = vunpack.c.l.b16 %v4003
    %v4228 = vunpack.c.l.b16 %v4004
    %v4229 = vunpack.c.l.b16 %v4005
    %v4230 = vunpack.c.l.b16 %v4006
    %v4231 = vpack.c.b16 %v4120, %v4119
    %v4232 = vpack.c.b16 %v4122, %v4121
    %v4233 = vpack.c.b16 %v4124, %v4123
    %v4234 = vpack.c.b16 %v4126, %v4125
    %v4235 = vpack.c.b16 %v4128, %v4127
    %v4236 = vpack.c.b16 %v4130, %v4129
    %v4237 = vpack.c.b16 %v4132, %v4131
    %v4238 = vpack.c.b16 %v4134, %v4133
    %v4239 = vpack.c.b16 %v4136, %v4135
    %v4240 = vpack.c.b16 %v4138, %v4137
    %v4241 = vpack.c.b16 %v4140, %v4139
    %v4242 = vpack.c.b16 %v4142, %v4141
    %v4243 = vpack.c.b16 %v4144, %v4143
    %v4244 = vpack.c.b16 %v4146, %v4145
    %v4245 = vpack.c.b16 %v4148, %v4147
    %v4246 = vpack.c.b16 %v4150, %v4149
    %v4247 = vpack.c.b16 %v4152, %v4151
    %v4248 = vpack.c.b16 %v4154, %v4153
    %v4249 = vpack.c.b16 %v4156, %v4155
    %v4250 = vpack.c.b16 %v4158, %v4157
    %v4251 = vpack.c.b16 %v4160, %v4159
    %v4252 = vpack.c.b16 %v4162, %v4161
    %v4253 = vpack.c.b16 %v4164, %v4163
    %v4254 = vpack.c.b16 %v4166, %v4165
    %v4255 = vpack.c.b16 %v4168, %v4167
    %v4256 = vpack.c.b16 %v4170, %v4169
    %v4257 = vpack.c.b16 %v4172, %v4171
    %v4258 = vpack.c.b16 %v4174, %v4173
    %v4259 = vpack.c.b16 %v4176, %v4175
    %v4260 = vpack.c.b16 %v4178, %v4177
    %v4261 = vpack.c.b16 %v4180, %v4179
    %v4262 = vpack.c.b16 %v4182, %v4181
    %v4263 = vpack.c.b16 %v4184, %v4183
    %v4264 = vpack.c.b16 %v4186, %v4185
    %v4265 = vpack.c.b16 %v4188, %v4187
    %v4266 = vpack.c.b16 %v4190, %v4189
    %v4267 = vpack.c.b16 %v4192, %v4191
    %v4268 = vpack.c.b16 %v4194, %v4193
    %v4269 = vpack.c.b16 %v4196, %v4195
    %v4270 = vpack.c.b16 %v4198, %v4197
    %v4271 = vpack.c.b16 %v4200, %v4199
    %v4272 = vpack.c.b16 %v4202, %v4201
    %v4273 = vpack.c.b16 %v4204, %v4203
    %v4274 = vpack.c.b16 %v4206, %v4205
    %v4275 = vpack.c.b16 %v4208, %v4207
    %v4276 = vpack.c.b16 %v4210, %v4209
    %v4277 = vpack.c.b16 %v4212, %v4211
    %v4278 = vpack.c.b16 %v4214, %v4213
    %v4279 = vpack.c.b16 %v4216, %v4215
    %v4280 = vpack.c.b16 %v4218, %v4217
    %v4281 = vpack.c.b16 %v4220, %v4219
    %v4282 = vpack.c.b16 %v4222, %v4221
    %v4283 = vpack.c.b16 %v4224, %v4223
    %v4284 = vpack.c.b16 %v4226, %v4225
    %v4285 = vpack.c.b16 %v4228, %v4227
    %v4286 = vpack.c.b16 %v4230, %v4229
    %4343 = vmatprep.subr.bf16.mxu0 0
    %4344 = vmatpush1.bf16.msra.mxu0 %v4238
    %4345 = vmatprep.subr.bf16.mxu0 0
    %4346 = vmatpush1.bf16.msra.mxu0 %v4237
    %4347 = vmatprep.subr.bf16.mxu0 0
    %4348 = vmatpush1.bf16.msra.mxu0 %v4236
    %4349 = vmatprep.subr.bf16.mxu0 0
    %4350 = vmatpush1.bf16.msra.mxu0 %v4235
    %4351 = vmatprep.subr.bf16.mxu0 0
    %4352 = vmatpush1.bf16.msra.mxu0 %v4234
    %4353 = vmatprep.subr.bf16.mxu0 0
    %4354 = vmatpush1.bf16.msra.mxu0 %v4233
    %4355 = vmatprep.subr.bf16.mxu0 0
    %4356 = vmatpush1.bf16.msra.mxu0 %v4232
    %4357 = vmatprep.subr.bf16.mxu0 0
    %4358 = vmatpush1.bf16.msra.mxu0 %v4231
    %4359 = vmatprep.subr.bf16.mxu0 0
    %4360 = vmatpush2.bf16.msra.mxu0 %v4246
    %4361 = vmatprep.subr.bf16.mxu0 0
    %4362 = vmatpush2.bf16.msra.mxu0 %v4245
    %4363 = vmatprep.subr.bf16.mxu0 0
    %4364 = vmatpush2.bf16.msra.mxu0 %v4244
    %4365 = vmatprep.subr.bf16.mxu0 0
    %4366 = vmatpush2.bf16.msra.mxu0 %v4243
    %4367 = vmatprep.subr.bf16.mxu0 0
    %4368 = vmatpush2.bf16.msra.mxu0 %v4242
    %4369 = vmatprep.subr.bf16.mxu0 0
    %4370 = vmatpush2.bf16.msra.mxu0 %v4241
    %4371 = vmatprep.subr.bf16.mxu0 0
    %4372 = vmatpush2.bf16.msra.mxu0 %v4240
    %4373 = vmatprep.subr.bf16.mxu0 0
    %4374 = vmatpush2.bf16.msra.mxu0 %v4239
    %4375 = vmatprep.mubr.bf16.mxu0 %v3887
    %4376 = vmatmul.mubr.bf16.gmra.mxu0 %v3886
    %v4377 = vpop.f32.mrf.mxu0
    %v4378 = vadd.f32 0.0, %v4377
    %v4379 = vpop.f32.mrf.mxu0
    %v4380 = vpop.f32.mrf.mxu0
    %v4381 = vpop.f32.mrf.mxu0
    %4382 = vdwg.mxu0
    %4383 = vmatprep.subr.bf16.mxu0 0
    %4384 = vmatpush1.bf16.msra.mxu0 %v4254
    %4385 = vmatprep.subr.bf16.mxu0 0
    %4386 = vmatpush1.bf16.msra.mxu0 %v4253
    %4387 = vmatprep.subr.bf16.mxu0 0
    %4388 = vmatpush1.bf16.msra.mxu0 %v4252
    %4389 = vmatprep.subr.bf16.mxu0 0
    %4390 = vmatpush1.bf16.msra.mxu0 %v4251
    %4391 = vmatprep.subr.bf16.mxu0 0
    %4392 = vmatpush1.bf16.msra.mxu0 %v4250
    %4393 = vmatprep.subr.bf16.mxu0 0
    %4394 = vmatpush1.bf16.msra.mxu0 %v4249
    %4395 = vmatprep.subr.bf16.mxu0 0
    %4396 = vmatpush1.bf16.msra.mxu0 %v4248
    %4397 = vmatprep.subr.bf16.mxu0 0
    %4398 = vmatpush1.bf16.msra.mxu0 %v4247
    %4399 = vmatprep.subr.bf16.mxu0 0
    %4400 = vmatpush2.bf16.msra.mxu0 %v4262
    %4401 = vmatprep.subr.bf16.mxu0 0
    %4402 = vmatpush2.bf16.msra.mxu0 %v4261
    %4403 = vmatprep.subr.bf16.mxu0 0
    %4404 = vmatpush2.bf16.msra.mxu0 %v4260
    %4405 = vmatprep.subr.bf16.mxu0 0
    %4406 = vmatpush2.bf16.msra.mxu0 %v4259
    %4407 = vmatprep.subr.bf16.mxu0 0
    %4408 = vmatpush2.bf16.msra.mxu0 %v4258
    %4409 = vmatprep.subr.bf16.mxu0 0
    %4410 = vmatpush2.bf16.msra.mxu0 %v4257
    %4411 = vmatprep.subr.bf16.mxu0 0
    %4412 = vmatpush2.bf16.msra.mxu0 %v4256
    %4413 = vmatprep.subr.bf16.mxu0 0
    %4414 = vmatpush2.bf16.msra.mxu0 %v4255
    %4415 = vmatprep.mubr.bf16.mxu0 %v3889
    %4416 = vmatmul.mubr.bf16.gmra.mxu0 %v3888
    %v4417 = vpop.f32.mrf.mxu0
    %v4418 = vadd.f32 %v4378, %v4417
    %v4419 = vpop.f32.mrf.mxu0
    %v4420 = vpop.f32.mrf.mxu0
    %v4421 = vpop.f32.mrf.mxu0
    %4422 = vdwg.mxu0
    %4423 = vmatprep.subr.bf16.mxu0 0
    %4424 = vmatpush1.bf16.msra.mxu0 %v4270
    %4425 = vmatprep.subr.bf16.mxu0 0
    %4426 = vmatpush1.bf16.msra.mxu0 %v4269
    %4427 = vmatprep.subr.bf16.mxu0 0
    %4428 = vmatpush1.bf16.msra.mxu0 %v4268
    %4429 = vmatprep.subr.bf16.mxu0 0
    %4430 = vmatpush1.bf16.msra.mxu0 %v4267
    %4431 = vmatprep.subr.bf16.mxu0 0
    %4432 = vmatpush1.bf16.msra.mxu0 %v4266
    %4433 = vmatprep.subr.bf16.mxu0 0
    %4434 = vmatpush1.bf16.msra.mxu0 %v4265
    %4435 = vmatprep.subr.bf16.mxu0 0
    %4436 = vmatpush1.bf16.msra.mxu0 %v4264
    %4437 = vmatprep.subr.bf16.mxu0 0
    %4438 = vmatpush1.bf16.msra.mxu0 %v4263
    %4439 = vmatprep.subr.bf16.mxu0 0
    %4440 = vmatpush2.bf16.msra.mxu0 %v4278
    %4441 = vmatprep.subr.bf16.mxu0 0
    %4442 = vmatpush2.bf16.msra.mxu0 %v4277
    %4443 = vmatprep.subr.bf16.mxu0 0
    %4444 = vmatpush2.bf16.msra.mxu0 %v4276
    %4445 = vmatprep.subr.bf16.mxu0 0
    %4446 = vmatpush2.bf16.msra.mxu0 %v4275
    %4447 = vmatprep.subr.bf16.mxu0 0
    %4448 = vmatpush2.bf16.msra.mxu0 %v4274
    %4449 = vmatprep.subr.bf16.mxu0 0
    %4450 = vmatpush2.bf16.msra.mxu0 %v4273
    %4451 = vmatprep.subr.bf16.mxu0 0
    %4452 = vmatpush2.bf16.msra.mxu0 %v4272
    %4453 = vmatprep.subr.bf16.mxu0 0
    %4454 = vmatpush2.bf16.msra.mxu0 %v4271
    %4455 = vmatprep.mubr.bf16.mxu0 %v3891
    %4456 = vmatmul.mubr.bf16.gmra.mxu0 %v3890
    %v4457 = vpop.f32.mrf.mxu0
    %v4458 = vadd.f32 %v4418, %v4457
    %v4459 = vpop.f32.mrf.mxu0
    %v4460 = vpop.f32.mrf.mxu0
    %v4461 = vpop.f32.mrf.mxu0
    %4462 = vdwg.mxu0
    %4463 = vmatprep.subr.bf16.mxu0 0
    %4464 = vmatpush1.bf16.msra.mxu0 %v4286
    %4465 = vmatprep.subr.bf16.mxu0 0
    %4466 = vmatpush1.bf16.msra.mxu0 %v4285
    %4467 = vmatprep.subr.bf16.mxu0 0
    %4468 = vmatpush1.bf16.msra.mxu0 %v4284
    %4469 = vmatprep.subr.bf16.mxu0 0
    %4470 = vmatpush1.bf16.msra.mxu0 %v4283
    %4471 = vmatprep.subr.bf16.mxu0 0
    %4472 = vmatpush1.bf16.msra.mxu0 %v4282
    %4473 = vmatprep.subr.bf16.mxu0 0
    %4474 = vmatpush1.bf16.msra.mxu0 %v4281
    %4475 = vmatprep.subr.bf16.mxu0 0
    %4476 = vmatpush1.bf16.msra.mxu0 %v4280
    %4477 = vmatprep.subr.bf16.mxu0 0
    %4478 = vmatpush1.bf16.msra.mxu0 %v4279
    %4479 = vmatprep.subr.bf16.mxu0 0
    %4480 = vmatpush2.bf16.msra.mxu0 0
    %4481 = vmatprep.subr.bf16.mxu0 0
    %4482 = vmatpush2.bf16.msra.mxu0 0
    %4483 = vmatprep.subr.bf16.mxu0 0
    %4484 = vmatpush2.bf16.msra.mxu0 0
    %4485 = vmatprep.subr.bf16.mxu0 0
    %4486 = vmatpush2.bf16.msra.mxu0 0
    %4487 = vmatprep.subr.bf16.mxu0 0
    %4488 = vmatpush2.bf16.msra.mxu0 0
    %4489 = vmatprep.subr.bf16.mxu0 0
    %4490 = vmatpush2.bf16.msra.mxu0 0
    %4491 = vmatprep.subr.bf16.mxu0 0
    %4492 = vmatpush2.bf16.msra.mxu0 0
    %4493 = vmatprep.subr.bf16.mxu0 0
    %4494 = vmatpush2.bf16.msra.mxu0 0
    %4495 = vmatprep.mubr.bf16.mxu0 0
    %4496 = vmatmul.mubr.bf16.gmra.mxu0 %v3892
    %v4497 = vpop.f32.mrf.mxu0
    %v4498 = vadd.f32 %v4458, %v4497
    %v4499 = vpop.f32.mrf.mxu0
    %v4500 = vpop.f32.mrf.mxu0
    %v4501 = vpop.f32.mrf.mxu0
    %4502 = vdwg.mxu0
    %v4503 = vadd.f32 %v3827, %v4498
    %v4504 = vld [vmem:[%s4] sm:$0x1]
    %v4506 = vlaneseq
    %v4507 = vshrl.u32 %v4506, 7
    %v4508 = vsub.s32 0, %v4507
    %v4509 = vrot.slane %v4504, %v4508
    %v4511 = vadd.f32 %v4503, %v4509
    %v4512 = vxor.u32 %v4511, 2147483648
    %v4513 = vmul.f32 %v4512, 1.442695
    %v4514 = vpow.pop %v4513
    %v4515 = vadd.f32 %v4514, 1.0
    %v4516 = vrcp.pop %v4515
    %v4517 = vmul.f32 1.0, %v4516
    %v4518 = vld [vmem:[%s5] sm:$0xff]
    %v4519 = vld [vmem:[%s5 + $0x8] sm:$0xff]
    %v4520 = vld [vmem:[%s5 + $0x10] sm:$0xff]
    %v4521 = vld [vmem:[%s5 + $0x18] sm:$0xff]
    %v4522 = vld [vmem:[%s5 + $0x20] sm:$0xff]
    %v4523 = vld [vmem:[%s5 + $0x28] sm:$0xff]
    %v4524 = vld [vmem:[%s5 + $0x30] sm:$0xff]
    %v4525 = vld [vmem:[%s5 + $0x38] sm:$0xff]
    %v4526 = vld [vmem:[%s5 + $0x40] sm:$0xff]
    %v4527 = vld [vmem:[%s5 + $0x48] sm:$0xff]
    %v4528 = vld [vmem:[%s5 + $0x50] sm:$0xff]
    %v4529 = vld [vmem:[%s5 + $0x58] sm:$0xff]
    %v4530 = vld [vmem:[%s5 + $0x60] sm:$0xff]
    %v4531 = vld [vmem:[%s5 + $0x68] sm:$0xff]
    %v4532 = vld [vmem:[%s5 + $0x70] sm:$0xff]
    %v4533 = vld [vmem:[%s5 + $0x78] sm:$0xff]
    %v4534 = vld [vmem:[%s6] sm:$0x1]
    %v4536 = vlaneseq
    %v4537 = vshrl.u32 %v4536, 7
    %v4538 = vsub.s32 0, %v4537
    %v4539 = vrot.slane %v4534, %v4538
    %4541 = vmatprep.subr.mxu0 0.0
    %4542 = vmatpush1.msra.mxu0 %v4533
    %4543 = vmatprep.subr.mxu0 0.0
    %4544 = vmatpush1.msra.mxu0 %v4532
    %4545 = vmatprep.subr.mxu0 0.0
    %4546 = vmatpush1.msra.mxu0 %v4531
    %4547 = vmatprep.subr.mxu0 0.0
    %4548 = vmatpush1.msra.mxu0 %v4530
    %4549 = vmatprep.subr.mxu0 0.0
    %4550 = vmatpush1.msra.mxu0 %v4529
    %4551 = vmatprep.subr.mxu0 0.0
    %4552 = vmatpush1.msra.mxu0 %v4528
    %4553 = vmatprep.subr.mxu0 0.0
    %4554 = vmatpush1.msra.mxu0 %v4527
    %4555 = vmatprep.subr.mxu0 0.0
    %4556 = vmatpush1.msra.mxu0 %v4526
    %4557 = vmatprep.subr.mxu0 0.0
    %4558 = vmatpush1.msra.mxu0 %v4525
    %4559 = vmatprep.subr.mxu0 0.0
    %4560 = vmatpush1.msra.mxu0 %v4524
    %4561 = vmatprep.subr.mxu0 0.0
    %4562 = vmatpush1.msra.mxu0 %v4523
    %4563 = vmatprep.subr.mxu0 0.0
    %4564 = vmatpush1.msra.mxu0 %v4522
    %4565 = vmatprep.subr.mxu0 0.0
    %4566 = vmatpush1.msra.mxu0 %v4521
    %4567 = vmatprep.subr.mxu0 0.0
    %4568 = vmatpush1.msra.mxu0 %v4520
    %4569 = vmatprep.subr.mxu0 0.0
    %4570 = vmatpush1.msra.mxu0 %v4519
    %4571 = vmatprep.subr.mxu0 0.0
    %4572 = vmatpush1.msra.mxu0 %v4518
    %4573 = vmatprep.subr.mxu0 0.0
    %4574 = vmatpush2.msra.mxu0 0.0
    %4575 = vmatprep.subr.mxu0 0.0
    %4576 = vmatpush2.msra.mxu0 0.0
    %4577 = vmatprep.subr.mxu0 0.0
    %4578 = vmatpush2.msra.mxu0 0.0
    %4579 = vmatprep.subr.mxu0 0.0
    %4580 = vmatpush2.msra.mxu0 0.0
    %4581 = vmatprep.subr.mxu0 0.0
    %4582 = vmatpush2.msra.mxu0 0.0
    %4583 = vmatprep.subr.mxu0 0.0
    %4584 = vmatpush2.msra.mxu0 0.0
    %4585 = vmatprep.subr.mxu0 0.0
    %4586 = vmatpush2.msra.mxu0 0.0
    %4587 = vmatprep.subr.mxu0 0.0
    %4588 = vmatpush2.msra.mxu0 0.0
    %4589 = vmatprep.subr.mxu0 0.0
    %4590 = vmatpush2.msra.mxu0 0.0
    %4591 = vmatprep.subr.mxu0 0.0
    %4592 = vmatpush2.msra.mxu0 0.0
    %4593 = vmatprep.subr.mxu0 0.0
    %4594 = vmatpush2.msra.mxu0 0.0
    %4595 = vmatprep.subr.mxu0 0.0
    %4596 = vmatpush2.msra.mxu0 0.0
    %4597 = vmatprep.subr.mxu0 0.0
    %4598 = vmatpush2.msra.mxu0 0.0
    %4599 = vmatprep.subr.mxu0 0.0
    %4600 = vmatpush2.msra.mxu0 0.0
    %4601 = vmatprep.subr.mxu0 0.0
    %4602 = vmatpush2.msra.mxu0 0.0
    %4603 = vmatprep.subr.mxu0 0.0
    %4604 = vmatpush2.msra.mxu0 0.0
    %4605 = vmatprep.mubr.f32.mxu0 0.0
    %4606 = vmatmul.mubr.f32.gmra.mxu0 %v4517
    %v4607 = vpop.f32.mrf.mxu0
    %v4608 = vadd.f32 %v4539, %v4607
    %v4609 = vpop.f32.mrf.mxu0
    %4610 = vdwg.mxu0
    %v4611 = vxor.u32 %v4608, 2147483648
    %v4612 = vmul.f32 %v4611, 1.442695
    %v4613 = vpow.pop %v4612
    %v4614 = vadd.f32 %v4613, 1.0
    %v4615 = vrcp.pop %v4614
    %v4616 = vmul.f32 1.0, %v4615
    %4617 = vst [vmem:[#allocation9] sm:$0x3] %v4616
    // Predicated region
    $region204: #{simple_cnn_forward.1} parent=1 // pred_check
      _
    $region205: #{simple_cnn_forward.1} parent=1 // pred_check_branch
      %4619 = sbr.rel (0) target = $region207
    $region206: #{simple_cnn_forward.1} parent=1 // pred_region
      %s4621 = ssub.s32 32, 32
      %4622 = vsyncadd [#allocation5], %s4621
      %s4624 = sshll.u32 [#allocation9], 4
      %s4625 = int_to_ptr.vmem [resolvable:$true] %s4624
      %4627 = dma.vmem_to_hbm [thread:$0]  %s4625, 32, %s7, [#allocation5]
    $region207: #{simple_cnn_forward.1} parent=1 // pred_fallthru
      _
    // Predicated region
    $region208: #{simple_cnn_forward.1} parent=1 // pred_check
      _
    $region209: #{simple_cnn_forward.1} parent=1 // pred_check_branch
      %4629 = sbr.rel (0) target = $region211
    $region210: #{simple_cnn_forward.1} parent=1 // pred_region
      %4630 = dma.done [#allocation5], 32
    $region211: #{simple_cnn_forward.1} parent=1 // pred_fallthru
      _
    %4631 = vsyncpa [#allocation5], 1
    %4632 = vsyncpa [#allocation6], 1
    %4633 = vsyncpa [#allocation8], 1
  %4634 = vsyncmov [#allocation3]
  %s4635 = vpop.sfrf %4634
  %p4636 = scmp.eq.s32.totalorder %s4635, 0
  %p4637 = pneg %p4636
  %4639 = shalt.err (%p4637)
  %s4640 = scalar_lea.sflag [#allocation3], 1
  %4641 = vsyncmov %s4640
  %s4642 = vpop.sfrf %4641
  %p4643 = scmp.eq.s32.totalorder %s4642, 0
  %p4644 = pneg %p4643
  %4646 = shalt.err (%p4644)
  %s4647 = scalar_lea.sflag [#allocation3], 2
  %4648 = vsyncmov %s4647
  %s4649 = vpop.sfrf %4648
  %p4650 = scmp.eq.s32.totalorder %s4649, 0
  %p4651 = pneg %p4650
  %4653 = shalt.err (%p4651)
  %s4654 = scalar_lea.sflag [#allocation3], 3
  %4655 = vsyncmov %s4654
  %s4656 = vpop.sfrf %4655
  %p4657 = scmp.eq.s32.totalorder %s4656, 0
  %p4658 = pneg %p4657
  %4660 = shalt.err (%p4658)
  %s4661 = scalar_lea.sflag [#allocation3], 4
  %4662 = vsyncmov %s4661
  %s4663 = vpop.sfrf %4662
  %p4664 = scmp.eq.s32.totalorder %s4663, 0
  %p4665 = pneg %p4664
  %4667 = shalt.err (%p4665)

</llo_original>
